<compile_context>
chip_gen: v7x
topology: tpu7x:2x2x1
jax: 0.10.0
libtpu: 0.0.40
codegen_flags: <defaults>
</compile_context>

<pallas_src>
import functools
import math

import jax
import jax.numpy as jnp
from jax import lax
from jax.experimental import pallas as pl
from jax.experimental.pallas import tpu as pltpu


_EPS = 1e-3  # nflows AffineAutoregressive epsilon


def _sigmoid(x):
    # explicit formula so kernel and reference share identical math
    return 1.0 / (1.0 + jnp.exp(-x))


# ----------------------------------------------------------------- MADE masks
def _made_masks(param_dim, hidden_dim):
    P, H = param_dim, hidden_dim
    in_deg = jnp.arange(1, P + 1)
    max_ = max(1, P - 1)
    min_ = min(1, P - 1)
    h_deg = jnp.arange(H) % max_ + min_
    mask_init = (h_deg[:, None] >= in_deg[None, :]).astype(jnp.float32)    # (H, P)
    mask_hidden = (h_deg[:, None] >= h_deg[None, :]).astype(jnp.float32)   # (H, H)
    out_deg = jnp.repeat(jnp.arange(1, P + 1), 2)                          # interleaved (2P,)
    mask_final = (out_deg[:, None] > h_deg[None, :]).astype(jnp.float32)   # (2P, H)
    return mask_init, mask_hidden, mask_final


# -------------------------------------------------------------- param init
def init_flow_params(key, param_dim, latent_dim, hidden_dim, num_flows, num_blocks=2):
    """Torch-layout Linear params ((out,in) weights) for every layer of every flow."""
    P, L, H = param_dim, latent_dim, hidden_dim

    def linear(k, out_f, in_f):
        kw, kb = jax.random.split(k)
        bound = 1.0 / math.sqrt(in_f)
        w = jax.random.uniform(kw, (out_f, in_f), jnp.float32, -bound, bound)
        b = jax.random.uniform(kb, (out_f,), jnp.float32, -bound, bound)
        return w, b

    flows = []
    keys = jax.random.split(key, num_flows)
    for f in range(num_flows):
        ks = jax.random.split(keys[f], 3 + 3 * num_blocks)
        fp = {}
        fp["w_init"], fp["b_init"] = linear(ks[0], H, P)     # masked initial layer
        fp["w_ctx"], fp["b_ctx"] = linear(ks[1], H, L)       # context layer (unmasked)
        for k in range(num_blocks):
            fp[f"wa{k}"], fp[f"ba{k}"] = linear(ks[2 + 3 * k], H, H)   # masked
            fp[f"wb{k}"], fp[f"bb{k}"] = linear(ks[3 + 3 * k], H, H)   # masked
            fp[f"wc{k}"], fp[f"bc{k}"] = linear(ks[4 + 3 * k], H, L)   # context gate
        fp["w_final"], fp["b_final"] = linear(ks[2 + 3 * num_blocks], 2 * P, H)
        flows.append(fp)
    return flows


# ------------------------------------------------- weight packing for kernel
def pack_weights(flows, param_dim, latent_dim, hidden_dim, num_blocks,
                 weight_dtype=jnp.bfloat16):
    """Apply masks, transpose to (in,out), fold reverse permutations, fuse all
    context projections (+ their biases + b_init) into one matrix, split the
    final layer into scale/shift halves, stack per flow, cast weights to bf16."""
    P, H = param_dim, hidden_dim
    NB = num_blocks
    m_init, m_hidden, m_final = _made_masks(P, H)
    rev = jnp.arange(P - 1, -1, -1)
    ident = jnp.arange(P)

    W0 = []                                        # (F, P, H)
    WA, BA, WB, BB = [], [], [], []                # (F*NB, H, H) / (F*NB, 1, H)
    WFS, BFS, WFT, BFT = [], [], [], []            # (F, H, P) / (F, 1, P)
    cw_init, cb_init, cw_gate, cb_gate = [], [], [], []

    for f, fp in enumerate(flows):
        # Relative permutation between the canonical state kept in the kernel and
        # this flow's MADE input (ReversePermutation folded in). It alternates.
        rho = rev if (f % 2 == 0) else ident

        W0.append(((fp["w_init"] * m_init).T)[rho, :])               # (P, H)
        cw_init.append(fp["w_ctx"].T)                                # (L, H)
        cb_init.append((fp["b_init"] + fp["b_ctx"])[None, :])        # fold b_init+b_ctx
        for k in range(NB):
            WA.append((fp[f"wa{k}"] * m_hidden).T)                   # (H, H)
            BA.append(fp[f"ba{k}"][None, :])
            WB.append((fp[f"wb{k}"] * m_hidden).T)                   # (H, H)
            BB.append(fp[f"bb{k}"][None, :])
            cw_gate.append(fp[f"wc{k}"].T)                           # (L, H)
            cb_gate.append(fp[f"bc{k}"][None, :])
        wft = (fp["w_final"] * m_final).T                            # (H, 2P), interleaved
        bft = fp["b_final"]
        # de-interleave into [scales | shifts] halves with the folded permutation
        WFS.append(wft[:, 2 * rho]);     BFS.append(bft[2 * rho][None, :])
        WFT.append(wft[:, 2 * rho + 1]); BFT.append(bft[2 * rho + 1][None, :])

    # fused context projection: columns = [F init-layer blocks | F*NB gate blocks]
    CW = jnp.concatenate(cw_init + cw_gate, axis=1)    # (L, F*(NB+1)*H)
    CB = jnp.concatenate(cb_init + cb_gate, axis=1)    # (1, F*(NB+1)*H)

    st = lambda xs: jnp.stack(xs, axis=0)
    wd = weight_dtype
    f32 = jnp.float32
    return (st(W0).astype(wd),
            CW.astype(wd), CB.astype(f32),
            st(WA).astype(wd), st(BA).astype(f32),
            st(WB).astype(wd), st(BB).astype(f32),
            st(WFS).astype(wd), st(BFS).astype(f32),
            st(WFT).astype(wd), st(BFT).astype(f32))


# ---------------------------------------------------------------- the kernel
def _realnvp_logprob_kernel(x_ref, c_ref,
                            w0_ref, cw_ref, cb_ref,
                            wa_ref, ba_ref, wb_ref, bb_ref,
                            wfs_ref, bfs_ref, wft_ref, bft_ref,
                            o_ref, *, num_flows, num_blocks, param_dim, hidden_dim):
    f32 = jnp.float32
    P, H, F, NB = param_dim, hidden_dim, num_flows, num_blocks
    mmt = cw_ref.dtype                     # matmul operand dtype (bf16)

    z = x_ref[...].astype(f32)             # (TB, P)  canonical-order state
    ctx = c_ref[...].astype(mmt)           # (TB, L)

    # One fused context projection for all flows/blocks (biases incl. b_init folded).
    ctx_all = jnp.dot(ctx, cw_ref[...], preferred_element_type=f32) + cb_ref[...]
    init_slab = ctx_all[:, : F * H]                    # per-flow init-layer context adds
    gate_slab = _sigmoid(ctx_all[:, F * H:])           # all GLU gates, off the h chain

    logdet = jnp.zeros((z.shape[0], P), f32)           # elementwise; one reduce at the end

    for f in range(F):
        h = (jnp.dot(z.astype(mmt), w0_ref[f], preferred_element_type=f32)
             + init_slab[:, f * H:(f + 1) * H])
        for k in range(NB):
            idx = f * NB + k
            t = jnp.maximum(h, 0.0)
            t = jnp.dot(t.astype(mmt), wa_ref[idx], preferred_element_type=f32) + ba_ref[idx]
            t = jnp.maximum(t, 0.0)
            t = jnp.dot(t.astype(mmt), wb_ref[idx], preferred_element_type=f32) + bb_ref[idx]
            t = t * gate_slab[:, idx * H:(idx + 1) * H]          # GLU context gating
            h = h + t
        hb = h.astype(mmt)
        us = jnp.dot(hb, wfs_ref[f], preferred_element_type=f32) + bfs_ref[f]   # (TB, P)
        sh = jnp.dot(hb, wft_ref[f], preferred_element_type=f32) + bft_ref[f]   # (TB, P)
        scale = _sigmoid(us + 2.0) + _EPS
        z = scale * z + sh
        logdet = logdet + jnp.log(scale)

    log_z = 0.5 * P * math.log(2.0 * math.pi)
    lp = jnp.sum(logdet - 0.5 * z * z, axis=1, keepdims=True) - log_z   # (TB, 1)
    o_ref[...] = lp.astype(o_ref.dtype)


def _const_spec(arr):
    n = arr.ndim
    return pl.BlockSpec(arr.shape, lambda b, _n=n: (0,) * _n)


# ------------------------------------------------------------------- wrapper
def conditional_realnvp_log_prob(latent_embedding, true_params, flows, *,
                                 param_dim, latent_dim, hidden_dim, num_flows,
                                 num_blocks=2, batch_tile=None,
                                 weight_dtype=jnp.bfloat16):
    """Returns log_prob of true_params (B, P) given latent_embedding (B, L)."""
    B = true_params.shape[0]
    P, L, H, F = param_dim, latent_dim, hidden_dim, num_flows

    packed = pack_weights(flows, P, L, H, num_blocks, weight_dtype=weight_dtype)

    # batch tiling: large tile to amortize grid-step overhead, but keep >= 2 grid
    # steps so the parallel axis can feed both v7x TensorCores.
    if batch_tile is None:
        TB = 256
        while TB > 8 and pl.cdiv(B, TB) < 2:
            TB //= 2
    else:
        TB = batch_tile
    TB = max(8, TB)
    Bp = pl.cdiv(B, TB) * TB

    x = true_params.astype(jnp.float32)
    c = latent_embedding.astype(jnp.float32)
    if Bp != B:
        x = jnp.pad(x, ((0, Bp - B), (0, 0)))
        c = jnp.pad(c, ((0, Bp - B), (0, 0)))

    kernel = functools.partial(_realnvp_logprob_kernel,
                               num_flows=F, num_blocks=num_blocks,
                               param_dim=P, hidden_dim=H)

    per_row_flops = 2 * (L * F * (num_blocks + 1) * H
                         + F * (P * H + num_blocks * 2 * H * H + 2 * H * P))
    weight_bytes = sum(int(w.size) * int(w.dtype.itemsize) for w in packed)
    cost = pl.CostEstimate(
        flops=int(Bp * per_row_flops),
        transcendentals=int(Bp * (F * num_blocks * H + 2 * F * P)),
        bytes_accessed=int(4 * (x.size + c.size + Bp) + weight_bytes),
    )

    # explicit VMEM budget: double-buffered weights + activations + margin,
    # capped below v7x's 64 MiB physical VMEM, never below the v5e default.
    act_bytes = 4 * TB * (F * (num_blocks + 1) * H + 8 * H + 6 * P + L)
    vmem_limit = int(min(40 << 20, max(16 << 20,
                                       2 * weight_bytes + 2 * act_bytes + (2 << 20))))

    out = pl.pallas_call(
        kernel,
        out_shape=jax.ShapeDtypeStruct((Bp, 1), jnp.float32),
        grid_spec=pltpu.PrefetchScalarGridSpec(
            num_scalar_prefetch=0,
            grid=(Bp // TB,),
            in_specs=[pl.BlockSpec((TB, P), lambda b: (b, 0)),
                      pl.BlockSpec((TB, L), lambda b: (b, 0))]
                     + [_const_spec(w) for w in packed],
            out_specs=pl.BlockSpec((TB, 1), lambda b: (b, 0)),
        ),
        compiler_params=pltpu.CompilerParams(
            dimension_semantics=("parallel",),
            vmem_limit_bytes=vmem_limit),
        cost_estimate=cost,
    )(x, c, *packed)
    return out[:B, 0]


# ----------------------------------------------------------- pure-JAX reference
def reference_log_prob(latent_embedding, true_params, flows, *,
                       param_dim, hidden_dim, num_blocks=2,
                       matmul_dtype=jnp.float32):
    """Straightforward nflows-semantics reference. With matmul_dtype=bfloat16 it
    reproduces the kernel's matmul rounding exactly (bf16 operands, f32 accum)."""
    P, H = param_dim, hidden_dim
    m_init, m_hidden, m_final = _made_masks(P, H)
    md = matmul_dtype
    prec = lax.Precision.HIGHEST if md == jnp.float32 else lax.Precision.DEFAULT

    def dot(a, w):
        return jnp.dot(a.astype(md), w.astype(md), precision=prec,
                       preferred_element_type=jnp.float32)

    y = true_params.astype(jnp.float32)
    ctx = latent_embedding.astype(jnp.float32)
    Bn = y.shape[0]
    lad = jnp.zeros((Bn,), jnp.float32)
    for fp in flows:
        y = y[:, ::-1]                                           # ReversePermutation
        h = (dot(y, (fp["w_init"] * m_init).T) + fp["b_init"]
             + dot(ctx, fp["w_ctx"].T) + fp["b_ctx"])
        for k in range(num_blocks):
            t = jnp.maximum(h, 0.0)
            t = dot(t, (fp[f"wa{k}"] * m_hidden).T) + fp[f"ba{k}"]
            t = jnp.maximum(t, 0.0)
            t = dot(t, (fp[f"wb{k}"] * m_hidden).T) + fp[f"bb{k}"]
            gate = dot(ctx, fp[f"wc{k}"].T) + fp[f"bc{k}"]
            t = t * _sigmoid(gate)
            h = h + t
        out = dot(h, (fp["w_final"] * m_final).T) + fp["b_final"]
        out = out.reshape(Bn, P, 2)
        us, sh = out[..., 0], out[..., 1]
        scale = _sigmoid(us + 2.0) + _EPS
        y = scale * y + sh
        lad = lad + jnp.sum(jnp.log(scale), axis=1)
    log_z = 0.5 * P * math.log(2.0 * math.pi)
    return -0.5 * jnp.sum(y * y, axis=1) - log_z + lad


if __name__ == "__main__":
    B = 2
    latent_dim = 16     # context features
    param_dim = 8       # flow features
    hidden_dim = 32     # small for the test (256 default in the module)
    num_flows = 5

    key = jax.random.PRNGKey(0)
    k_x, k_c, k_w = jax.random.split(key, 3)
    true_params = jax.random.normal(k_x, (B, param_dim), jnp.float32)
    latent_embedding = jax.random.normal(k_c, (B, latent_dim), jnp.float32)
    flows = init_flow_params(k_w, param_dim, latent_dim, hidden_dim, num_flows)

    lp = conditional_realnvp_log_prob(
        latent_embedding, true_params, flows,
        param_dim=param_dim, latent_dim=latent_dim,
        hidden_dim=hidden_dim, num_flows=num_flows)
    lp = jax.block_until_ready(lp)
    assert lp.shape == (B,)

    # Exact-math check: same bf16 matmul operands as the kernel (tight tolerance).
    ref_bf16 = reference_log_prob(latent_embedding, true_params, flows,
                                  param_dim=param_dim, hidden_dim=hidden_dim,
                                  matmul_dtype=jnp.bfloat16)
    assert jnp.allclose(lp, ref_bf16, atol=5e-3, rtol=1e-3), (lp, ref_bf16)

    # Accuracy check vs the full-f32 HIGHEST-precision reference (bf16 MXU drift
    # allowance, compounding over num_flows).
    ref_f32 = reference_log_prob(latent_embedding, true_params, flows,
                                 param_dim=param_dim, hidden_dim=hidden_dim,
                                 matmul_dtype=jnp.float32)
    assert jnp.allclose(lp, ref_f32, atol=5e-2, rtol=2e-2), (lp, ref_f32)

    print("KERNEL_OK")
</pallas_src>

<mosaic_0001>
module attributes {stable_mosaic.version = 11 : i64} {
  func.func @_realnvp_logprob_kernel(%arg0: i32, %arg1: memref<8x8xf32, #tpu.memory_space<vmem>>, %arg2: memref<8x16xf32, #tpu.memory_space<vmem>>, %arg3: memref<5x8x32xbf16, #tpu.memory_space<vmem>>, %arg4: memref<16x480xbf16, #tpu.memory_space<vmem>>, %arg5: memref<1x480xf32, #tpu.memory_space<vmem>>, %arg6: memref<10x32x32xbf16, #tpu.memory_space<vmem>>, %arg7: memref<10x1x32xf32, #tpu.memory_space<vmem>>, %arg8: memref<10x32x32xbf16, #tpu.memory_space<vmem>>, %arg9: memref<10x1x32xf32, #tpu.memory_space<vmem>>, %arg10: memref<5x32x8xbf16, #tpu.memory_space<vmem>>, %arg11: memref<5x1x8xf32, #tpu.memory_space<vmem>>, %arg12: memref<5x32x8xbf16, #tpu.memory_space<vmem>>, %arg13: memref<5x1x8xf32, #tpu.memory_space<vmem>>, %arg14: memref<8x1xf32, #tpu.memory_space<vmem>>) attributes {dimension_semantics = [#tpu.dimension_semantics<parallel>], iteration_bounds = array<i64: 1>, scalar_prefetch = 0 : i64, scratch_operands = 0 : i64, tpu.core_type = #tpu.core_type<tc>, window_params = [{transform_indices = @transform_0, window_bounds = array<i64: 8, 8>}, {transform_indices = @transform_1, window_bounds = array<i64: 8, 16>}, {pipeline_mode = #tpu.pipeline_mode<synchronous>, transform_indices = @transform_2, window_bounds = array<i64: 5, 8, 32>}, {pipeline_mode = #tpu.pipeline_mode<synchronous>, transform_indices = @transform_3, window_bounds = array<i64: 16, 480>}, {pipeline_mode = #tpu.pipeline_mode<synchronous>, transform_indices = @transform_4, window_bounds = array<i64: 1, 480>}, {pipeline_mode = #tpu.pipeline_mode<synchronous>, transform_indices = @transform_5, window_bounds = array<i64: 10, 32, 32>}, {pipeline_mode = #tpu.pipeline_mode<synchronous>, transform_indices = @transform_6, window_bounds = array<i64: 10, 1, 32>}, {pipeline_mode = #tpu.pipeline_mode<synchronous>, transform_indices = @transform_7, window_bounds = array<i64: 10, 32, 32>}, {pipeline_mode = #tpu.pipeline_mode<synchronous>, transform_indices = @transform_8, window_bounds = array<i64: 10, 1, 32>}, {pipeline_mode = #tpu.pipeline_mode<synchronous>, transform_indices = @transform_9, window_bounds = array<i64: 5, 32, 8>}, {pipeline_mode = #tpu.pipeline_mode<synchronous>, transform_indices = @transform_10, window_bounds = array<i64: 5, 1, 8>}, {pipeline_mode = #tpu.pipeline_mode<synchronous>, transform_indices = @transform_11, window_bounds = array<i64: 5, 32, 8>}, {pipeline_mode = #tpu.pipeline_mode<synchronous>, transform_indices = @transform_12, window_bounds = array<i64: 5, 1, 8>}, {transform_indices = @transform_13, window_bounds = array<i64: 8, 1>}]} {
    %c0 = arith.constant 0 : index
    %c0_0 = arith.constant 0 : index
    %0 = vector.load %arg1[%c0, %c0_0] : memref<8x8xf32, #tpu.memory_space<vmem>>, vector<8x8xf32>
    %c0_1 = arith.constant 0 : index
    %c0_2 = arith.constant 0 : index
    %1 = vector.load %arg2[%c0_1, %c0_2] : memref<8x16xf32, #tpu.memory_space<vmem>>, vector<8x16xf32>
    %2 = arith.truncf %1 : vector<8x16xf32> to vector<8x16xbf16>
    %c0_3 = arith.constant 0 : index
    %c0_4 = arith.constant 0 : index
    %3 = vector.load %arg4[%c0_3, %c0_4] : memref<16x480xbf16, #tpu.memory_space<vmem>>, vector<16x480xbf16>
    %cst = arith.constant dense<0.000000e+00> : vector<8x480xf32>
    %4 = tpu.matmul %2, %3, %cst {dimension_numbers = #tpu.dot_dimension_numbers<[1], [0], [0], [1], [0, 0, 1, 1], [], []>} : vector<8x16xbf16>, vector<16x480xbf16>, vector<8x480xf32> -> vector<8x480xf32>
    %c0_5 = arith.constant 0 : index
    %c0_6 = arith.constant 0 : index
    %5 = vector.load %arg5[%c0_5, %c0_6] : memref<1x480xf32, #tpu.memory_space<vmem>>, vector<1x480xf32>
    %6 = vector.broadcast %5 : vector<1x480xf32> to vector<8x480xf32>
    %7 = arith.addf %4, %6 : vector<8x480xf32>
    %8 = vector.extract_strided_slice %7 {offsets = [0, 0], sizes = [8, 160], strides = [1, 1]} : vector<8x480xf32> to vector<8x160xf32>
    %9 = vector.extract_strided_slice %7 {offsets = [0, 160], sizes = [8, 320], strides = [1, 1]} : vector<8x480xf32> to vector<8x320xf32>
    %cst_7 = arith.constant 0.000000e+00 : f32
    %10 = vector.broadcast %cst_7 : f32 to vector<8x320xf32>
    %11 = arith.subf %10, %9 : vector<8x320xf32>
    %12 = math.exp %11 : vector<8x320xf32>
    %cst_8 = arith.constant 1.000000e+00 : f32
    %13 = vector.broadcast %cst_8 : f32 to vector<8x320xf32>
    %14 = arith.addf %13, %12 : vector<8x320xf32>
    %cst_9 = arith.constant 1.000000e+00 : f32
    %15 = vector.broadcast %cst_9 : f32 to vector<8x320xf32>
    %16 = arith.divf %15, %14 : vector<8x320xf32>
    %cst_10 = arith.constant 0.000000e+00 : f32
    %17 = vector.broadcast %cst_10 : f32 to vector<8x8xf32>
    %18 = arith.truncf %0 : vector<8x8xf32> to vector<8x8xbf16>
    %c0_11 = arith.constant 0 : index
    %c0_12 = arith.constant 0 : index
    %c0_13 = arith.constant 0 : index
    %19 = vector.load %arg3[%c0_11, %c0_12, %c0_13] : memref<5x8x32xbf16, #tpu.memory_space<vmem>>, vector<1x8x32xbf16>
    %20 = vector.shape_cast %19 : vector<1x8x32xbf16> to vector<8x32xbf16>
    %cst_14 = arith.constant dense<0.000000e+00> : vector<8x32xf32>
    %21 = tpu.matmul %18, %20, %cst_14 {dimension_numbers = #tpu.dot_dimension_numbers<[1], [0], [0], [1], [0, 0, 1, 1], [], []>} : vector<8x8xbf16>, vector<8x32xbf16>, vector<8x32xf32> -> vector<8x32xf32>
    %22 = vector.extract_strided_slice %8 {offsets = [0, 0], sizes = [8, 32], strides = [1, 1]} : vector<8x160xf32> to vector<8x32xf32>
    %23 = arith.addf %21, %22 : vector<8x32xf32>
    %cst_15 = arith.constant 0.000000e+00 : f32
    %24 = vector.broadcast %cst_15 : f32 to vector<8x32xf32>
    %25 = arith.maximumf %23, %24 : vector<8x32xf32>
    %26 = arith.truncf %25 : vector<8x32xf32> to vector<8x32xbf16>
    %c0_16 = arith.constant 0 : index
    %c0_17 = arith.constant 0 : index
    %c0_18 = arith.constant 0 : index
    %27 = vector.load %arg6[%c0_16, %c0_17, %c0_18] : memref<10x32x32xbf16, #tpu.memory_space<vmem>>, vector<1x32x32xbf16>
    %28 = vector.shape_cast %27 : vector<1x32x32xbf16> to vector<32x32xbf16>
    %cst_19 = arith.constant dense<0.000000e+00> : vector<8x32xf32>
    %29 = tpu.matmul %26, %28, %cst_19 {dimension_numbers = #tpu.dot_dimension_numbers<[1], [0], [0], [1], [0, 0, 1, 1], [], []>} : vector<8x32xbf16>, vector<32x32xbf16>, vector<8x32xf32> -> vector<8x32xf32>
    %c0_20 = arith.constant 0 : index
    %c0_21 = arith.constant 0 : index
    %c0_22 = arith.constant 0 : index
    %30 = vector.load %arg7[%c0_20, %c0_21, %c0_22] : memref<10x1x32xf32, #tpu.memory_space<vmem>>, vector<1x1x32xf32>
    %31 = vector.shape_cast %30 : vector<1x1x32xf32> to vector<1x32xf32>
    %32 = vector.broadcast %31 : vector<1x32xf32> to vector<8x32xf32>
    %33 = arith.addf %29, %32 : vector<8x32xf32>
    %cst_23 = arith.constant 0.000000e+00 : f32
    %34 = vector.broadcast %cst_23 : f32 to vector<8x32xf32>
    %35 = arith.maximumf %33, %34 : vector<8x32xf32>
    %36 = arith.truncf %35 : vector<8x32xf32> to vector<8x32xbf16>
    %c0_24 = arith.constant 0 : index
    %c0_25 = arith.constant 0 : index
    %c0_26 = arith.constant 0 : index
    %37 = vector.load %arg8[%c0_24, %c0_25, %c0_26] : memref<10x32x32xbf16, #tpu.memory_space<vmem>>, vector<1x32x32xbf16>
    %38 = vector.shape_cast %37 : vector<1x32x32xbf16> to vector<32x32xbf16>
    %cst_27 = arith.constant dense<0.000000e+00> : vector<8x32xf32>
    %39 = tpu.matmul %36, %38, %cst_27 {dimension_numbers = #tpu.dot_dimension_numbers<[1], [0], [0], [1], [0, 0, 1, 1], [], []>} : vector<8x32xbf16>, vector<32x32xbf16>, vector<8x32xf32> -> vector<8x32xf32>
    %c0_28 = arith.constant 0 : index
    %c0_29 = arith.constant 0 : index
    %c0_30 = arith.constant 0 : index
    %40 = vector.load %arg9[%c0_28, %c0_29, %c0_30] : memref<10x1x32xf32, #tpu.memory_space<vmem>>, vector<1x1x32xf32>
    %41 = vector.shape_cast %40 : vector<1x1x32xf32> to vector<1x32xf32>
    %42 = vector.broadcast %41 : vector<1x32xf32> to vector<8x32xf32>
    %43 = arith.addf %39, %42 : vector<8x32xf32>
    %44 = vector.extract_strided_slice %16 {offsets = [0, 0], sizes = [8, 32], strides = [1, 1]} : vector<8x320xf32> to vector<8x32xf32>
    %45 = arith.mulf %43, %44 : vector<8x32xf32>
    %46 = arith.addf %23, %45 : vector<8x32xf32>
    %cst_31 = arith.constant 0.000000e+00 : f32
    %47 = vector.broadcast %cst_31 : f32 to vector<8x32xf32>
    %48 = arith.maximumf %46, %47 : vector<8x32xf32>
    %49 = arith.truncf %48 : vector<8x32xf32> to vector<8x32xbf16>
    %c1 = arith.constant 1 : index
    %c0_32 = arith.constant 0 : index
    %c0_33 = arith.constant 0 : index
    %50 = vector.load %arg6[%c1, %c0_32, %c0_33] : memref<10x32x32xbf16, #tpu.memory_space<vmem>>, vector<1x32x32xbf16>
    %51 = vector.shape_cast %50 : vector<1x32x32xbf16> to vector<32x32xbf16>
    %cst_34 = arith.constant dense<0.000000e+00> : vector<8x32xf32>
    %52 = tpu.matmul %49, %51, %cst_34 {dimension_numbers = #tpu.dot_dimension_numbers<[1], [0], [0], [1], [0, 0, 1, 1], [], []>} : vector<8x32xbf16>, vector<32x32xbf16>, vector<8x32xf32> -> vector<8x32xf32>
    %c1_35 = arith.constant 1 : index
    %c0_36 = arith.constant 0 : index
    %c0_37 = arith.constant 0 : index
    %53 = vector.load %arg7[%c1_35, %c0_36, %c0_37] : memref<10x1x32xf32, #tpu.memory_space<vmem>>, vector<1x1x32xf32>
    %54 = vector.shape_cast %53 : vector<1x1x32xf32> to vector<1x32xf32>
    %55 = vector.broadcast %54 : vector<1x32xf32> to vector<8x32xf32>
    %56 = arith.addf %52, %55 : vector<8x32xf32>
    %cst_38 = arith.constant 0.000000e+00 : f32
    %57 = vector.broadcast %cst_38 : f32 to vector<8x32xf32>
    %58 = arith.maximumf %56, %57 : vector<8x32xf32>
    %59 = arith.truncf %58 : vector<8x32xf32> to vector<8x32xbf16>
    %c1_39 = arith.constant 1 : index
    %c0_40 = arith.constant 0 : index
    %c0_41 = arith.constant 0 : index
    %60 = vector.load %arg8[%c1_39, %c0_40, %c0_41] : memref<10x32x32xbf16, #tpu.memory_space<vmem>>, vector<1x32x32xbf16>
    %61 = vector.shape_cast %60 : vector<1x32x32xbf16> to vector<32x32xbf16>
    %cst_42 = arith.constant dense<0.000000e+00> : vector<8x32xf32>
    %62 = tpu.matmul %59, %61, %cst_42 {dimension_numbers = #tpu.dot_dimension_numbers<[1], [0], [0], [1], [0, 0, 1, 1], [], []>} : vector<8x32xbf16>, vector<32x32xbf16>, vector<8x32xf32> -> vector<8x32xf32>
    %c1_43 = arith.constant 1 : index
    %c0_44 = arith.constant 0 : index
    %c0_45 = arith.constant 0 : index
    %63 = vector.load %arg9[%c1_43, %c0_44, %c0_45] : memref<10x1x32xf32, #tpu.memory_space<vmem>>, vector<1x1x32xf32>
    %64 = vector.shape_cast %63 : vector<1x1x32xf32> to vector<1x32xf32>
    %65 = vector.broadcast %64 : vector<1x32xf32> to vector<8x32xf32>
    %66 = arith.addf %62, %65 : vector<8x32xf32>
    %67 = vector.extract_strided_slice %16 {offsets = [0, 32], sizes = [8, 32], strides = [1, 1]} : vector<8x320xf32> to vector<8x32xf32>
    %68 = arith.mulf %66, %67 : vector<8x32xf32>
    %69 = arith.addf %46, %68 : vector<8x32xf32>
    %70 = arith.truncf %69 : vector<8x32xf32> to vector<8x32xbf16>
    %c0_46 = arith.constant 0 : index
    %c0_47 = arith.constant 0 : index
    %c0_48 = arith.constant 0 : index
    %71 = vector.load %arg10[%c0_46, %c0_47, %c0_48] : memref<5x32x8xbf16, #tpu.memory_space<vmem>>, vector<1x32x8xbf16>
    %72 = vector.shape_cast %71 : vector<1x32x8xbf16> to vector<32x8xbf16>
    %cst_49 = arith.constant dense<0.000000e+00> : vector<8x8xf32>
    %73 = tpu.matmul %70, %72, %cst_49 {dimension_numbers = #tpu.dot_dimension_numbers<[1], [0], [0], [1], [0, 0, 1, 1], [], []>} : vector<8x32xbf16>, vector<32x8xbf16>, vector<8x8xf32> -> vector<8x8xf32>
    %c0_50 = arith.constant 0 : index
    %c0_51 = arith.constant 0 : index
    %c0_52 = arith.constant 0 : index
    %74 = vector.load %arg11[%c0_50, %c0_51, %c0_52] : memref<5x1x8xf32, #tpu.memory_space<vmem>>, vector<1x1x8xf32>
    %75 = vector.shape_cast %74 : vector<1x1x8xf32> to vector<1x8xf32>
    %76 = vector.broadcast %75 : vector<1x8xf32> to vector<8x8xf32>
    %77 = arith.addf %73, %76 : vector<8x8xf32>
    %c0_53 = arith.constant 0 : index
    %c0_54 = arith.constant 0 : index
    %c0_55 = arith.constant 0 : index
    %78 = vector.load %arg12[%c0_53, %c0_54, %c0_55] : memref<5x32x8xbf16, #tpu.memory_space<vmem>>, vector<1x32x8xbf16>
    %79 = vector.shape_cast %78 : vector<1x32x8xbf16> to vector<32x8xbf16>
    %cst_56 = arith.constant dense<0.000000e+00> : vector<8x8xf32>
    %80 = tpu.matmul %70, %79, %cst_56 {dimension_numbers = #tpu.dot_dimension_numbers<[1], [0], [0], [1], [0, 0, 1, 1], [], []>} : vector<8x32xbf16>, vector<32x8xbf16>, vector<8x8xf32> -> vector<8x8xf32>
    %c0_57 = arith.constant 0 : index
    %c0_58 = arith.constant 0 : index
    %c0_59 = arith.constant 0 : index
    %81 = vector.load %arg13[%c0_57, %c0_58, %c0_59] : memref<5x1x8xf32, #tpu.memory_space<vmem>>, vector<1x1x8xf32>
    %82 = vector.shape_cast %81 : vector<1x1x8xf32> to vector<1x8xf32>
    %83 = vector.broadcast %82 : vector<1x8xf32> to vector<8x8xf32>
    %84 = arith.addf %80, %83 : vector<8x8xf32>
    %cst_60 = arith.constant 2.000000e+00 : f32
    %85 = vector.broadcast %cst_60 : f32 to vector<8x8xf32>
    %86 = arith.addf %77, %85 : vector<8x8xf32>
    %cst_61 = arith.constant 0.000000e+00 : f32
    %87 = vector.broadcast %cst_61 : f32 to vector<8x8xf32>
    %88 = arith.subf %87, %86 : vector<8x8xf32>
    %89 = math.exp %88 : vector<8x8xf32>
    %cst_62 = arith.constant 1.000000e+00 : f32
    %90 = vector.broadcast %cst_62 : f32 to vector<8x8xf32>
    %91 = arith.addf %90, %89 : vector<8x8xf32>
    %cst_63 = arith.constant 1.000000e+00 : f32
    %92 = vector.broadcast %cst_63 : f32 to vector<8x8xf32>
    %93 = arith.divf %92, %91 : vector<8x8xf32>
    %cst_64 = arith.constant 1.000000e-03 : f32
    %94 = vector.broadcast %cst_64 : f32 to vector<8x8xf32>
    %95 = arith.addf %93, %94 : vector<8x8xf32>
    %96 = arith.mulf %95, %0 : vector<8x8xf32>
    %97 = arith.addf %96, %84 : vector<8x8xf32>
    %98 = math.log %95 : vector<8x8xf32>
    %99 = arith.addf %17, %98 : vector<8x8xf32>
    %100 = arith.truncf %97 : vector<8x8xf32> to vector<8x8xbf16>
    %c1_65 = arith.constant 1 : index
    %c0_66 = arith.constant 0 : index
    %c0_67 = arith.constant 0 : index
    %101 = vector.load %arg3[%c1_65, %c0_66, %c0_67] : memref<5x8x32xbf16, #tpu.memory_space<vmem>>, vector<1x8x32xbf16>
    %102 = vector.shape_cast %101 : vector<1x8x32xbf16> to vector<8x32xbf16>
    %cst_68 = arith.constant dense<0.000000e+00> : vector<8x32xf32>
    %103 = tpu.matmul %100, %102, %cst_68 {dimension_numbers = #tpu.dot_dimension_numbers<[1], [0], [0], [1], [0, 0, 1, 1], [], []>} : vector<8x8xbf16>, vector<8x32xbf16>, vector<8x32xf32> -> vector<8x32xf32>
    %104 = vector.extract_strided_slice %8 {offsets = [0, 32], sizes = [8, 32], strides = [1, 1]} : vector<8x160xf32> to vector<8x32xf32>
    %105 = arith.addf %103, %104 : vector<8x32xf32>
    %cst_69 = arith.constant 0.000000e+00 : f32
    %106 = vector.broadcast %cst_69 : f32 to vector<8x32xf32>
    %107 = arith.maximumf %105, %106 : vector<8x32xf32>
    %108 = arith.truncf %107 : vector<8x32xf32> to vector<8x32xbf16>
    %c2 = arith.constant 2 : index
    %c0_70 = arith.constant 0 : index
    %c0_71 = arith.constant 0 : index
    %109 = vector.load %arg6[%c2, %c0_70, %c0_71] : memref<10x32x32xbf16, #tpu.memory_space<vmem>>, vector<1x32x32xbf16>
    %110 = vector.shape_cast %109 : vector<1x32x32xbf16> to vector<32x32xbf16>
    %cst_72 = arith.constant dense<0.000000e+00> : vector<8x32xf32>
    %111 = tpu.matmul %108, %110, %cst_72 {dimension_numbers = #tpu.dot_dimension_numbers<[1], [0], [0], [1], [0, 0, 1, 1], [], []>} : vector<8x32xbf16>, vector<32x32xbf16>, vector<8x32xf32> -> vector<8x32xf32>
    %c2_73 = arith.constant 2 : index
    %c0_74 = arith.constant 0 : index
    %c0_75 = arith.constant 0 : index
    %112 = vector.load %arg7[%c2_73, %c0_74, %c0_75] : memref<10x1x32xf32, #tpu.memory_space<vmem>>, vector<1x1x32xf32>
    %113 = vector.shape_cast %112 : vector<1x1x32xf32> to vector<1x32xf32>
    %114 = vector.broadcast %113 : vector<1x32xf32> to vector<8x32xf32>
    %115 = arith.addf %111, %114 : vector<8x32xf32>
    %cst_76 = arith.constant 0.000000e+00 : f32
    %116 = vector.broadcast %cst_76 : f32 to vector<8x32xf32>
    %117 = arith.maximumf %115, %116 : vector<8x32xf32>
    %118 = arith.truncf %117 : vector<8x32xf32> to vector<8x32xbf16>
    %c2_77 = arith.constant 2 : index
    %c0_78 = arith.constant 0 : index
    %c0_79 = arith.constant 0 : index
    %119 = vector.load %arg8[%c2_77, %c0_78, %c0_79] : memref<10x32x32xbf16, #tpu.memory_space<vmem>>, vector<1x32x32xbf16>
    %120 = vector.shape_cast %119 : vector<1x32x32xbf16> to vector<32x32xbf16>
    %cst_80 = arith.constant dense<0.000000e+00> : vector<8x32xf32>
    %121 = tpu.matmul %118, %120, %cst_80 {dimension_numbers = #tpu.dot_dimension_numbers<[1], [0], [0], [1], [0, 0, 1, 1], [], []>} : vector<8x32xbf16>, vector<32x32xbf16>, vector<8x32xf32> -> vector<8x32xf32>
    %c2_81 = arith.constant 2 : index
    %c0_82 = arith.constant 0 : index
    %c0_83 = arith.constant 0 : index
    %122 = vector.load %arg9[%c2_81, %c0_82, %c0_83] : memref<10x1x32xf32, #tpu.memory_space<vmem>>, vector<1x1x32xf32>
    %123 = vector.shape_cast %122 : vector<1x1x32xf32> to vector<1x32xf32>
    %124 = vector.broadcast %123 : vector<1x32xf32> to vector<8x32xf32>
    %125 = arith.addf %121, %124 : vector<8x32xf32>
    %126 = vector.extract_strided_slice %16 {offsets = [0, 64], sizes = [8, 32], strides = [1, 1]} : vector<8x320xf32> to vector<8x32xf32>
    %127 = arith.mulf %125, %126 : vector<8x32xf32>
    %128 = arith.addf %105, %127 : vector<8x32xf32>
    %cst_84 = arith.constant 0.000000e+00 : f32
    %129 = vector.broadcast %cst_84 : f32 to vector<8x32xf32>
    %130 = arith.maximumf %128, %129 : vector<8x32xf32>
    %131 = arith.truncf %130 : vector<8x32xf32> to vector<8x32xbf16>
    %c3 = arith.constant 3 : index
    %c0_85 = arith.constant 0 : index
    %c0_86 = arith.constant 0 : index
    %132 = vector.load %arg6[%c3, %c0_85, %c0_86] : memref<10x32x32xbf16, #tpu.memory_space<vmem>>, vector<1x32x32xbf16>
    %133 = vector.shape_cast %132 : vector<1x32x32xbf16> to vector<32x32xbf16>
    %cst_87 = arith.constant dense<0.000000e+00> : vector<8x32xf32>
    %134 = tpu.matmul %131, %133, %cst_87 {dimension_numbers = #tpu.dot_dimension_numbers<[1], [0], [0], [1], [0, 0, 1, 1], [], []>} : vector<8x32xbf16>, vector<32x32xbf16>, vector<8x32xf32> -> vector<8x32xf32>
    %c3_88 = arith.constant 3 : index
    %c0_89 = arith.constant 0 : index
    %c0_90 = arith.constant 0 : index
    %135 = vector.load %arg7[%c3_88, %c0_89, %c0_90] : memref<10x1x32xf32, #tpu.memory_space<vmem>>, vector<1x1x32xf32>
    %136 = vector.shape_cast %135 : vector<1x1x32xf32> to vector<1x32xf32>
    %137 = vector.broadcast %136 : vector<1x32xf32> to vector<8x32xf32>
    %138 = arith.addf %134, %137 : vector<8x32xf32>
    %cst_91 = arith.constant 0.000000e+00 : f32
    %139 = vector.broadcast %cst_91 : f32 to vector<8x32xf32>
    %140 = arith.maximumf %138, %139 : vector<8x32xf32>
    %141 = arith.truncf %140 : vector<8x32xf32> to vector<8x32xbf16>
    %c3_92 = arith.constant 3 : index
    %c0_93 = arith.constant 0 : index
    %c0_94 = arith.constant 0 : index
    %142 = vector.load %arg8[%c3_92, %c0_93, %c0_94] : memref<10x32x32xbf16, #tpu.memory_space<vmem>>, vector<1x32x32xbf16>
    %143 = vector.shape_cast %142 : vector<1x32x32xbf16> to vector<32x32xbf16>
    %cst_95 = arith.constant dense<0.000000e+00> : vector<8x32xf32>
    %144 = tpu.matmul %141, %143, %cst_95 {dimension_numbers = #tpu.dot_dimension_numbers<[1], [0], [0], [1], [0, 0, 1, 1], [], []>} : vector<8x32xbf16>, vector<32x32xbf16>, vector<8x32xf32> -> vector<8x32xf32>
    %c3_96 = arith.constant 3 : index
    %c0_97 = arith.constant 0 : index
    %c0_98 = arith.constant 0 : index
    %145 = vector.load %arg9[%c3_96, %c0_97, %c0_98] : memref<10x1x32xf32, #tpu.memory_space<vmem>>, vector<1x1x32xf32>
    %146 = vector.shape_cast %145 : vector<1x1x32xf32> to vector<1x32xf32>
    %147 = vector.broadcast %146 : vector<1x32xf32> to vector<8x32xf32>
    %148 = arith.addf %144, %147 : vector<8x32xf32>
    %149 = vector.extract_strided_slice %16 {offsets = [0, 96], sizes = [8, 32], strides = [1, 1]} : vector<8x320xf32> to vector<8x32xf32>
    %150 = arith.mulf %148, %149 : vector<8x32xf32>
    %151 = arith.addf %128, %150 : vector<8x32xf32>
    %152 = arith.truncf %151 : vector<8x32xf32> to vector<8x32xbf16>
    %c1_99 = arith.constant 1 : index
    %c0_100 = arith.constant 0 : index
    %c0_101 = arith.constant 0 : index
    %153 = vector.load %arg10[%c1_99, %c0_100, %c0_101] : memref<5x32x8xbf16, #tpu.memory_space<vmem>>, vector<1x32x8xbf16>
    %154 = vector.shape_cast %153 : vector<1x32x8xbf16> to vector<32x8xbf16>
    %cst_102 = arith.constant dense<0.000000e+00> : vector<8x8xf32>
    %155 = tpu.matmul %152, %154, %cst_102 {dimension_numbers = #tpu.dot_dimension_numbers<[1], [0], [0], [1], [0, 0, 1, 1], [], []>} : vector<8x32xbf16>, vector<32x8xbf16>, vector<8x8xf32> -> vector<8x8xf32>
    %c1_103 = arith.constant 1 : index
    %c0_104 = arith.constant 0 : index
    %c0_105 = arith.constant 0 : index
    %156 = vector.load %arg11[%c1_103, %c0_104, %c0_105] : memref<5x1x8xf32, #tpu.memory_space<vmem>>, vector<1x1x8xf32>
    %157 = vector.shape_cast %156 : vector<1x1x8xf32> to vector<1x8xf32>
    %158 = vector.broadcast %157 : vector<1x8xf32> to vector<8x8xf32>
    %159 = arith.addf %155, %158 : vector<8x8xf32>
    %c1_106 = arith.constant 1 : index
    %c0_107 = arith.constant 0 : index
    %c0_108 = arith.constant 0 : index
    %160 = vector.load %arg12[%c1_106, %c0_107, %c0_108] : memref<5x32x8xbf16, #tpu.memory_space<vmem>>, vector<1x32x8xbf16>
    %161 = vector.shape_cast %160 : vector<1x32x8xbf16> to vector<32x8xbf16>
    %cst_109 = arith.constant dense<0.000000e+00> : vector<8x8xf32>
    %162 = tpu.matmul %152, %161, %cst_109 {dimension_numbers = #tpu.dot_dimension_numbers<[1], [0], [0], [1], [0, 0, 1, 1], [], []>} : vector<8x32xbf16>, vector<32x8xbf16>, vector<8x8xf32> -> vector<8x8xf32>
    %c1_110 = arith.constant 1 : index
    %c0_111 = arith.constant 0 : index
    %c0_112 = arith.constant 0 : index
    %163 = vector.load %arg13[%c1_110, %c0_111, %c0_112] : memref<5x1x8xf32, #tpu.memory_space<vmem>>, vector<1x1x8xf32>
    %164 = vector.shape_cast %163 : vector<1x1x8xf32> to vector<1x8xf32>
    %165 = vector.broadcast %164 : vector<1x8xf32> to vector<8x8xf32>
    %166 = arith.addf %162, %165 : vector<8x8xf32>
    %cst_113 = arith.constant 2.000000e+00 : f32
    %167 = vector.broadcast %cst_113 : f32 to vector<8x8xf32>
    %168 = arith.addf %159, %167 : vector<8x8xf32>
    %cst_114 = arith.constant 0.000000e+00 : f32
    %169 = vector.broadcast %cst_114 : f32 to vector<8x8xf32>
    %170 = arith.subf %169, %168 : vector<8x8xf32>
    %171 = math.exp %170 : vector<8x8xf32>
    %cst_115 = arith.constant 1.000000e+00 : f32
    %172 = vector.broadcast %cst_115 : f32 to vector<8x8xf32>
    %173 = arith.addf %172, %171 : vector<8x8xf32>
    %cst_116 = arith.constant 1.000000e+00 : f32
    %174 = vector.broadcast %cst_116 : f32 to vector<8x8xf32>
    %175 = arith.divf %174, %173 : vector<8x8xf32>
    %cst_117 = arith.constant 1.000000e-03 : f32
    %176 = vector.broadcast %cst_117 : f32 to vector<8x8xf32>
    %177 = arith.addf %175, %176 : vector<8x8xf32>
    %178 = arith.mulf %177, %97 : vector<8x8xf32>
    %179 = arith.addf %178, %166 : vector<8x8xf32>
    %180 = math.log %177 : vector<8x8xf32>
    %181 = arith.addf %99, %180 : vector<8x8xf32>
    %182 = arith.truncf %179 : vector<8x8xf32> to vector<8x8xbf16>
    %c2_118 = arith.constant 2 : index
    %c0_119 = arith.constant 0 : index
    %c0_120 = arith.constant 0 : index
    %183 = vector.load %arg3[%c2_118, %c0_119, %c0_120] : memref<5x8x32xbf16, #tpu.memory_space<vmem>>, vector<1x8x32xbf16>
    %184 = vector.shape_cast %183 : vector<1x8x32xbf16> to vector<8x32xbf16>
    %cst_121 = arith.constant dense<0.000000e+00> : vector<8x32xf32>
    %185 = tpu.matmul %182, %184, %cst_121 {dimension_numbers = #tpu.dot_dimension_numbers<[1], [0], [0], [1], [0, 0, 1, 1], [], []>} : vector<8x8xbf16>, vector<8x32xbf16>, vector<8x32xf32> -> vector<8x32xf32>
    %186 = vector.extract_strided_slice %8 {offsets = [0, 64], sizes = [8, 32], strides = [1, 1]} : vector<8x160xf32> to vector<8x32xf32>
    %187 = arith.addf %185, %186 : vector<8x32xf32>
    %cst_122 = arith.constant 0.000000e+00 : f32
    %188 = vector.broadcast %cst_122 : f32 to vector<8x32xf32>
    %189 = arith.maximumf %187, %188 : vector<8x32xf32>
    %190 = arith.truncf %189 : vector<8x32xf32> to vector<8x32xbf16>
    %c4 = arith.constant 4 : index
    %c0_123 = arith.constant 0 : index
    %c0_124 = arith.constant 0 : index
    %191 = vector.load %arg6[%c4, %c0_123, %c0_124] : memref<10x32x32xbf16, #tpu.memory_space<vmem>>, vector<1x32x32xbf16>
    %192 = vector.shape_cast %191 : vector<1x32x32xbf16> to vector<32x32xbf16>
    %cst_125 = arith.constant dense<0.000000e+00> : vector<8x32xf32>
    %193 = tpu.matmul %190, %192, %cst_125 {dimension_numbers = #tpu.dot_dimension_numbers<[1], [0], [0], [1], [0, 0, 1, 1], [], []>} : vector<8x32xbf16>, vector<32x32xbf16>, vector<8x32xf32> -> vector<8x32xf32>
    %c4_126 = arith.constant 4 : index
    %c0_127 = arith.constant 0 : index
    %c0_128 = arith.constant 0 : index
    %194 = vector.load %arg7[%c4_126, %c0_127, %c0_128] : memref<10x1x32xf32, #tpu.memory_space<vmem>>, vector<1x1x32xf32>
    %195 = vector.shape_cast %194 : vector<1x1x32xf32> to vector<1x32xf32>
    %196 = vector.broadcast %195 : vector<1x32xf32> to vector<8x32xf32>
    %197 = arith.addf %193, %196 : vector<8x32xf32>
    %cst_129 = arith.constant 0.000000e+00 : f32
    %198 = vector.broadcast %cst_129 : f32 to vector<8x32xf32>
    %199 = arith.maximumf %197, %198 : vector<8x32xf32>
    %200 = arith.truncf %199 : vector<8x32xf32> to vector<8x32xbf16>
    %c4_130 = arith.constant 4 : index
    %c0_131 = arith.constant 0 : index
    %c0_132 = arith.constant 0 : index
    %201 = vector.load %arg8[%c4_130, %c0_131, %c0_132] : memref<10x32x32xbf16, #tpu.memory_space<vmem>>, vector<1x32x32xbf16>
    %202 = vector.shape_cast %201 : vector<1x32x32xbf16> to vector<32x32xbf16>
    %cst_133 = arith.constant dense<0.000000e+00> : vector<8x32xf32>
    %203 = tpu.matmul %200, %202, %cst_133 {dimension_numbers = #tpu.dot_dimension_numbers<[1], [0], [0], [1], [0, 0, 1, 1], [], []>} : vector<8x32xbf16>, vector<32x32xbf16>, vector<8x32xf32> -> vector<8x32xf32>
    %c4_134 = arith.constant 4 : index
    %c0_135 = arith.constant 0 : index
    %c0_136 = arith.constant 0 : index
    %204 = vector.load %arg9[%c4_134, %c0_135, %c0_136] : memref<10x1x32xf32, #tpu.memory_space<vmem>>, vector<1x1x32xf32>
    %205 = vector.shape_cast %204 : vector<1x1x32xf32> to vector<1x32xf32>
    %206 = vector.broadcast %205 : vector<1x32xf32> to vector<8x32xf32>
    %207 = arith.addf %203, %206 : vector<8x32xf32>
    %208 = vector.extract_strided_slice %16 {offsets = [0, 128], sizes = [8, 32], strides = [1, 1]} : vector<8x320xf32> to vector<8x32xf32>
    %209 = arith.mulf %207, %208 : vector<8x32xf32>
    %210 = arith.addf %187, %209 : vector<8x32xf32>
    %cst_137 = arith.constant 0.000000e+00 : f32
    %211 = vector.broadcast %cst_137 : f32 to vector<8x32xf32>
    %212 = arith.maximumf %210, %211 : vector<8x32xf32>
    %213 = arith.truncf %212 : vector<8x32xf32> to vector<8x32xbf16>
    %c5 = arith.constant 5 : index
    %c0_138 = arith.constant 0 : index
    %c0_139 = arith.constant 0 : index
    %214 = vector.load %arg6[%c5, %c0_138, %c0_139] : memref<10x32x32xbf16, #tpu.memory_space<vmem>>, vector<1x32x32xbf16>
    %215 = vector.shape_cast %214 : vector<1x32x32xbf16> to vector<32x32xbf16>
    %cst_140 = arith.constant dense<0.000000e+00> : vector<8x32xf32>
    %216 = tpu.matmul %213, %215, %cst_140 {dimension_numbers = #tpu.dot_dimension_numbers<[1], [0], [0], [1], [0, 0, 1, 1], [], []>} : vector<8x32xbf16>, vector<32x32xbf16>, vector<8x32xf32> -> vector<8x32xf32>
    %c5_141 = arith.constant 5 : index
    %c0_142 = arith.constant 0 : index
    %c0_143 = arith.constant 0 : index
    %217 = vector.load %arg7[%c5_141, %c0_142, %c0_143] : memref<10x1x32xf32, #tpu.memory_space<vmem>>, vector<1x1x32xf32>
    %218 = vector.shape_cast %217 : vector<1x1x32xf32> to vector<1x32xf32>
    %219 = vector.broadcast %218 : vector<1x32xf32> to vector<8x32xf32>
    %220 = arith.addf %216, %219 : vector<8x32xf32>
    %cst_144 = arith.constant 0.000000e+00 : f32
    %221 = vector.broadcast %cst_144 : f32 to vector<8x32xf32>
    %222 = arith.maximumf %220, %221 : vector<8x32xf32>
    %223 = arith.truncf %222 : vector<8x32xf32> to vector<8x32xbf16>
    %c5_145 = arith.constant 5 : index
    %c0_146 = arith.constant 0 : index
    %c0_147 = arith.constant 0 : index
    %224 = vector.load %arg8[%c5_145, %c0_146, %c0_147] : memref<10x32x32xbf16, #tpu.memory_space<vmem>>, vector<1x32x32xbf16>
    %225 = vector.shape_cast %224 : vector<1x32x32xbf16> to vector<32x32xbf16>
    %cst_148 = arith.constant dense<0.000000e+00> : vector<8x32xf32>
    %226 = tpu.matmul %223, %225, %cst_148 {dimension_numbers = #tpu.dot_dimension_numbers<[1], [0], [0], [1], [0, 0, 1, 1], [], []>} : vector<8x32xbf16>, vector<32x32xbf16>, vector<8x32xf32> -> vector<8x32xf32>
    %c5_149 = arith.constant 5 : index
    %c0_150 = arith.constant 0 : index
    %c0_151 = arith.constant 0 : index
    %227 = vector.load %arg9[%c5_149, %c0_150, %c0_151] : memref<10x1x32xf32, #tpu.memory_space<vmem>>, vector<1x1x32xf32>
    %228 = vector.shape_cast %227 : vector<1x1x32xf32> to vector<1x32xf32>
    %229 = vector.broadcast %228 : vector<1x32xf32> to vector<8x32xf32>
    %230 = arith.addf %226, %229 : vector<8x32xf32>
    %231 = vector.extract_strided_slice %16 {offsets = [0, 160], sizes = [8, 32], strides = [1, 1]} : vector<8x320xf32> to vector<8x32xf32>
    %232 = arith.mulf %230, %231 : vector<8x32xf32>
    %233 = arith.addf %210, %232 : vector<8x32xf32>
    %234 = arith.truncf %233 : vector<8x32xf32> to vector<8x32xbf16>
    %c2_152 = arith.constant 2 : index
    %c0_153 = arith.constant 0 : index
    %c0_154 = arith.constant 0 : index
    %235 = vector.load %arg10[%c2_152, %c0_153, %c0_154] : memref<5x32x8xbf16, #tpu.memory_space<vmem>>, vector<1x32x8xbf16>
    %236 = vector.shape_cast %235 : vector<1x32x8xbf16> to vector<32x8xbf16>
    %cst_155 = arith.constant dense<0.000000e+00> : vector<8x8xf32>
    %237 = tpu.matmul %234, %236, %cst_155 {dimension_numbers = #tpu.dot_dimension_numbers<[1], [0], [0], [1], [0, 0, 1, 1], [], []>} : vector<8x32xbf16>, vector<32x8xbf16>, vector<8x8xf32> -> vector<8x8xf32>
    %c2_156 = arith.constant 2 : index
    %c0_157 = arith.constant 0 : index
    %c0_158 = arith.constant 0 : index
    %238 = vector.load %arg11[%c2_156, %c0_157, %c0_158] : memref<5x1x8xf32, #tpu.memory_space<vmem>>, vector<1x1x8xf32>
    %239 = vector.shape_cast %238 : vector<1x1x8xf32> to vector<1x8xf32>
    %240 = vector.broadcast %239 : vector<1x8xf32> to vector<8x8xf32>
    %241 = arith.addf %237, %240 : vector<8x8xf32>
    %c2_159 = arith.constant 2 : index
    %c0_160 = arith.constant 0 : index
    %c0_161 = arith.constant 0 : index
    %242 = vector.load %arg12[%c2_159, %c0_160, %c0_161] : memref<5x32x8xbf16, #tpu.memory_space<vmem>>, vector<1x32x8xbf16>
    %243 = vector.shape_cast %242 : vector<1x32x8xbf16> to vector<32x8xbf16>
    %cst_162 = arith.constant dense<0.000000e+00> : vector<8x8xf32>
    %244 = tpu.matmul %234, %243, %cst_162 {dimension_numbers = #tpu.dot_dimension_numbers<[1], [0], [0], [1], [0, 0, 1, 1], [], []>} : vector<8x32xbf16>, vector<32x8xbf16>, vector<8x8xf32> -> vector<8x8xf32>
    %c2_163 = arith.constant 2 : index
    %c0_164 = arith.constant 0 : index
    %c0_165 = arith.constant 0 : index
    %245 = vector.load %arg13[%c2_163, %c0_164, %c0_165] : memref<5x1x8xf32, #tpu.memory_space<vmem>>, vector<1x1x8xf32>
    %246 = vector.shape_cast %245 : vector<1x1x8xf32> to vector<1x8xf32>
    %247 = vector.broadcast %246 : vector<1x8xf32> to vector<8x8xf32>
    %248 = arith.addf %244, %247 : vector<8x8xf32>
    %cst_166 = arith.constant 2.000000e+00 : f32
    %249 = vector.broadcast %cst_166 : f32 to vector<8x8xf32>
    %250 = arith.addf %241, %249 : vector<8x8xf32>
    %cst_167 = arith.constant 0.000000e+00 : f32
    %251 = vector.broadcast %cst_167 : f32 to vector<8x8xf32>
    %252 = arith.subf %251, %250 : vector<8x8xf32>
    %253 = math.exp %252 : vector<8x8xf32>
    %cst_168 = arith.constant 1.000000e+00 : f32
    %254 = vector.broadcast %cst_168 : f32 to vector<8x8xf32>
    %255 = arith.addf %254, %253 : vector<8x8xf32>
    %cst_169 = arith.constant 1.000000e+00 : f32
    %256 = vector.broadcast %cst_169 : f32 to vector<8x8xf32>
    %257 = arith.divf %256, %255 : vector<8x8xf32>
    %cst_170 = arith.constant 1.000000e-03 : f32
    %258 = vector.broadcast %cst_170 : f32 to vector<8x8xf32>
    %259 = arith.addf %257, %258 : vector<8x8xf32>
    %260 = arith.mulf %259, %179 : vector<8x8xf32>
    %261 = arith.addf %260, %248 : vector<8x8xf32>
    %262 = math.log %259 : vector<8x8xf32>
    %263 = arith.addf %181, %262 : vector<8x8xf32>
    %264 = arith.truncf %261 : vector<8x8xf32> to vector<8x8xbf16>
    %c3_171 = arith.constant 3 : index
    %c0_172 = arith.constant 0 : index
    %c0_173 = arith.constant 0 : index
    %265 = vector.load %arg3[%c3_171, %c0_172, %c0_173] : memref<5x8x32xbf16, #tpu.memory_space<vmem>>, vector<1x8x32xbf16>
    %266 = vector.shape_cast %265 : vector<1x8x32xbf16> to vector<8x32xbf16>
    %cst_174 = arith.constant dense<0.000000e+00> : vector<8x32xf32>
    %267 = tpu.matmul %264, %266, %cst_174 {dimension_numbers = #tpu.dot_dimension_numbers<[1], [0], [0], [1], [0, 0, 1, 1], [], []>} : vector<8x8xbf16>, vector<8x32xbf16>, vector<8x32xf32> -> vector<8x32xf32>
    %268 = vector.extract_strided_slice %8 {offsets = [0, 96], sizes = [8, 32], strides = [1, 1]} : vector<8x160xf32> to vector<8x32xf32>
    %269 = arith.addf %267, %268 : vector<8x32xf32>
    %cst_175 = arith.constant 0.000000e+00 : f32
    %270 = vector.broadcast %cst_175 : f32 to vector<8x32xf32>
    %271 = arith.maximumf %269, %270 : vector<8x32xf32>
    %272 = arith.truncf %271 : vector<8x32xf32> to vector<8x32xbf16>
    %c6 = arith.constant 6 : index
    %c0_176 = arith.constant 0 : index
    %c0_177 = arith.constant 0 : index
    %273 = vector.load %arg6[%c6, %c0_176, %c0_177] : memref<10x32x32xbf16, #tpu.memory_space<vmem>>, vector<1x32x32xbf16>
    %274 = vector.shape_cast %273 : vector<1x32x32xbf16> to vector<32x32xbf16>
    %cst_178 = arith.constant dense<0.000000e+00> : vector<8x32xf32>
    %275 = tpu.matmul %272, %274, %cst_178 {dimension_numbers = #tpu.dot_dimension_numbers<[1], [0], [0], [1], [0, 0, 1, 1], [], []>} : vector<8x32xbf16>, vector<32x32xbf16>, vector<8x32xf32> -> vector<8x32xf32>
    %c6_179 = arith.constant 6 : index
    %c0_180 = arith.constant 0 : index
    %c0_181 = arith.constant 0 : index
    %276 = vector.load %arg7[%c6_179, %c0_180, %c0_181] : memref<10x1x32xf32, #tpu.memory_space<vmem>>, vector<1x1x32xf32>
    %277 = vector.shape_cast %276 : vector<1x1x32xf32> to vector<1x32xf32>
    %278 = vector.broadcast %277 : vector<1x32xf32> to vector<8x32xf32>
    %279 = arith.addf %275, %278 : vector<8x32xf32>
    %cst_182 = arith.constant 0.000000e+00 : f32
    %280 = vector.broadcast %cst_182 : f32 to vector<8x32xf32>
    %281 = arith.maximumf %279, %280 : vector<8x32xf32>
    %282 = arith.truncf %281 : vector<8x32xf32> to vector<8x32xbf16>
    %c6_183 = arith.constant 6 : index
    %c0_184 = arith.constant 0 : index
    %c0_185 = arith.constant 0 : index
    %283 = vector.load %arg8[%c6_183, %c0_184, %c0_185] : memref<10x32x32xbf16, #tpu.memory_space<vmem>>, vector<1x32x32xbf16>
    %284 = vector.shape_cast %283 : vector<1x32x32xbf16> to vector<32x32xbf16>
    %cst_186 = arith.constant dense<0.000000e+00> : vector<8x32xf32>
    %285 = tpu.matmul %282, %284, %cst_186 {dimension_numbers = #tpu.dot_dimension_numbers<[1], [0], [0], [1], [0, 0, 1, 1], [], []>} : vector<8x32xbf16>, vector<32x32xbf16>, vector<8x32xf32> -> vector<8x32xf32>
    %c6_187 = arith.constant 6 : index
    %c0_188 = arith.constant 0 : index
    %c0_189 = arith.constant 0 : index
    %286 = vector.load %arg9[%c6_187, %c0_188, %c0_189] : memref<10x1x32xf32, #tpu.memory_space<vmem>>, vector<1x1x32xf32>
    %287 = vector.shape_cast %286 : vector<1x1x32xf32> to vector<1x32xf32>
    %288 = vector.broadcast %287 : vector<1x32xf32> to vector<8x32xf32>
    %289 = arith.addf %285, %288 : vector<8x32xf32>
    %290 = vector.extract_strided_slice %16 {offsets = [0, 192], sizes = [8, 32], strides = [1, 1]} : vector<8x320xf32> to vector<8x32xf32>
    %291 = arith.mulf %289, %290 : vector<8x32xf32>
    %292 = arith.addf %269, %291 : vector<8x32xf32>
    %cst_190 = arith.constant 0.000000e+00 : f32
    %293 = vector.broadcast %cst_190 : f32 to vector<8x32xf32>
    %294 = arith.maximumf %292, %293 : vector<8x32xf32>
    %295 = arith.truncf %294 : vector<8x32xf32> to vector<8x32xbf16>
    %c7 = arith.constant 7 : index
    %c0_191 = arith.constant 0 : index
    %c0_192 = arith.constant 0 : index
    %296 = vector.load %arg6[%c7, %c0_191, %c0_192] : memref<10x32x32xbf16, #tpu.memory_space<vmem>>, vector<1x32x32xbf16>
    %297 = vector.shape_cast %296 : vector<1x32x32xbf16> to vector<32x32xbf16>
    %cst_193 = arith.constant dense<0.000000e+00> : vector<8x32xf32>
    %298 = tpu.matmul %295, %297, %cst_193 {dimension_numbers = #tpu.dot_dimension_numbers<[1], [0], [0], [1], [0, 0, 1, 1], [], []>} : vector<8x32xbf16>, vector<32x32xbf16>, vector<8x32xf32> -> vector<8x32xf32>
    %c7_194 = arith.constant 7 : index
    %c0_195 = arith.constant 0 : index
    %c0_196 = arith.constant 0 : index
    %299 = vector.load %arg7[%c7_194, %c0_195, %c0_196] : memref<10x1x32xf32, #tpu.memory_space<vmem>>, vector<1x1x32xf32>
    %300 = vector.shape_cast %299 : vector<1x1x32xf32> to vector<1x32xf32>
    %301 = vector.broadcast %300 : vector<1x32xf32> to vector<8x32xf32>
    %302 = arith.addf %298, %301 : vector<8x32xf32>
    %cst_197 = arith.constant 0.000000e+00 : f32
    %303 = vector.broadcast %cst_197 : f32 to vector<8x32xf32>
    %304 = arith.maximumf %302, %303 : vector<8x32xf32>
    %305 = arith.truncf %304 : vector<8x32xf32> to vector<8x32xbf16>
    %c7_198 = arith.constant 7 : index
    %c0_199 = arith.constant 0 : index
    %c0_200 = arith.constant 0 : index
    %306 = vector.load %arg8[%c7_198, %c0_199, %c0_200] : memref<10x32x32xbf16, #tpu.memory_space<vmem>>, vector<1x32x32xbf16>
    %307 = vector.shape_cast %306 : vector<1x32x32xbf16> to vector<32x32xbf16>
    %cst_201 = arith.constant dense<0.000000e+00> : vector<8x32xf32>
    %308 = tpu.matmul %305, %307, %cst_201 {dimension_numbers = #tpu.dot_dimension_numbers<[1], [0], [0], [1], [0, 0, 1, 1], [], []>} : vector<8x32xbf16>, vector<32x32xbf16>, vector<8x32xf32> -> vector<8x32xf32>
    %c7_202 = arith.constant 7 : index
    %c0_203 = arith.constant 0 : index
    %c0_204 = arith.constant 0 : index
    %309 = vector.load %arg9[%c7_202, %c0_203, %c0_204] : memref<10x1x32xf32, #tpu.memory_space<vmem>>, vector<1x1x32xf32>
    %310 = vector.shape_cast %309 : vector<1x1x32xf32> to vector<1x32xf32>
    %311 = vector.broadcast %310 : vector<1x32xf32> to vector<8x32xf32>
    %312 = arith.addf %308, %311 : vector<8x32xf32>
    %313 = vector.extract_strided_slice %16 {offsets = [0, 224], sizes = [8, 32], strides = [1, 1]} : vector<8x320xf32> to vector<8x32xf32>
    %314 = arith.mulf %312, %313 : vector<8x32xf32>
    %315 = arith.addf %292, %314 : vector<8x32xf32>
    %316 = arith.truncf %315 : vector<8x32xf32> to vector<8x32xbf16>
    %c3_205 = arith.constant 3 : index
    %c0_206 = arith.constant 0 : index
    %c0_207 = arith.constant 0 : index
    %317 = vector.load %arg10[%c3_205, %c0_206, %c0_207] : memref<5x32x8xbf16, #tpu.memory_space<vmem>>, vector<1x32x8xbf16>
    %318 = vector.shape_cast %317 : vector<1x32x8xbf16> to vector<32x8xbf16>
    %cst_208 = arith.constant dense<0.000000e+00> : vector<8x8xf32>
    %319 = tpu.matmul %316, %318, %cst_208 {dimension_numbers = #tpu.dot_dimension_numbers<[1], [0], [0], [1], [0, 0, 1, 1], [], []>} : vector<8x32xbf16>, vector<32x8xbf16>, vector<8x8xf32> -> vector<8x8xf32>
    %c3_209 = arith.constant 3 : index
    %c0_210 = arith.constant 0 : index
    %c0_211 = arith.constant 0 : index
    %320 = vector.load %arg11[%c3_209, %c0_210, %c0_211] : memref<5x1x8xf32, #tpu.memory_space<vmem>>, vector<1x1x8xf32>
    %321 = vector.shape_cast %320 : vector<1x1x8xf32> to vector<1x8xf32>
    %322 = vector.broadcast %321 : vector<1x8xf32> to vector<8x8xf32>
    %323 = arith.addf %319, %322 : vector<8x8xf32>
    %c3_212 = arith.constant 3 : index
    %c0_213 = arith.constant 0 : index
    %c0_214 = arith.constant 0 : index
    %324 = vector.load %arg12[%c3_212, %c0_213, %c0_214] : memref<5x32x8xbf16, #tpu.memory_space<vmem>>, vector<1x32x8xbf16>
    %325 = vector.shape_cast %324 : vector<1x32x8xbf16> to vector<32x8xbf16>
    %cst_215 = arith.constant dense<0.000000e+00> : vector<8x8xf32>
    %326 = tpu.matmul %316, %325, %cst_215 {dimension_numbers = #tpu.dot_dimension_numbers<[1], [0], [0], [1], [0, 0, 1, 1], [], []>} : vector<8x32xbf16>, vector<32x8xbf16>, vector<8x8xf32> -> vector<8x8xf32>
    %c3_216 = arith.constant 3 : index
    %c0_217 = arith.constant 0 : index
    %c0_218 = arith.constant 0 : index
    %327 = vector.load %arg13[%c3_216, %c0_217, %c0_218] : memref<5x1x8xf32, #tpu.memory_space<vmem>>, vector<1x1x8xf32>
    %328 = vector.shape_cast %327 : vector<1x1x8xf32> to vector<1x8xf32>
    %329 = vector.broadcast %328 : vector<1x8xf32> to vector<8x8xf32>
    %330 = arith.addf %326, %329 : vector<8x8xf32>
    %cst_219 = arith.constant 2.000000e+00 : f32
    %331 = vector.broadcast %cst_219 : f32 to vector<8x8xf32>
    %332 = arith.addf %323, %331 : vector<8x8xf32>
    %cst_220 = arith.constant 0.000000e+00 : f32
    %333 = vector.broadcast %cst_220 : f32 to vector<8x8xf32>
    %334 = arith.subf %333, %332 : vector<8x8xf32>
    %335 = math.exp %334 : vector<8x8xf32>
    %cst_221 = arith.constant 1.000000e+00 : f32
    %336 = vector.broadcast %cst_221 : f32 to vector<8x8xf32>
    %337 = arith.addf %336, %335 : vector<8x8xf32>
    %cst_222 = arith.constant 1.000000e+00 : f32
    %338 = vector.broadcast %cst_222 : f32 to vector<8x8xf32>
    %339 = arith.divf %338, %337 : vector<8x8xf32>
    %cst_223 = arith.constant 1.000000e-03 : f32
    %340 = vector.broadcast %cst_223 : f32 to vector<8x8xf32>
    %341 = arith.addf %339, %340 : vector<8x8xf32>
    %342 = arith.mulf %341, %261 : vector<8x8xf32>
    %343 = arith.addf %342, %330 : vector<8x8xf32>
    %344 = math.log %341 : vector<8x8xf32>
    %345 = arith.addf %263, %344 : vector<8x8xf32>
    %346 = arith.truncf %343 : vector<8x8xf32> to vector<8x8xbf16>
    %c4_224 = arith.constant 4 : index
    %c0_225 = arith.constant 0 : index
    %c0_226 = arith.constant 0 : index
    %347 = vector.load %arg3[%c4_224, %c0_225, %c0_226] : memref<5x8x32xbf16, #tpu.memory_space<vmem>>, vector<1x8x32xbf16>
    %348 = vector.shape_cast %347 : vector<1x8x32xbf16> to vector<8x32xbf16>
    %cst_227 = arith.constant dense<0.000000e+00> : vector<8x32xf32>
    %349 = tpu.matmul %346, %348, %cst_227 {dimension_numbers = #tpu.dot_dimension_numbers<[1], [0], [0], [1], [0, 0, 1, 1], [], []>} : vector<8x8xbf16>, vector<8x32xbf16>, vector<8x32xf32> -> vector<8x32xf32>
    %350 = vector.extract_strided_slice %8 {offsets = [0, 128], sizes = [8, 32], strides = [1, 1]} : vector<8x160xf32> to vector<8x32xf32>
    %351 = arith.addf %349, %350 : vector<8x32xf32>
    %cst_228 = arith.constant 0.000000e+00 : f32
    %352 = vector.broadcast %cst_228 : f32 to vector<8x32xf32>
    %353 = arith.maximumf %351, %352 : vector<8x32xf32>
    %354 = arith.truncf %353 : vector<8x32xf32> to vector<8x32xbf16>
    %c8 = arith.constant 8 : index
    %c0_229 = arith.constant 0 : index
    %c0_230 = arith.constant 0 : index
    %355 = vector.load %arg6[%c8, %c0_229, %c0_230] : memref<10x32x32xbf16, #tpu.memory_space<vmem>>, vector<1x32x32xbf16>
    %356 = vector.shape_cast %355 : vector<1x32x32xbf16> to vector<32x32xbf16>
    %cst_231 = arith.constant dense<0.000000e+00> : vector<8x32xf32>
    %357 = tpu.matmul %354, %356, %cst_231 {dimension_numbers = #tpu.dot_dimension_numbers<[1], [0], [0], [1], [0, 0, 1, 1], [], []>} : vector<8x32xbf16>, vector<32x32xbf16>, vector<8x32xf32> -> vector<8x32xf32>
    %c8_232 = arith.constant 8 : index
    %c0_233 = arith.constant 0 : index
    %c0_234 = arith.constant 0 : index
    %358 = vector.load %arg7[%c8_232, %c0_233, %c0_234] : memref<10x1x32xf32, #tpu.memory_space<vmem>>, vector<1x1x32xf32>
    %359 = vector.shape_cast %358 : vector<1x1x32xf32> to vector<1x32xf32>
    %360 = vector.broadcast %359 : vector<1x32xf32> to vector<8x32xf32>
    %361 = arith.addf %357, %360 : vector<8x32xf32>
    %cst_235 = arith.constant 0.000000e+00 : f32
    %362 = vector.broadcast %cst_235 : f32 to vector<8x32xf32>
    %363 = arith.maximumf %361, %362 : vector<8x32xf32>
    %364 = arith.truncf %363 : vector<8x32xf32> to vector<8x32xbf16>
    %c8_236 = arith.constant 8 : index
    %c0_237 = arith.constant 0 : index
    %c0_238 = arith.constant 0 : index
    %365 = vector.load %arg8[%c8_236, %c0_237, %c0_238] : memref<10x32x32xbf16, #tpu.memory_space<vmem>>, vector<1x32x32xbf16>
    %366 = vector.shape_cast %365 : vector<1x32x32xbf16> to vector<32x32xbf16>
    %cst_239 = arith.constant dense<0.000000e+00> : vector<8x32xf32>
    %367 = tpu.matmul %364, %366, %cst_239 {dimension_numbers = #tpu.dot_dimension_numbers<[1], [0], [0], [1], [0, 0, 1, 1], [], []>} : vector<8x32xbf16>, vector<32x32xbf16>, vector<8x32xf32> -> vector<8x32xf32>
    %c8_240 = arith.constant 8 : index
    %c0_241 = arith.constant 0 : index
    %c0_242 = arith.constant 0 : index
    %368 = vector.load %arg9[%c8_240, %c0_241, %c0_242] : memref<10x1x32xf32, #tpu.memory_space<vmem>>, vector<1x1x32xf32>
    %369 = vector.shape_cast %368 : vector<1x1x32xf32> to vector<1x32xf32>
    %370 = vector.broadcast %369 : vector<1x32xf32> to vector<8x32xf32>
    %371 = arith.addf %367, %370 : vector<8x32xf32>
    %372 = vector.extract_strided_slice %16 {offsets = [0, 256], sizes = [8, 32], strides = [1, 1]} : vector<8x320xf32> to vector<8x32xf32>
    %373 = arith.mulf %371, %372 : vector<8x32xf32>
    %374 = arith.addf %351, %373 : vector<8x32xf32>
    %cst_243 = arith.constant 0.000000e+00 : f32
    %375 = vector.broadcast %cst_243 : f32 to vector<8x32xf32>
    %376 = arith.maximumf %374, %375 : vector<8x32xf32>
    %377 = arith.truncf %376 : vector<8x32xf32> to vector<8x32xbf16>
    %c9 = arith.constant 9 : index
    %c0_244 = arith.constant 0 : index
    %c0_245 = arith.constant 0 : index
    %378 = vector.load %arg6[%c9, %c0_244, %c0_245] : memref<10x32x32xbf16, #tpu.memory_space<vmem>>, vector<1x32x32xbf16>
    %379 = vector.shape_cast %378 : vector<1x32x32xbf16> to vector<32x32xbf16>
    %cst_246 = arith.constant dense<0.000000e+00> : vector<8x32xf32>
    %380 = tpu.matmul %377, %379, %cst_246 {dimension_numbers = #tpu.dot_dimension_numbers<[1], [0], [0], [1], [0, 0, 1, 1], [], []>} : vector<8x32xbf16>, vector<32x32xbf16>, vector<8x32xf32> -> vector<8x32xf32>
    %c9_247 = arith.constant 9 : index
    %c0_248 = arith.constant 0 : index
    %c0_249 = arith.constant 0 : index
    %381 = vector.load %arg7[%c9_247, %c0_248, %c0_249] : memref<10x1x32xf32, #tpu.memory_space<vmem>>, vector<1x1x32xf32>
    %382 = vector.shape_cast %381 : vector<1x1x32xf32> to vector<1x32xf32>
    %383 = vector.broadcast %382 : vector<1x32xf32> to vector<8x32xf32>
    %384 = arith.addf %380, %383 : vector<8x32xf32>
    %cst_250 = arith.constant 0.000000e+00 : f32
    %385 = vector.broadcast %cst_250 : f32 to vector<8x32xf32>
    %386 = arith.maximumf %384, %385 : vector<8x32xf32>
    %387 = arith.truncf %386 : vector<8x32xf32> to vector<8x32xbf16>
    %c9_251 = arith.constant 9 : index
    %c0_252 = arith.constant 0 : index
    %c0_253 = arith.constant 0 : index
    %388 = vector.load %arg8[%c9_251, %c0_252, %c0_253] : memref<10x32x32xbf16, #tpu.memory_space<vmem>>, vector<1x32x32xbf16>
    %389 = vector.shape_cast %388 : vector<1x32x32xbf16> to vector<32x32xbf16>
    %cst_254 = arith.constant dense<0.000000e+00> : vector<8x32xf32>
    %390 = tpu.matmul %387, %389, %cst_254 {dimension_numbers = #tpu.dot_dimension_numbers<[1], [0], [0], [1], [0, 0, 1, 1], [], []>} : vector<8x32xbf16>, vector<32x32xbf16>, vector<8x32xf32> -> vector<8x32xf32>
    %c9_255 = arith.constant 9 : index
    %c0_256 = arith.constant 0 : index
    %c0_257 = arith.constant 0 : index
    %391 = vector.load %arg9[%c9_255, %c0_256, %c0_257] : memref<10x1x32xf32, #tpu.memory_space<vmem>>, vector<1x1x32xf32>
    %392 = vector.shape_cast %391 : vector<1x1x32xf32> to vector<1x32xf32>
    %393 = vector.broadcast %392 : vector<1x32xf32> to vector<8x32xf32>
    %394 = arith.addf %390, %393 : vector<8x32xf32>
    %395 = vector.extract_strided_slice %16 {offsets = [0, 288], sizes = [8, 32], strides = [1, 1]} : vector<8x320xf32> to vector<8x32xf32>
    %396 = arith.mulf %394, %395 : vector<8x32xf32>
    %397 = arith.addf %374, %396 : vector<8x32xf32>
    %398 = arith.truncf %397 : vector<8x32xf32> to vector<8x32xbf16>
    %c4_258 = arith.constant 4 : index
    %c0_259 = arith.constant 0 : index
    %c0_260 = arith.constant 0 : index
    %399 = vector.load %arg10[%c4_258, %c0_259, %c0_260] : memref<5x32x8xbf16, #tpu.memory_space<vmem>>, vector<1x32x8xbf16>
    %400 = vector.shape_cast %399 : vector<1x32x8xbf16> to vector<32x8xbf16>
    %cst_261 = arith.constant dense<0.000000e+00> : vector<8x8xf32>
    %401 = tpu.matmul %398, %400, %cst_261 {dimension_numbers = #tpu.dot_dimension_numbers<[1], [0], [0], [1], [0, 0, 1, 1], [], []>} : vector<8x32xbf16>, vector<32x8xbf16>, vector<8x8xf32> -> vector<8x8xf32>
    %c4_262 = arith.constant 4 : index
    %c0_263 = arith.constant 0 : index
    %c0_264 = arith.constant 0 : index
    %402 = vector.load %arg11[%c4_262, %c0_263, %c0_264] : memref<5x1x8xf32, #tpu.memory_space<vmem>>, vector<1x1x8xf32>
    %403 = vector.shape_cast %402 : vector<1x1x8xf32> to vector<1x8xf32>
    %404 = vector.broadcast %403 : vector<1x8xf32> to vector<8x8xf32>
    %405 = arith.addf %401, %404 : vector<8x8xf32>
    %c4_265 = arith.constant 4 : index
    %c0_266 = arith.constant 0 : index
    %c0_267 = arith.constant 0 : index
    %406 = vector.load %arg12[%c4_265, %c0_266, %c0_267] : memref<5x32x8xbf16, #tpu.memory_space<vmem>>, vector<1x32x8xbf16>
    %407 = vector.shape_cast %406 : vector<1x32x8xbf16> to vector<32x8xbf16>
    %cst_268 = arith.constant dense<0.000000e+00> : vector<8x8xf32>
    %408 = tpu.matmul %398, %407, %cst_268 {dimension_numbers = #tpu.dot_dimension_numbers<[1], [0], [0], [1], [0, 0, 1, 1], [], []>} : vector<8x32xbf16>, vector<32x8xbf16>, vector<8x8xf32> -> vector<8x8xf32>
    %c4_269 = arith.constant 4 : index
    %c0_270 = arith.constant 0 : index
    %c0_271 = arith.constant 0 : index
    %409 = vector.load %arg13[%c4_269, %c0_270, %c0_271] : memref<5x1x8xf32, #tpu.memory_space<vmem>>, vector<1x1x8xf32>
    %410 = vector.shape_cast %409 : vector<1x1x8xf32> to vector<1x8xf32>
    %411 = vector.broadcast %410 : vector<1x8xf32> to vector<8x8xf32>
    %412 = arith.addf %408, %411 : vector<8x8xf32>
    %cst_272 = arith.constant 2.000000e+00 : f32
    %413 = vector.broadcast %cst_272 : f32 to vector<8x8xf32>
    %414 = arith.addf %405, %413 : vector<8x8xf32>
    %cst_273 = arith.constant 0.000000e+00 : f32
    %415 = vector.broadcast %cst_273 : f32 to vector<8x8xf32>
    %416 = arith.subf %415, %414 : vector<8x8xf32>
    %417 = math.exp %416 : vector<8x8xf32>
    %cst_274 = arith.constant 1.000000e+00 : f32
    %418 = vector.broadcast %cst_274 : f32 to vector<8x8xf32>
    %419 = arith.addf %418, %417 : vector<8x8xf32>
    %cst_275 = arith.constant 1.000000e+00 : f32
    %420 = vector.broadcast %cst_275 : f32 to vector<8x8xf32>
    %421 = arith.divf %420, %419 : vector<8x8xf32>
    %cst_276 = arith.constant 1.000000e-03 : f32
    %422 = vector.broadcast %cst_276 : f32 to vector<8x8xf32>
    %423 = arith.addf %421, %422 : vector<8x8xf32>
    %424 = arith.mulf %423, %343 : vector<8x8xf32>
    %425 = arith.addf %424, %412 : vector<8x8xf32>
    %426 = math.log %423 : vector<8x8xf32>
    %427 = arith.addf %345, %426 : vector<8x8xf32>
    %cst_277 = arith.constant 5.000000e-01 : f32
    %428 = vector.broadcast %cst_277 : f32 to vector<8x8xf32>
    %429 = arith.mulf %428, %425 : vector<8x8xf32>
    %430 = arith.mulf %429, %425 : vector<8x8xf32>
    %431 = arith.subf %427, %430 : vector<8x8xf32>
    %cst_278 = arith.constant dense<0.000000e+00> : vector<8xf32>
    %432 = vector.multi_reduction <add>, %431, %cst_278 [1] : vector<8x8xf32> to vector<8xf32>
    %433 = vector.shape_cast %432 : vector<8xf32> to vector<8x1xf32>
    %cst_279 = arith.constant 7.35150814 : f32
    %434 = vector.broadcast %cst_279 : f32 to vector<8x1xf32>
    %435 = arith.subf %433, %434 : vector<8x1xf32>
    %c0_280 = arith.constant 0 : index
    %c0_281 = arith.constant 0 : index
    %436 = vector.load %arg14[%c0_280, %c0_281] : memref<8x1xf32, #tpu.memory_space<vmem>>, vector<8x1xf32>
    tpu.vector_store %arg14[%c0_280, %c0_281], %435 {strides = array<i32>} : memref<8x1xf32, #tpu.memory_space<vmem>>, vector<8x1xf32>,
    return
  }
  func.func @transform_0(%arg0: i32) -> (i32, i32) {
    %c0_i32 = arith.constant 0 : i32
    %c0_i32_0 = arith.constant 0 : i32
    return %arg0, %c0_i32 : i32, i32
  }
  func.func @transform_1(%arg0: i32) -> (i32, i32) {
    %c0_i32 = arith.constant 0 : i32
    %c0_i32_0 = arith.constant 0 : i32
    return %arg0, %c0_i32 : i32, i32
  }
  func.func @transform_2(%arg0: i32) -> (i32, i32, i32) {
    %c0_i32 = arith.constant 0 : i32
    %c0_i32_0 = arith.constant 0 : i32
    %c0_i32_1 = arith.constant 0 : i32
    %c0_i32_2 = arith.constant 0 : i32
    return %c0_i32, %c0_i32_0, %c0_i32_1 : i32, i32, i32
  }
  func.func @transform_3(%arg0: i32) -> (i32, i32) {
    %c0_i32 = arith.constant 0 : i32
    %c0_i32_0 = arith.constant 0 : i32
    %c0_i32_1 = arith.constant 0 : i32
    return %c0_i32, %c0_i32_0 : i32, i32
  }
  func.func @transform_4(%arg0: i32) -> (i32, i32) {
    %c0_i32 = arith.constant 0 : i32
    %c0_i32_0 = arith.constant 0 : i32
    %c0_i32_1 = arith.constant 0 : i32
    return %c0_i32, %c0_i32_0 : i32, i32
  }
  func.func @transform_5(%arg0: i32) -> (i32, i32, i32) {
    %c0_i32 = arith.constant 0 : i32
    %c0_i32_0 = arith.constant 0 : i32
    %c0_i32_1 = arith.constant 0 : i32
    %c0_i32_2 = arith.constant 0 : i32
    return %c0_i32, %c0_i32_0, %c0_i32_1 : i32, i32, i32
  }
  func.func @transform_6(%arg0: i32) -> (i32, i32, i32) {
    %c0_i32 = arith.constant 0 : i32
    %c0_i32_0 = arith.constant 0 : i32
    %c0_i32_1 = arith.constant 0 : i32
    %c0_i32_2 = arith.constant 0 : i32
    return %c0_i32, %c0_i32_0, %c0_i32_1 : i32, i32, i32
  }
  func.func @transform_7(%arg0: i32) -> (i32, i32, i32) {
    %c0_i32 = arith.constant 0 : i32
    %c0_i32_0 = arith.constant 0 : i32
    %c0_i32_1 = arith.constant 0 : i32
    %c0_i32_2 = arith.constant 0 : i32
    return %c0_i32, %c0_i32_0, %c0_i32_1 : i32, i32, i32
  }
  func.func @transform_8(%arg0: i32) -> (i32, i32, i32) {
    %c0_i32 = arith.constant 0 : i32
    %c0_i32_0 = arith.constant 0 : i32
    %c0_i32_1 = arith.constant 0 : i32
    %c0_i32_2 = arith.constant 0 : i32
    return %c0_i32, %c0_i32_0, %c0_i32_1 : i32, i32, i32
  }
  func.func @transform_9(%arg0: i32) -> (i32, i32, i32) {
    %c0_i32 = arith.constant 0 : i32
    %c0_i32_0 = arith.constant 0 : i32
    %c0_i32_1 = arith.constant 0 : i32
    %c0_i32_2 = arith.constant 0 : i32
    return %c0_i32, %c0_i32_0, %c0_i32_1 : i32, i32, i32
  }
  func.func @transform_10(%arg0: i32) -> (i32, i32, i32) {
    %c0_i32 = arith.constant 0 : i32
    %c0_i32_0 = arith.constant 0 : i32
    %c0_i32_1 = arith.constant 0 : i32
    %c0_i32_2 = arith.constant 0 : i32
    return %c0_i32, %c0_i32_0, %c0_i32_1 : i32, i32, i32
  }
  func.func @transform_11(%arg0: i32) -> (i32, i32, i32) {
    %c0_i32 = arith.constant 0 : i32
    %c0_i32_0 = arith.constant 0 : i32
    %c0_i32_1 = arith.constant 0 : i32
    %c0_i32_2 = arith.constant 0 : i32
    return %c0_i32, %c0_i32_0, %c0_i32_1 : i32, i32, i32
  }
  func.func @transform_12(%arg0: i32) -> (i32, i32, i32) {
    %c0_i32 = arith.constant 0 : i32
    %c0_i32_0 = arith.constant 0 : i32
    %c0_i32_1 = arith.constant 0 : i32
    %c0_i32_2 = arith.constant 0 : i32
    return %c0_i32, %c0_i32_0, %c0_i32_1 : i32, i32, i32
  }
  func.func @transform_13(%arg0: i32) -> (i32, i32) {
    %c0_i32 = arith.constant 0 : i32
    %c0_i32_0 = arith.constant 0 : i32
    return %arg0, %c0_i32 : i32, i32
  }
}

</mosaic_0001>

<llo_original>
// kernel: tpu_custom_call.1
$region0: #{tpu_custom_call.1}
  #allocation0 [shape = 'u32[]', space=smem, size = 0x4, offset = 0x4, fixed_abs, tag = 'smem constant byte address 0x4 - core index']
  #allocation1 [shape = 'u32[144,128]{1,0:T(1,128)}', space=vmem, size = 0x12000, scoped, tag = 'internal scratch']
  %s0 = inlined_call_operand.hbm [shape: f32[8,8], index: 0, kind: input, shape index: {}]
  %s1 = inlined_call_operand.hbm [shape: f32[8,16], index: 1, kind: input, shape index: {}]
  %s2 = inlined_call_operand.vmem [shape: bf16[5,8,32], index: 2, kind: input, shape index: {}]
  %s3 = inlined_call_operand.vmem [shape: bf16[16,480], index: 3, kind: input, shape index: {}]
  %s4 = inlined_call_operand.hbm [shape: f32[1,480], index: 4, kind: input, shape index: {}]
  %s5 = inlined_call_operand.vmem [shape: bf16[10,32,32], index: 5, kind: input, shape index: {}]
  %s6 = inlined_call_operand.hbm [shape: f32[10,1,32], index: 6, kind: input, shape index: {}]
  %s7 = inlined_call_operand.hbm [shape: bf16[10,32,32], index: 7, kind: input, shape index: {}]
  %s8 = inlined_call_operand.hbm [shape: f32[10,1,32], index: 8, kind: input, shape index: {}]
  %s9 = inlined_call_operand.vmem [shape: bf16[5,32,8], index: 9, kind: input, shape index: {}]
  %s10 = inlined_call_operand.vmem [shape: f32[5,1,8], index: 10, kind: input, shape index: {}]
  %s11 = inlined_call_operand.vmem [shape: bf16[5,32,8], index: 11, kind: input, shape index: {}]
  %s12 = inlined_call_operand.vmem [shape: f32[5,1,8], index: 12, kind: input, shape index: {}]
  %s13 = inlined_call_operand.vmem [shape: f32[8,1], index: 13, kind: output, shape index: {}]
  %s14 = sld [smem:[#allocation0]]
  $region86: #{tpu_custom_call.1} parent=0
    _
  %s16 = ssub.s32 1, %s14
  %s17 = scalar_select 0, %s16, %s14
  $region1: #{tpu_custom_call.1} parent=0
    #allocation2 [shape = 'u8[4096]{0}', space=vmem, size = 0x1000, scoped, tag = 'input window, operand 0, single buffered']
    #allocation3 [shape = 's32[1]{0}', space=sflag, size = 0x4, scoped, tag = 'scoped memory for tpu_custom_call.1']
    #allocation4 [shape = 'u8[4096]{0}', space=vmem, size = 0x1000, scoped, tag = 'input window, operand 1, single buffered']
    #allocation5 [shape = 's32[1]{0}', space=sflag, size = 0x4, scoped, tag = 'scoped memory for tpu_custom_call.1']
    #allocation6 [shape = 'u8[2048]{0}', space=vmem, size = 0x800, scoped, tag = 'input window, operand 4, single buffered']
    #allocation7 [shape = 'u8[5120]{0}', space=vmem, size = 0x1400, scoped, tag = 'input window, operand 6, single buffered']
    #allocation8 [shape = 's32[1]{0}', space=sflag, size = 0x4, scoped, tag = 'scoped memory for tpu_custom_call.1']
    #allocation9 [shape = 'u8[81920]{0}', space=vmem, size = 0x14000, scoped, tag = 'input window, operand 7, single buffered']
    #allocation10 [shape = 'u8[5120]{0}', space=vmem, size = 0x1400, scoped, tag = 'input window, operand 8, single buffered']
    #allocation11 [shape = 's32[1]{0}', space=sflag, size = 0x4, scoped, tag = 'scoped memory for tpu_custom_call.1']
    %18 = vsyncpa [#allocation3], 0
    %19 = vsyncpa [#allocation5], 0
    %20 = vsyncpa [#allocation8], 0
    %21 = vsyncpa [#allocation11], 0
    // Predicated region
    $region2: #{tpu_custom_call.1} parent=1 // pred_check
      _
    $region3: #{tpu_custom_call.1} parent=1 // pred_check_branch
      %23 = sbr.rel (0) target = $region5
    $region4: #{tpu_custom_call.1} parent=1 // pred_region
      %s25 = ssub.s32 128, 128
      %26 = vsyncadd [#allocation3], %s25
      %s28 = sshll.u32 [#allocation2], 4
      %s29 = int_to_ptr.vmem [resolvable:$true] %s28
      %31 = dma.hbm_to_vmem [thread:$0]  %s0, 128, %s29, [#allocation3]
    $region5: #{tpu_custom_call.1} parent=1 // pred_fallthru
      _
    // Predicated region
    $region6: #{tpu_custom_call.1} parent=1 // pred_check
      _
    $region7: #{tpu_custom_call.1} parent=1 // pred_check_branch
      %33 = sbr.rel (0) target = $region9
    $region8: #{tpu_custom_call.1} parent=1 // pred_region
      %s35 = ssub.s32 128, 128
      %36 = vsyncadd [#allocation5], %s35
      %s38 = sshll.u32 [#allocation4], 4
      %s39 = int_to_ptr.vmem [resolvable:$true] %s38
      %41 = dma.hbm_to_vmem [thread:$0]  %s1, 128, %s39, [#allocation5]
    $region9: #{tpu_custom_call.1} parent=1 // pred_fallthru
      _
    // Predicated region
    $region10: #{tpu_custom_call.1} parent=1 // pred_check
      _
    $region11: #{tpu_custom_call.1} parent=1 // pred_check_branch
      %43 = sbr.rel (0) target = $region13
    $region12: #{tpu_custom_call.1} parent=1 // pred_region
      _
    $region13: #{tpu_custom_call.1} parent=1 // pred_fallthru
      _
    // Predicated region
    $region14: #{tpu_custom_call.1} parent=1 // pred_check
      _
    $region15: #{tpu_custom_call.1} parent=1 // pred_check_branch
      %45 = sbr.rel (0) target = $region17
    $region16: #{tpu_custom_call.1} parent=1 // pred_region
      _
    $region17: #{tpu_custom_call.1} parent=1 // pred_fallthru
      _
    // Predicated region
    $region18: #{tpu_custom_call.1} parent=1 // pred_check
      _
    $region19: #{tpu_custom_call.1} parent=1 // pred_check_branch
      %47 = sbr.rel (0) target = $region21
    $region20: #{tpu_custom_call.1} parent=1 // pred_region
      %s49 = ssub.s32 64, 64
      %50 = vsyncadd [#allocation5], %s49
      %s52 = sshll.u32 [#allocation6], 4
      %s53 = int_to_ptr.vmem [resolvable:$true] %s52
      %55 = dma.hbm_to_vmem [thread:$0]  %s4, 64, %s53, [#allocation5]
    $region21: #{tpu_custom_call.1} parent=1 // pred_fallthru
      _
    // Predicated region
    $region22: #{tpu_custom_call.1} parent=1 // pred_check
      _
    $region23: #{tpu_custom_call.1} parent=1 // pred_check_branch
      %57 = sbr.rel (0) target = $region25
    $region24: #{tpu_custom_call.1} parent=1 // pred_region
      _
    $region25: #{tpu_custom_call.1} parent=1 // pred_fallthru
      _
    // Predicated region
    $region26: #{tpu_custom_call.1} parent=1 // pred_check
      _
    $region27: #{tpu_custom_call.1} parent=1 // pred_check_branch
      %59 = sbr.rel (0) target = $region29
    $region28: #{tpu_custom_call.1} parent=1 // pred_region
      %s61 = ssub.s32 160, 160
      %62 = vsyncadd [#allocation8], %s61
      %s63 = sshll.u32 [#allocation7], 4
      %s64 = int_to_ptr.vmem [resolvable:$true] %s63
      %69 = dma.hbm_to_vmem [thread:$0]  %s6, 160, %s64, [#allocation8], 16, 16, 1
    $region29: #{tpu_custom_call.1} parent=1 // pred_fallthru
      _
    // Predicated region
    $region30: #{tpu_custom_call.1} parent=1 // pred_check
      _
    $region31: #{tpu_custom_call.1} parent=1 // pred_check_branch
      %71 = sbr.rel (0) target = $region33
    $region32: #{tpu_custom_call.1} parent=1 // pred_region
      %s73 = ssub.s32 2560, 2560
      %74 = vsyncadd [#allocation8], %s73
      %s75 = sshll.u32 [#allocation9], 4
      %s76 = int_to_ptr.vmem [resolvable:$true] %s75
      %81 = dma.hbm_to_vmem [thread:$0]  %s7, 2560, %s76, [#allocation8], 64, 64, 4
    $region33: #{tpu_custom_call.1} parent=1 // pred_fallthru
      _
    // Predicated region
    $region34: #{tpu_custom_call.1} parent=1 // pred_check
      _
    $region35: #{tpu_custom_call.1} parent=1 // pred_check_branch
      %83 = sbr.rel (0) target = $region37
    $region36: #{tpu_custom_call.1} parent=1 // pred_region
      %s85 = ssub.s32 160, 160
      %86 = vsyncadd [#allocation11], %s85
      %s87 = sshll.u32 [#allocation10], 4
      %s88 = int_to_ptr.vmem [resolvable:$true] %s87
      %93 = dma.hbm_to_vmem [thread:$0]  %s8, 160, %s88, [#allocation11], 16, 16, 1
    $region37: #{tpu_custom_call.1} parent=1 // pred_fallthru
      _
    // Predicated region
    $region38: #{tpu_custom_call.1} parent=1 // pred_check
      _
    $region39: #{tpu_custom_call.1} parent=1 // pred_check_branch
      %95 = sbr.rel (0) target = $region41
    $region40: #{tpu_custom_call.1} parent=1 // pred_region
      _
    $region41: #{tpu_custom_call.1} parent=1 // pred_fallthru
      _
    // Predicated region
    $region42: #{tpu_custom_call.1} parent=1 // pred_check
      _
    $region43: #{tpu_custom_call.1} parent=1 // pred_check_branch
      %97 = sbr.rel (0) target = $region45
    $region44: #{tpu_custom_call.1} parent=1 // pred_region
      _
    $region45: #{tpu_custom_call.1} parent=1 // pred_fallthru
      _
    // Predicated region
    $region46: #{tpu_custom_call.1} parent=1 // pred_check
      _
    $region47: #{tpu_custom_call.1} parent=1 // pred_check_branch
      %99 = sbr.rel (0) target = $region49
    $region48: #{tpu_custom_call.1} parent=1 // pred_region
      _
    $region49: #{tpu_custom_call.1} parent=1 // pred_fallthru
      _
    // Predicated region
    $region50: #{tpu_custom_call.1} parent=1 // pred_check
      _
    $region51: #{tpu_custom_call.1} parent=1 // pred_check_branch
      %101 = sbr.rel (0) target = $region53
    $region52: #{tpu_custom_call.1} parent=1 // pred_region
      _
    $region53: #{tpu_custom_call.1} parent=1 // pred_fallthru
      _
    // Predicated region
    $region54: #{tpu_custom_call.1} parent=1 // pred_check
      _
    $region55: #{tpu_custom_call.1} parent=1 // pred_check_branch
      %103 = sbr.rel (0) target = $region57
    $region56: #{tpu_custom_call.1} parent=1 // pred_region
      %104 = dma.done [#allocation3], 128
    $region57: #{tpu_custom_call.1} parent=1 // pred_fallthru
      _
    // Predicated region
    $region58: #{tpu_custom_call.1} parent=1 // pred_check
      _
    $region59: #{tpu_custom_call.1} parent=1 // pred_check_branch
      %106 = sbr.rel (0) target = $region61
    $region60: #{tpu_custom_call.1} parent=1 // pred_region
      %107 = dma.done [#allocation5], 128
    $region61: #{tpu_custom_call.1} parent=1 // pred_fallthru
      _
    // Predicated region
    $region62: #{tpu_custom_call.1} parent=1 // pred_check
      _
    $region63: #{tpu_custom_call.1} parent=1 // pred_check_branch
      %109 = sbr.rel (0) target = $region65
    $region64: #{tpu_custom_call.1} parent=1 // pred_region
      %110 = dma.done [#allocation5], 64
    $region65: #{tpu_custom_call.1} parent=1 // pred_fallthru
      _
    // Predicated region
    $region66: #{tpu_custom_call.1} parent=1 // pred_check
      _
    $region67: #{tpu_custom_call.1} parent=1 // pred_check_branch
      %112 = sbr.rel (0) target = $region69
    $region68: #{tpu_custom_call.1} parent=1 // pred_region
      %113 = dma.done [#allocation8], 160
    $region69: #{tpu_custom_call.1} parent=1 // pred_fallthru
      _
    // Predicated region
    $region70: #{tpu_custom_call.1} parent=1 // pred_check
      _
    $region71: #{tpu_custom_call.1} parent=1 // pred_check_branch
      %115 = sbr.rel (0) target = $region73
    $region72: #{tpu_custom_call.1} parent=1 // pred_region
      %116 = dma.done [#allocation8], 2560
    $region73: #{tpu_custom_call.1} parent=1 // pred_fallthru
      _
    // Predicated region
    $region74: #{tpu_custom_call.1} parent=1 // pred_check
      _
    $region75: #{tpu_custom_call.1} parent=1 // pred_check_branch
      %118 = sbr.rel (0) target = $region77
    $region76: #{tpu_custom_call.1} parent=1 // pred_region
      %119 = dma.done [#allocation11], 160
    $region77: #{tpu_custom_call.1} parent=1 // pred_fallthru
      _
    %v121 = vld [vmem:[#allocation2] sm:$0xff]
    %v122 = vld [vmem:[#allocation4] sm:$0xff]
    %v123 = vpack.c.bf16 %v122, %v122
    %v124 = vld [vmem:[%s3] sm:$0xff]
    %v125 = vld [vmem:[%s3 + $0x8] sm:$0xff]
    %v126 = vld [vmem:[%s3 + $0x10] sm:$0xff]
    %v127 = vld [vmem:[%s3 + $0x18] sm:$0xff]
    %v128 = vld [vmem:[#allocation6] sm:$0xf]
    %v130 = vlaneseq
    %v131 = vshrl.u32 %v130, 7
    %v132 = vsub.s32 0, %v131
    %v133 = vrot.slane %v128, %v132
    %v134 = vlaneseq
    %v135 = vshrl.u32 %v134, 7
    %v136 = vsub.s32 1, %v135
    %v137 = vrot.slane %v128, %v136
    %v138 = vlaneseq
    %v139 = vshrl.u32 %v138, 7
    %v140 = vsub.s32 2, %v139
    %v141 = vrot.slane %v128, %v140
    %v142 = vlaneseq
    %v143 = vshrl.u32 %v142, 7
    %v144 = vsub.s32 3, %v143
    %v145 = vrot.slane %v128, %v144
    %v154 = vunpack.c.l.b16 %v124
    %v155 = vunpack.c.h.b16 %v124
    %v156 = vunpack.c.l.b16 %v125
    %v157 = vunpack.c.h.b16 %v125
    %v158 = vunpack.c.l.b16 %v126
    %v159 = vunpack.c.h.b16 %v126
    %v160 = vunpack.c.l.b16 %v127
    %v161 = vunpack.c.h.b16 %v127
    %v162 = vpack.c.b16 %v158, %v154
    %v163 = vpack.c.b16 %v159, %v155
    %v164 = vpack.c.b16 %v160, %v156
    %v165 = vpack.c.b16 %v161, %v157
    %vm170 = vcmask 130048
    %v172 = vsel %vm170, %v123, 0
    %174 = vmatprep.subr.bf16.mxu0 %v163
    %175 = vmatpush1.bf16.msra.mxu0 %v162
    %176 = vmatprep.subr.bf16.mxu0 0
    %177 = vmatpush1.bf16.msra.mxu0 0
    %178 = vmatprep.subr.bf16.mxu0 0
    %179 = vmatpush1.bf16.msra.mxu0 0
    %180 = vmatprep.subr.bf16.mxu0 0
    %181 = vmatpush1.bf16.msra.mxu0 0
    %182 = vmatprep.subr.bf16.mxu0 0
    %183 = vmatpush1.bf16.msra.mxu0 0
    %184 = vmatprep.subr.bf16.mxu0 0
    %185 = vmatpush1.bf16.msra.mxu0 0
    %186 = vmatprep.subr.bf16.mxu0 0
    %187 = vmatpush1.bf16.msra.mxu0 0
    %188 = vmatprep.subr.bf16.mxu0 0
    %189 = vmatpush1.bf16.msra.mxu0 0
    %190 = vmatprep.subr.bf16.mxu0 0
    %191 = vmatpush1.bf16.msra.mxu0 0
    %192 = vmatprep.subr.bf16.mxu0 0
    %193 = vmatpush1.bf16.msra.mxu0 0
    %194 = vmatprep.subr.bf16.mxu0 0
    %195 = vmatpush1.bf16.msra.mxu0 0
    %196 = vmatprep.subr.bf16.mxu0 0
    %197 = vmatpush1.bf16.msra.mxu0 0
    %198 = vmatprep.subr.bf16.mxu0 0
    %199 = vmatpush1.bf16.msra.mxu0 0
    %200 = vmatprep.subr.bf16.mxu0 0
    %201 = vmatpush1.bf16.msra.mxu0 0
    %202 = vmatprep.subr.bf16.mxu0 0
    %203 = vmatpush1.bf16.msra.mxu0 0
    %204 = vmatprep.subr.bf16.mxu0 0
    %205 = vmatpush1.bf16.msra.mxu0 0
    %206 = vmatprep.mubr.bf16.mxu0 0
    %207 = vmatmul.mubr.bf16.gmra.mrb[0].mxu0 %v172
    %v208 = vpop.f32.mrb[0].mxu0
    %v209 = vadd.f32 %v133, %v208
    %v210 = vpop.f32.mrb[0].mxu0
    %v211 = vadd.f32 %v137, %v210
    %v212 = vpop.f32.mrb[0].mxu0
    %v213 = vpop.f32.mrb[0].mxu0
    %214 = vdwg.mxu0
    %215 = vmatprep.subr.bf16.mxu0 %v165
    %216 = vmatpush1.bf16.msra.mxu0 %v164
    %217 = vmatprep.subr.bf16.mxu0 0
    %218 = vmatpush1.bf16.msra.mxu0 0
    %219 = vmatprep.subr.bf16.mxu0 0
    %220 = vmatpush1.bf16.msra.mxu0 0
    %221 = vmatprep.subr.bf16.mxu0 0
    %222 = vmatpush1.bf16.msra.mxu0 0
    %223 = vmatprep.subr.bf16.mxu0 0
    %224 = vmatpush1.bf16.msra.mxu0 0
    %225 = vmatprep.subr.bf16.mxu0 0
    %226 = vmatpush1.bf16.msra.mxu0 0
    %227 = vmatprep.subr.bf16.mxu0 0
    %228 = vmatpush1.bf16.msra.mxu0 0
    %229 = vmatprep.subr.bf16.mxu0 0
    %230 = vmatpush1.bf16.msra.mxu0 0
    %231 = vmatprep.subr.bf16.mxu0 0
    %232 = vmatpush1.bf16.msra.mxu0 0
    %233 = vmatprep.subr.bf16.mxu0 0
    %234 = vmatpush1.bf16.msra.mxu0 0
    %235 = vmatprep.subr.bf16.mxu0 0
    %236 = vmatpush1.bf16.msra.mxu0 0
    %237 = vmatprep.subr.bf16.mxu0 0
    %238 = vmatpush1.bf16.msra.mxu0 0
    %239 = vmatprep.subr.bf16.mxu0 0
    %240 = vmatpush1.bf16.msra.mxu0 0
    %241 = vmatprep.subr.bf16.mxu0 0
    %242 = vmatpush1.bf16.msra.mxu0 0
    %243 = vmatprep.subr.bf16.mxu0 0
    %244 = vmatpush1.bf16.msra.mxu0 0
    %245 = vmatprep.subr.bf16.mxu0 0
    %246 = vmatpush1.bf16.msra.mxu0 0
    %247 = vmatprep.mubr.bf16.mxu0 0
    %248 = vmatmul.mubr.bf16.gmra.mrb[0].mxu0 %v172
    %v249 = vpop.f32.mrb[0].mxu0
    %v250 = vadd.f32 %v141, %v249
    %v251 = vpop.f32.mrb[0].mxu0
    %v252 = vadd.f32 %v145, %v251
    %v253 = vpop.f32.mrb[0].mxu0
    %v254 = vpop.f32.mrb[0].mxu0
    %255 = vdwg.mxu0
    %v256 = vsub.f32 0.0, %v211
    %v257 = vsub.f32 0.0, %v250
    %v258 = vsub.f32 0.0, %v252
    %v259 = vmul.f32 %v256, 1.442695
    %v260 = vpow.pop %v259
    %v261 = vmul.f32 %v257, 1.442695
    %v262 = vpow.pop %v261
    %v263 = vmul.f32 %v258, 1.442695
    %v264 = vpow.pop %v263
    %v265 = vadd.f32 %v260, 1.0
    %v266 = vadd.f32 %v262, 1.0
    %v267 = vadd.f32 %v264, 1.0
    %v268 = vrcp.pop %v265
    %v269 = vmul.f32 1.0, %v268
    %v270 = vrcp.pop %v266
    %v271 = vmul.f32 1.0, %v270
    %v272 = vrcp.pop %v267
    %v273 = vmul.f32 1.0, %v272
    %v274 = vpack.c.bf16 %v121, %v121
    %v275 = vld [vmem:[%s2] sm:$0xf]
    %vm276 = vcmask 64512
    %v278 = vsel %vm276, %v274, 0
    %vm280 = vcmask 1043456
    %v282 = vsel %vm280, %v275, 0
    %284 = vmatprep.subr.bf16.mxu0 0
    %285 = vmatpush1.bf16.msra.mxu0 %v282
    %286 = vmatprep.subr.bf16.mxu0 0
    %287 = vmatpush1.bf16.msra.mxu0 0
    %288 = vmatprep.subr.bf16.mxu0 0
    %289 = vmatpush1.bf16.msra.mxu0 0
    %290 = vmatprep.subr.bf16.mxu0 0
    %291 = vmatpush1.bf16.msra.mxu0 0
    %292 = vmatprep.subr.bf16.mxu0 0
    %293 = vmatpush1.bf16.msra.mxu0 0
    %294 = vmatprep.subr.bf16.mxu0 0
    %295 = vmatpush1.bf16.msra.mxu0 0
    %296 = vmatprep.subr.bf16.mxu0 0
    %297 = vmatpush1.bf16.msra.mxu0 0
    %298 = vmatprep.subr.bf16.mxu0 0
    %299 = vmatpush1.bf16.msra.mxu0 0
    %300 = vmatprep.subr.bf16.mxu0 0
    %301 = vmatpush1.bf16.msra.mxu0 0
    %302 = vmatprep.subr.bf16.mxu0 0
    %303 = vmatpush1.bf16.msra.mxu0 0
    %304 = vmatprep.subr.bf16.mxu0 0
    %305 = vmatpush1.bf16.msra.mxu0 0
    %306 = vmatprep.subr.bf16.mxu0 0
    %307 = vmatpush1.bf16.msra.mxu0 0
    %308 = vmatprep.subr.bf16.mxu0 0
    %309 = vmatpush1.bf16.msra.mxu0 0
    %310 = vmatprep.subr.bf16.mxu0 0
    %311 = vmatpush1.bf16.msra.mxu0 0
    %312 = vmatprep.subr.bf16.mxu0 0
    %313 = vmatpush1.bf16.msra.mxu0 0
    %314 = vmatprep.subr.bf16.mxu0 0
    %315 = vmatpush1.bf16.msra.mxu0 0
    %316 = vmatprep.mubr.bf16.mxu0 0
    %317 = vmatmul.mubr.bf16.gmra.mrb[0].mxu0 %v278
    %v318 = vpop.f32.mrb[0].mxu0
    %v319 = vadd.f32 %v209, %v318
    %v320 = vpop.f32.mrb[0].mxu0
    %v321 = vpop.f32.mrb[0].mxu0
    %v322 = vpop.f32.mrb[0].mxu0
    %323 = vdwg.mxu0
    %v324 = vmax.f32 %v319, 0.0
    %v325 = vpack.c.bf16 %v324, %v324
    %v326 = vld [vmem:[%s5] sm:$0xf]
    %v327 = vld [vmem:[%s5 + $0x4] sm:$0xf]
    %v328 = vld [vmem:[%s5 + $0x8] sm:$0xf]
    %v329 = vld [vmem:[%s5 + $0xc] sm:$0xf]
    %v330 = vld [vmem:[#allocation7] sm:$0x1]
    %v332 = vlaneseq
    %v333 = vshrl.u32 %v332, 7
    %v334 = vsub.s32 0, %v333
    %v335 = vrot.slane %v330, %v334
    %v341 = vunpack.c.l.b16 %v326
    %v342 = vunpack.c.l.b16 %v327
    %v343 = vunpack.c.l.b16 %v328
    %v344 = vunpack.c.l.b16 %v329
    %v345 = vpack.c.b16 %v342, %v341
    %v346 = vpack.c.b16 %v344, %v343
    %vm349 = vcmask 261120
    %v351 = vsel %vm349, %v325, 0
    %353 = vmatprep.subr.bf16.mxu0 0
    %354 = vmatpush1.bf16.msra.mxu0 %v345
    %355 = vmatprep.subr.bf16.mxu0 0
    %356 = vmatpush1.bf16.msra.mxu0 %v346
    %357 = vmatprep.subr.bf16.mxu0 0
    %358 = vmatpush1.bf16.msra.mxu0 0
    %359 = vmatprep.subr.bf16.mxu0 0
    %360 = vmatpush1.bf16.msra.mxu0 0
    %361 = vmatprep.subr.bf16.mxu0 0
    %362 = vmatpush1.bf16.msra.mxu0 0
    %363 = vmatprep.subr.bf16.mxu0 0
    %364 = vmatpush1.bf16.msra.mxu0 0
    %365 = vmatprep.subr.bf16.mxu0 0
    %366 = vmatpush1.bf16.msra.mxu0 0
    %367 = vmatprep.subr.bf16.mxu0 0
    %368 = vmatpush1.bf16.msra.mxu0 0
    %369 = vmatprep.subr.bf16.mxu0 0
    %370 = vmatpush1.bf16.msra.mxu0 0
    %371 = vmatprep.subr.bf16.mxu0 0
    %372 = vmatpush1.bf16.msra.mxu0 0
    %373 = vmatprep.subr.bf16.mxu0 0
    %374 = vmatpush1.bf16.msra.mxu0 0
    %375 = vmatprep.subr.bf16.mxu0 0
    %376 = vmatpush1.bf16.msra.mxu0 0
    %377 = vmatprep.subr.bf16.mxu0 0
    %378 = vmatpush1.bf16.msra.mxu0 0
    %379 = vmatprep.subr.bf16.mxu0 0
    %380 = vmatpush1.bf16.msra.mxu0 0
    %381 = vmatprep.subr.bf16.mxu0 0
    %382 = vmatpush1.bf16.msra.mxu0 0
    %383 = vmatprep.subr.bf16.mxu0 0
    %384 = vmatpush1.bf16.msra.mxu0 0
    %385 = vmatprep.mubr.bf16.mxu0 0
    %386 = vmatmul.mubr.bf16.gmra.mrb[0].mxu0 %v351
    %v387 = vpop.f32.mrb[0].mxu0
    %v388 = vadd.f32 %v335, %v387
    %v389 = vpop.f32.mrb[0].mxu0
    %v390 = vpop.f32.mrb[0].mxu0
    %v391 = vpop.f32.mrb[0].mxu0
    %392 = vdwg.mxu0
    %v393 = vmax.f32 %v388, 0.0
    %v394 = vpack.c.bf16 %v393, %v393
    %v395 = vld [vmem:[#allocation9] sm:$0xf]
    %v396 = vld [vmem:[#allocation9 + $0x4] sm:$0xf]
    %v397 = vld [vmem:[#allocation9 + $0x8] sm:$0xf]
    %v398 = vld [vmem:[#allocation9 + $0xc] sm:$0xf]
    %v399 = vld [vmem:[#allocation10] sm:$0x1]
    %v401 = vlaneseq
    %v402 = vshrl.u32 %v401, 7
    %v403 = vsub.s32 0, %v402
    %v404 = vrot.slane %v399, %v403
    %v410 = vunpack.c.l.b16 %v395
    %v411 = vunpack.c.l.b16 %v396
    %v412 = vunpack.c.l.b16 %v397
    %v413 = vunpack.c.l.b16 %v398
    %v414 = vpack.c.b16 %v411, %v410
    %v415 = vpack.c.b16 %v413, %v412
    %v419 = vsel %vm349, %v394, 0
    %421 = vmatprep.subr.bf16.mxu0 0
    %422 = vmatpush1.bf16.msra.mxu0 %v414
    %423 = vmatprep.subr.bf16.mxu0 0
    %424 = vmatpush1.bf16.msra.mxu0 %v415
    %425 = vmatprep.subr.bf16.mxu0 0
    %426 = vmatpush1.bf16.msra.mxu0 0
    %427 = vmatprep.subr.bf16.mxu0 0
    %428 = vmatpush1.bf16.msra.mxu0 0
    %429 = vmatprep.subr.bf16.mxu0 0
    %430 = vmatpush1.bf16.msra.mxu0 0
    %431 = vmatprep.subr.bf16.mxu0 0
    %432 = vmatpush1.bf16.msra.mxu0 0
    %433 = vmatprep.subr.bf16.mxu0 0
    %434 = vmatpush1.bf16.msra.mxu0 0
    %435 = vmatprep.subr.bf16.mxu0 0
    %436 = vmatpush1.bf16.msra.mxu0 0
    %437 = vmatprep.subr.bf16.mxu0 0
    %438 = vmatpush1.bf16.msra.mxu0 0
    %439 = vmatprep.subr.bf16.mxu0 0
    %440 = vmatpush1.bf16.msra.mxu0 0
    %441 = vmatprep.subr.bf16.mxu0 0
    %442 = vmatpush1.bf16.msra.mxu0 0
    %443 = vmatprep.subr.bf16.mxu0 0
    %444 = vmatpush1.bf16.msra.mxu0 0
    %445 = vmatprep.subr.bf16.mxu0 0
    %446 = vmatpush1.bf16.msra.mxu0 0
    %447 = vmatprep.subr.bf16.mxu0 0
    %448 = vmatpush1.bf16.msra.mxu0 0
    %449 = vmatprep.subr.bf16.mxu0 0
    %450 = vmatpush1.bf16.msra.mxu0 0
    %451 = vmatprep.subr.bf16.mxu0 0
    %452 = vmatpush1.bf16.msra.mxu0 0
    %453 = vmatprep.mubr.bf16.mxu0 0
    %454 = vmatmul.mubr.bf16.gmra.mrb[0].mxu0 %v419
    %v455 = vpop.f32.mrb[0].mxu0
    %v456 = vadd.f32 %v404, %v455
    %v457 = vpop.f32.mrb[0].mxu0
    %v458 = vpop.f32.mrb[0].mxu0
    %v459 = vpop.f32.mrb[0].mxu0
    %460 = vdwg.mxu0
    %462 = vrot.lane.b32.xlu0 %v269, 96
    %v463 = vpop.permute.xlu0 %462
    %v465 = vmul.f32 %v456, %v463
    %v466 = vadd.f32 %v319, %v465
    %v467 = vmax.f32 %v466, 0.0
    %v468 = vpack.c.bf16 %v467, %v467
    %s469 = scalar_lea.vmem %s5, 16
    %v470 = vld [vmem:[%s469] sm:$0xf]
    %v471 = vld [vmem:[%s469 + $0x4] sm:$0xf]
    %v472 = vld [vmem:[%s469 + $0x8] sm:$0xf]
    %v473 = vld [vmem:[%s469 + $0xc] sm:$0xf]
    %s474 = scalar_lea.vmem [#allocation7], 1
    %v475 = vld [vmem:[%s474] sm:$0x1]
    %v477 = vlaneseq
    %v478 = vshrl.u32 %v477, 7
    %v479 = vsub.s32 0, %v478
    %v480 = vrot.slane %v475, %v479
    %v486 = vunpack.c.l.b16 %v470
    %v487 = vunpack.c.l.b16 %v471
    %v488 = vunpack.c.l.b16 %v472
    %v489 = vunpack.c.l.b16 %v473
    %v490 = vpack.c.b16 %v487, %v486
    %v491 = vpack.c.b16 %v489, %v488
    %v495 = vsel %vm349, %v468, 0
    %497 = vmatprep.subr.bf16.mxu0 0
    %498 = vmatpush1.bf16.msra.mxu0 %v490
    %499 = vmatprep.subr.bf16.mxu0 0
    %500 = vmatpush1.bf16.msra.mxu0 %v491
    %501 = vmatprep.subr.bf16.mxu0 0
    %502 = vmatpush1.bf16.msra.mxu0 0
    %503 = vmatprep.subr.bf16.mxu0 0
    %504 = vmatpush1.bf16.msra.mxu0 0
    %505 = vmatprep.subr.bf16.mxu0 0
    %506 = vmatpush1.bf16.msra.mxu0 0
    %507 = vmatprep.subr.bf16.mxu0 0
    %508 = vmatpush1.bf16.msra.mxu0 0
    %509 = vmatprep.subr.bf16.mxu0 0
    %510 = vmatpush1.bf16.msra.mxu0 0
    %511 = vmatprep.subr.bf16.mxu0 0
    %512 = vmatpush1.bf16.msra.mxu0 0
    %513 = vmatprep.subr.bf16.mxu0 0
    %514 = vmatpush1.bf16.msra.mxu0 0
    %515 = vmatprep.subr.bf16.mxu0 0
    %516 = vmatpush1.bf16.msra.mxu0 0
    %517 = vmatprep.subr.bf16.mxu0 0
    %518 = vmatpush1.bf16.msra.mxu0 0
    %519 = vmatprep.subr.bf16.mxu0 0
    %520 = vmatpush1.bf16.msra.mxu0 0
    %521 = vmatprep.subr.bf16.mxu0 0
    %522 = vmatpush1.bf16.msra.mxu0 0
    %523 = vmatprep.subr.bf16.mxu0 0
    %524 = vmatpush1.bf16.msra.mxu0 0
    %525 = vmatprep.subr.bf16.mxu0 0
    %526 = vmatpush1.bf16.msra.mxu0 0
    %527 = vmatprep.subr.bf16.mxu0 0
    %528 = vmatpush1.bf16.msra.mxu0 0
    %529 = vmatprep.mubr.bf16.mxu0 0
    %530 = vmatmul.mubr.bf16.gmra.mrb[0].mxu0 %v495
    %v531 = vpop.f32.mrb[0].mxu0
    %v532 = vadd.f32 %v480, %v531
    %v533 = vpop.f32.mrb[0].mxu0
    %v534 = vpop.f32.mrb[0].mxu0
    %v535 = vpop.f32.mrb[0].mxu0
    %536 = vdwg.mxu0
    %v537 = vmax.f32 %v532, 0.0
    %v538 = vpack.c.bf16 %v537, %v537
    %s539 = scalar_lea.vmem [#allocation9], 16
    %v540 = vld [vmem:[%s539] sm:$0xf]
    %v541 = vld [vmem:[%s539 + $0x4] sm:$0xf]
    %v542 = vld [vmem:[%s539 + $0x8] sm:$0xf]
    %v543 = vld [vmem:[%s539 + $0xc] sm:$0xf]
    %s544 = scalar_lea.vmem [#allocation10], 1
    %v545 = vld [vmem:[%s544] sm:$0x1]
    %v547 = vlaneseq
    %v548 = vshrl.u32 %v547, 7
    %v549 = vsub.s32 0, %v548
    %v550 = vrot.slane %v545, %v549
    %v556 = vunpack.c.l.b16 %v540
    %v557 = vunpack.c.l.b16 %v541
    %v558 = vunpack.c.l.b16 %v542
    %v559 = vunpack.c.l.b16 %v543
    %v560 = vpack.c.b16 %v557, %v556
    %v561 = vpack.c.b16 %v559, %v558
    %v565 = vsel %vm349, %v538, 0
    %567 = vmatprep.subr.bf16.mxu0 0
    %568 = vmatpush1.bf16.msra.mxu0 %v560
    %569 = vmatprep.subr.bf16.mxu0 0
    %570 = vmatpush1.bf16.msra.mxu0 %v561
    %571 = vmatprep.subr.bf16.mxu0 0
    %572 = vmatpush1.bf16.msra.mxu0 0
    %573 = vmatprep.subr.bf16.mxu0 0
    %574 = vmatpush1.bf16.msra.mxu0 0
    %575 = vmatprep.subr.bf16.mxu0 0
    %576 = vmatpush1.bf16.msra.mxu0 0
    %577 = vmatprep.subr.bf16.mxu0 0
    %578 = vmatpush1.bf16.msra.mxu0 0
    %579 = vmatprep.subr.bf16.mxu0 0
    %580 = vmatpush1.bf16.msra.mxu0 0
    %581 = vmatprep.subr.bf16.mxu0 0
    %582 = vmatpush1.bf16.msra.mxu0 0
    %583 = vmatprep.subr.bf16.mxu0 0
    %584 = vmatpush1.bf16.msra.mxu0 0
    %585 = vmatprep.subr.bf16.mxu0 0
    %586 = vmatpush1.bf16.msra.mxu0 0
    %587 = vmatprep.subr.bf16.mxu0 0
    %588 = vmatpush1.bf16.msra.mxu0 0
    %589 = vmatprep.subr.bf16.mxu0 0
    %590 = vmatpush1.bf16.msra.mxu0 0
    %591 = vmatprep.subr.bf16.mxu0 0
    %592 = vmatpush1.bf16.msra.mxu0 0
    %593 = vmatprep.subr.bf16.mxu0 0
    %594 = vmatpush1.bf16.msra.mxu0 0
    %595 = vmatprep.subr.bf16.mxu0 0
    %596 = vmatpush1.bf16.msra.mxu0 0
    %597 = vmatprep.subr.bf16.mxu0 0
    %598 = vmatpush1.bf16.msra.mxu0 0
    %599 = vmatprep.mubr.bf16.mxu0 0
    %600 = vmatmul.mubr.bf16.gmra.mrb[0].mxu0 %v565
    %v601 = vpop.f32.mrb[0].mxu0
    %v602 = vadd.f32 %v550, %v601
    %v603 = vpop.f32.mrb[0].mxu0
    %v604 = vpop.f32.mrb[0].mxu0
    %v605 = vpop.f32.mrb[0].mxu0
    %606 = vdwg.mxu0
    %607 = vrot.lane.b32.xlu0 %v269, 64
    %v608 = vpop.permute.xlu0 %607
    %v610 = vmul.f32 %v602, %v608
    %v611 = vadd.f32 %v466, %v610
    %v612 = vpack.c.bf16 %v611, %v611
    %v613 = vld [vmem:[%s9] sm:$0xf]
    %v614 = vld [vmem:[%s9 + $0x4] sm:$0xf]
    %v615 = vld [vmem:[%s9 + $0x8] sm:$0xf]
    %v616 = vld [vmem:[%s9 + $0xc] sm:$0xf]
    %v617 = vld [vmem:[%s10] sm:$0x1]
    %v619 = vlaneseq
    %v620 = vshrl.u32 %v619, 7
    %v621 = vsub.s32 0, %v620
    %v622 = vrot.slane %v617, %v621
    %v628 = vunpack.c.l.b16 %v613
    %v629 = vunpack.c.l.b16 %v614
    %v630 = vunpack.c.l.b16 %v615
    %v631 = vunpack.c.l.b16 %v616
    %v632 = vpack.c.b16 %v629, %v628
    %v633 = vpack.c.b16 %v631, %v630
    %v637 = vsel %vm349, %v612, 0
    %639 = vmatprep.subr.bf16.mxu0 0
    %640 = vmatpush1.bf16.msra.mxu0 %v632
    %641 = vmatprep.subr.bf16.mxu0 0
    %642 = vmatpush1.bf16.msra.mxu0 %v633
    %643 = vmatprep.subr.bf16.mxu0 0
    %644 = vmatpush1.bf16.msra.mxu0 0
    %645 = vmatprep.subr.bf16.mxu0 0
    %646 = vmatpush1.bf16.msra.mxu0 0
    %647 = vmatprep.subr.bf16.mxu0 0
    %648 = vmatpush1.bf16.msra.mxu0 0
    %649 = vmatprep.subr.bf16.mxu0 0
    %650 = vmatpush1.bf16.msra.mxu0 0
    %651 = vmatprep.subr.bf16.mxu0 0
    %652 = vmatpush1.bf16.msra.mxu0 0
    %653 = vmatprep.subr.bf16.mxu0 0
    %654 = vmatpush1.bf16.msra.mxu0 0
    %655 = vmatprep.subr.bf16.mxu0 0
    %656 = vmatpush1.bf16.msra.mxu0 0
    %657 = vmatprep.subr.bf16.mxu0 0
    %658 = vmatpush1.bf16.msra.mxu0 0
    %659 = vmatprep.subr.bf16.mxu0 0
    %660 = vmatpush1.bf16.msra.mxu0 0
    %661 = vmatprep.subr.bf16.mxu0 0
    %662 = vmatpush1.bf16.msra.mxu0 0
    %663 = vmatprep.subr.bf16.mxu0 0
    %664 = vmatpush1.bf16.msra.mxu0 0
    %665 = vmatprep.subr.bf16.mxu0 0
    %666 = vmatpush1.bf16.msra.mxu0 0
    %667 = vmatprep.subr.bf16.mxu0 0
    %668 = vmatpush1.bf16.msra.mxu0 0
    %669 = vmatprep.subr.bf16.mxu0 0
    %670 = vmatpush1.bf16.msra.mxu0 0
    %671 = vmatprep.mubr.bf16.mxu0 0
    %672 = vmatmul.mubr.bf16.gmra.mrb[0].mxu0 %v637
    %v673 = vpop.f32.mrb[0].mxu0
    %v674 = vadd.f32 %v622, %v673
    %v675 = vpop.f32.mrb[0].mxu0
    %v676 = vpop.f32.mrb[0].mxu0
    %v677 = vpop.f32.mrb[0].mxu0
    %678 = vdwg.mxu0
    %v679 = vld [vmem:[%s11] sm:$0xf]
    %v680 = vld [vmem:[%s11 + $0x4] sm:$0xf]
    %v681 = vld [vmem:[%s11 + $0x8] sm:$0xf]
    %v682 = vld [vmem:[%s11 + $0xc] sm:$0xf]
    %v683 = vld [vmem:[%s12] sm:$0x1]
    %v685 = vlaneseq
    %v686 = vshrl.u32 %v685, 7
    %v687 = vsub.s32 0, %v686
    %v688 = vrot.slane %v683, %v687
    %v694 = vunpack.c.l.b16 %v679
    %v695 = vunpack.c.l.b16 %v680
    %v696 = vunpack.c.l.b16 %v681
    %v697 = vunpack.c.l.b16 %v682
    %v698 = vpack.c.b16 %v695, %v694
    %v699 = vpack.c.b16 %v697, %v696
    %702 = vmatprep.subr.bf16.mxu0 0
    %703 = vmatpush1.bf16.msra.mxu0 %v698
    %704 = vmatprep.subr.bf16.mxu0 0
    %705 = vmatpush1.bf16.msra.mxu0 %v699
    %706 = vmatprep.subr.bf16.mxu0 0
    %707 = vmatpush1.bf16.msra.mxu0 0
    %708 = vmatprep.subr.bf16.mxu0 0
    %709 = vmatpush1.bf16.msra.mxu0 0
    %710 = vmatprep.subr.bf16.mxu0 0
    %711 = vmatpush1.bf16.msra.mxu0 0
    %712 = vmatprep.subr.bf16.mxu0 0
    %713 = vmatpush1.bf16.msra.mxu0 0
    %714 = vmatprep.subr.bf16.mxu0 0
    %715 = vmatpush1.bf16.msra.mxu0 0
    %716 = vmatprep.subr.bf16.mxu0 0
    %717 = vmatpush1.bf16.msra.mxu0 0
    %718 = vmatprep.subr.bf16.mxu0 0
    %719 = vmatpush1.bf16.msra.mxu0 0
    %720 = vmatprep.subr.bf16.mxu0 0
    %721 = vmatpush1.bf16.msra.mxu0 0
    %722 = vmatprep.subr.bf16.mxu0 0
    %723 = vmatpush1.bf16.msra.mxu0 0
    %724 = vmatprep.subr.bf16.mxu0 0
    %725 = vmatpush1.bf16.msra.mxu0 0
    %726 = vmatprep.subr.bf16.mxu0 0
    %727 = vmatpush1.bf16.msra.mxu0 0
    %728 = vmatprep.subr.bf16.mxu0 0
    %729 = vmatpush1.bf16.msra.mxu0 0
    %730 = vmatprep.subr.bf16.mxu0 0
    %731 = vmatpush1.bf16.msra.mxu0 0
    %732 = vmatprep.subr.bf16.mxu0 0
    %733 = vmatpush1.bf16.msra.mxu0 0
    %734 = vmatprep.mubr.bf16.mxu0 0
    %735 = vmatmul.mubr.bf16.gmra.mrb[0].mxu0 %v637
    %v736 = vpop.f32.mrb[0].mxu0
    %v737 = vadd.f32 %v688, %v736
    %v738 = vpop.f32.mrb[0].mxu0
    %v739 = vpop.f32.mrb[0].mxu0
    %v740 = vpop.f32.mrb[0].mxu0
    %741 = vdwg.mxu0
    %v742 = vadd.f32 %v674, 2.0
    %v743 = vsub.f32 0.0, %v742
    %v744 = vmul.f32 %v743, 1.442695
    %v745 = vpow.pop %v744
    %v746 = vadd.f32 %v745, 1.0
    %v747 = vrcp.pop %v746
    %v748 = vmul.f32 1.0, %v747
    %v749 = vadd.f32 %v748, 0.001
    %v750 = vmul.f32 %v749, %v121
    %v751 = vadd.f32 %v750, %v737
    %v752 = vlog2.pop %v749
    %v753 = vmul.f32 %v752, 0.6931472
    %v754 = vadd.f32 %v753, 0.0
    %v755 = vpack.c.bf16 %v751, %v751
    %s756 = scalar_lea.vmem %s2, 4
    %v757 = vld [vmem:[%s756] sm:$0xf]
    %759 = vrot.lane.b32.xlu0 %v209, 96
    %v760 = vpop.permute.xlu0 %759
    %v763 = vsel %vm276, %v755, 0
    %v766 = vsel %vm280, %v757, 0
    %768 = vmatprep.subr.bf16.mxu0 0
    %769 = vmatpush1.bf16.msra.mxu0 %v766
    %770 = vmatprep.subr.bf16.mxu0 0
    %771 = vmatpush1.bf16.msra.mxu0 0
    %772 = vmatprep.subr.bf16.mxu0 0
    %773 = vmatpush1.bf16.msra.mxu0 0
    %774 = vmatprep.subr.bf16.mxu0 0
    %775 = vmatpush1.bf16.msra.mxu0 0
    %776 = vmatprep.subr.bf16.mxu0 0
    %777 = vmatpush1.bf16.msra.mxu0 0
    %778 = vmatprep.subr.bf16.mxu0 0
    %779 = vmatpush1.bf16.msra.mxu0 0
    %780 = vmatprep.subr.bf16.mxu0 0
    %781 = vmatpush1.bf16.msra.mxu0 0
    %782 = vmatprep.subr.bf16.mxu0 0
    %783 = vmatpush1.bf16.msra.mxu0 0
    %784 = vmatprep.subr.bf16.mxu0 0
    %785 = vmatpush1.bf16.msra.mxu0 0
    %786 = vmatprep.subr.bf16.mxu0 0
    %787 = vmatpush1.bf16.msra.mxu0 0
    %788 = vmatprep.subr.bf16.mxu0 0
    %789 = vmatpush1.bf16.msra.mxu0 0
    %790 = vmatprep.subr.bf16.mxu0 0
    %791 = vmatpush1.bf16.msra.mxu0 0
    %792 = vmatprep.subr.bf16.mxu0 0
    %793 = vmatpush1.bf16.msra.mxu0 0
    %794 = vmatprep.subr.bf16.mxu0 0
    %795 = vmatpush1.bf16.msra.mxu0 0
    %796 = vmatprep.subr.bf16.mxu0 0
    %797 = vmatpush1.bf16.msra.mxu0 0
    %798 = vmatprep.subr.bf16.mxu0 0
    %799 = vmatpush1.bf16.msra.mxu0 0
    %800 = vmatprep.mubr.bf16.mxu0 0
    %801 = vmatmul.mubr.bf16.gmra.mrb[0].mxu0 %v763
    %v802 = vpop.f32.mrb[0].mxu0
    %v803 = vadd.f32 %v760, %v802
    %v804 = vpop.f32.mrb[0].mxu0
    %v805 = vpop.f32.mrb[0].mxu0
    %v806 = vpop.f32.mrb[0].mxu0
    %807 = vdwg.mxu0
    %v808 = vmax.f32 %v803, 0.0
    %v809 = vpack.c.bf16 %v808, %v808
    %s810 = scalar_lea.vmem %s5, 32
    %v811 = vld [vmem:[%s810] sm:$0xf]
    %v812 = vld [vmem:[%s810 + $0x4] sm:$0xf]
    %v813 = vld [vmem:[%s810 + $0x8] sm:$0xf]
    %v814 = vld [vmem:[%s810 + $0xc] sm:$0xf]
    %s815 = scalar_lea.vmem [#allocation7], 2
    %v816 = vld [vmem:[%s815] sm:$0x1]
    %v818 = vlaneseq
    %v819 = vshrl.u32 %v818, 7
    %v820 = vsub.s32 0, %v819
    %v821 = vrot.slane %v816, %v820
    %v827 = vunpack.c.l.b16 %v811
    %v828 = vunpack.c.l.b16 %v812
    %v829 = vunpack.c.l.b16 %v813
    %v830 = vunpack.c.l.b16 %v814
    %v831 = vpack.c.b16 %v828, %v827
    %v832 = vpack.c.b16 %v830, %v829
    %v836 = vsel %vm349, %v809, 0
    %838 = vmatprep.subr.bf16.mxu0 0
    %839 = vmatpush1.bf16.msra.mxu0 %v831
    %840 = vmatprep.subr.bf16.mxu0 0
    %841 = vmatpush1.bf16.msra.mxu0 %v832
    %842 = vmatprep.subr.bf16.mxu0 0
    %843 = vmatpush1.bf16.msra.mxu0 0
    %844 = vmatprep.subr.bf16.mxu0 0
    %845 = vmatpush1.bf16.msra.mxu0 0
    %846 = vmatprep.subr.bf16.mxu0 0
    %847 = vmatpush1.bf16.msra.mxu0 0
    %848 = vmatprep.subr.bf16.mxu0 0
    %849 = vmatpush1.bf16.msra.mxu0 0
    %850 = vmatprep.subr.bf16.mxu0 0
    %851 = vmatpush1.bf16.msra.mxu0 0
    %852 = vmatprep.subr.bf16.mxu0 0
    %853 = vmatpush1.bf16.msra.mxu0 0
    %854 = vmatprep.subr.bf16.mxu0 0
    %855 = vmatpush1.bf16.msra.mxu0 0
    %856 = vmatprep.subr.bf16.mxu0 0
    %857 = vmatpush1.bf16.msra.mxu0 0
    %858 = vmatprep.subr.bf16.mxu0 0
    %859 = vmatpush1.bf16.msra.mxu0 0
    %860 = vmatprep.subr.bf16.mxu0 0
    %861 = vmatpush1.bf16.msra.mxu0 0
    %862 = vmatprep.subr.bf16.mxu0 0
    %863 = vmatpush1.bf16.msra.mxu0 0
    %864 = vmatprep.subr.bf16.mxu0 0
    %865 = vmatpush1.bf16.msra.mxu0 0
    %866 = vmatprep.subr.bf16.mxu0 0
    %867 = vmatpush1.bf16.msra.mxu0 0
    %868 = vmatprep.subr.bf16.mxu0 0
    %869 = vmatpush1.bf16.msra.mxu0 0
    %870 = vmatprep.mubr.bf16.mxu0 0
    %871 = vmatmul.mubr.bf16.gmra.mrb[0].mxu0 %v836
    %v872 = vpop.f32.mrb[0].mxu0
    %v873 = vadd.f32 %v821, %v872
    %v874 = vpop.f32.mrb[0].mxu0
    %v875 = vpop.f32.mrb[0].mxu0
    %v876 = vpop.f32.mrb[0].mxu0
    %877 = vdwg.mxu0
    %v878 = vmax.f32 %v873, 0.0
    %v879 = vpack.c.bf16 %v878, %v878
    %s880 = scalar_lea.vmem [#allocation9], 32
    %v881 = vld [vmem:[%s880] sm:$0xf]
    %v882 = vld [vmem:[%s880 + $0x4] sm:$0xf]
    %v883 = vld [vmem:[%s880 + $0x8] sm:$0xf]
    %v884 = vld [vmem:[%s880 + $0xc] sm:$0xf]
    %s885 = scalar_lea.vmem [#allocation10], 2
    %v886 = vld [vmem:[%s885] sm:$0x1]
    %v888 = vlaneseq
    %v889 = vshrl.u32 %v888, 7
    %v890 = vsub.s32 0, %v889
    %v891 = vrot.slane %v886, %v890
    %v897 = vunpack.c.l.b16 %v881
    %v898 = vunpack.c.l.b16 %v882
    %v899 = vunpack.c.l.b16 %v883
    %v900 = vunpack.c.l.b16 %v884
    %v901 = vpack.c.b16 %v898, %v897
    %v902 = vpack.c.b16 %v900, %v899
    %v906 = vsel %vm349, %v879, 0
    %908 = vmatprep.subr.bf16.mxu0 0
    %909 = vmatpush1.bf16.msra.mxu0 %v901
    %910 = vmatprep.subr.bf16.mxu0 0
    %911 = vmatpush1.bf16.msra.mxu0 %v902
    %912 = vmatprep.subr.bf16.mxu0 0
    %913 = vmatpush1.bf16.msra.mxu0 0
    %914 = vmatprep.subr.bf16.mxu0 0
    %915 = vmatpush1.bf16.msra.mxu0 0
    %916 = vmatprep.subr.bf16.mxu0 0
    %917 = vmatpush1.bf16.msra.mxu0 0
    %918 = vmatprep.subr.bf16.mxu0 0
    %919 = vmatpush1.bf16.msra.mxu0 0
    %920 = vmatprep.subr.bf16.mxu0 0
    %921 = vmatpush1.bf16.msra.mxu0 0
    %922 = vmatprep.subr.bf16.mxu0 0
    %923 = vmatpush1.bf16.msra.mxu0 0
    %924 = vmatprep.subr.bf16.mxu0 0
    %925 = vmatpush1.bf16.msra.mxu0 0
    %926 = vmatprep.subr.bf16.mxu0 0
    %927 = vmatpush1.bf16.msra.mxu0 0
    %928 = vmatprep.subr.bf16.mxu0 0
    %929 = vmatpush1.bf16.msra.mxu0 0
    %930 = vmatprep.subr.bf16.mxu0 0
    %931 = vmatpush1.bf16.msra.mxu0 0
    %932 = vmatprep.subr.bf16.mxu0 0
    %933 = vmatpush1.bf16.msra.mxu0 0
    %934 = vmatprep.subr.bf16.mxu0 0
    %935 = vmatpush1.bf16.msra.mxu0 0
    %936 = vmatprep.subr.bf16.mxu0 0
    %937 = vmatpush1.bf16.msra.mxu0 0
    %938 = vmatprep.subr.bf16.mxu0 0
    %939 = vmatpush1.bf16.msra.mxu0 0
    %940 = vmatprep.mubr.bf16.mxu0 0
    %941 = vmatmul.mubr.bf16.gmra.mrb[0].mxu0 %v906
    %v942 = vpop.f32.mrb[0].mxu0
    %v943 = vadd.f32 %v891, %v942
    %v944 = vpop.f32.mrb[0].mxu0
    %v945 = vpop.f32.mrb[0].mxu0
    %v946 = vpop.f32.mrb[0].mxu0
    %947 = vdwg.mxu0
    %948 = vrot.lane.b32.xlu0 %v269, 32
    %v949 = vpop.permute.xlu0 %948
    %v951 = vmul.f32 %v943, %v949
    %v952 = vadd.f32 %v803, %v951
    %v953 = vmax.f32 %v952, 0.0
    %v954 = vpack.c.bf16 %v953, %v953
    %s955 = scalar_lea.vmem %s5, 48
    %v956 = vld [vmem:[%s955] sm:$0xf]
    %v957 = vld [vmem:[%s955 + $0x4] sm:$0xf]
    %v958 = vld [vmem:[%s955 + $0x8] sm:$0xf]
    %v959 = vld [vmem:[%s955 + $0xc] sm:$0xf]
    %s960 = scalar_lea.vmem [#allocation7], 3
    %v961 = vld [vmem:[%s960] sm:$0x1]
    %v963 = vlaneseq
    %v964 = vshrl.u32 %v963, 7
    %v965 = vsub.s32 0, %v964
    %v966 = vrot.slane %v961, %v965
    %v972 = vunpack.c.l.b16 %v956
    %v973 = vunpack.c.l.b16 %v957
    %v974 = vunpack.c.l.b16 %v958
    %v975 = vunpack.c.l.b16 %v959
    %v976 = vpack.c.b16 %v973, %v972
    %v977 = vpack.c.b16 %v975, %v974
    %v981 = vsel %vm349, %v954, 0
    %983 = vmatprep.subr.bf16.mxu0 0
    %984 = vmatpush1.bf16.msra.mxu0 %v976
    %985 = vmatprep.subr.bf16.mxu0 0
    %986 = vmatpush1.bf16.msra.mxu0 %v977
    %987 = vmatprep.subr.bf16.mxu0 0
    %988 = vmatpush1.bf16.msra.mxu0 0
    %989 = vmatprep.subr.bf16.mxu0 0
    %990 = vmatpush1.bf16.msra.mxu0 0
    %991 = vmatprep.subr.bf16.mxu0 0
    %992 = vmatpush1.bf16.msra.mxu0 0
    %993 = vmatprep.subr.bf16.mxu0 0
    %994 = vmatpush1.bf16.msra.mxu0 0
    %995 = vmatprep.subr.bf16.mxu0 0
    %996 = vmatpush1.bf16.msra.mxu0 0
    %997 = vmatprep.subr.bf16.mxu0 0
    %998 = vmatpush1.bf16.msra.mxu0 0
    %999 = vmatprep.subr.bf16.mxu0 0
    %1000 = vmatpush1.bf16.msra.mxu0 0
    %1001 = vmatprep.subr.bf16.mxu0 0
    %1002 = vmatpush1.bf16.msra.mxu0 0
    %1003 = vmatprep.subr.bf16.mxu0 0
    %1004 = vmatpush1.bf16.msra.mxu0 0
    %1005 = vmatprep.subr.bf16.mxu0 0
    %1006 = vmatpush1.bf16.msra.mxu0 0
    %1007 = vmatprep.subr.bf16.mxu0 0
    %1008 = vmatpush1.bf16.msra.mxu0 0
    %1009 = vmatprep.subr.bf16.mxu0 0
    %1010 = vmatpush1.bf16.msra.mxu0 0
    %1011 = vmatprep.subr.bf16.mxu0 0
    %1012 = vmatpush1.bf16.msra.mxu0 0
    %1013 = vmatprep.subr.bf16.mxu0 0
    %1014 = vmatpush1.bf16.msra.mxu0 0
    %1015 = vmatprep.mubr.bf16.mxu0 0
    %1016 = vmatmul.mubr.bf16.gmra.mrb[0].mxu0 %v981
    %v1017 = vpop.f32.mrb[0].mxu0
    %v1018 = vadd.f32 %v966, %v1017
    %v1019 = vpop.f32.mrb[0].mxu0
    %v1020 = vpop.f32.mrb[0].mxu0
    %v1021 = vpop.f32.mrb[0].mxu0
    %1022 = vdwg.mxu0
    %v1023 = vmax.f32 %v1018, 0.0
    %v1024 = vpack.c.bf16 %v1023, %v1023
    %s1025 = scalar_lea.vmem [#allocation9], 48
    %v1026 = vld [vmem:[%s1025] sm:$0xf]
    %v1027 = vld [vmem:[%s1025 + $0x4] sm:$0xf]
    %v1028 = vld [vmem:[%s1025 + $0x8] sm:$0xf]
    %v1029 = vld [vmem:[%s1025 + $0xc] sm:$0xf]
    %s1030 = scalar_lea.vmem [#allocation10], 3
    %v1031 = vld [vmem:[%s1030] sm:$0x1]
    %v1033 = vlaneseq
    %v1034 = vshrl.u32 %v1033, 7
    %v1035 = vsub.s32 0, %v1034
    %v1036 = vrot.slane %v1031, %v1035
    %v1042 = vunpack.c.l.b16 %v1026
    %v1043 = vunpack.c.l.b16 %v1027
    %v1044 = vunpack.c.l.b16 %v1028
    %v1045 = vunpack.c.l.b16 %v1029
    %v1046 = vpack.c.b16 %v1043, %v1042
    %v1047 = vpack.c.b16 %v1045, %v1044
    %v1051 = vsel %vm349, %v1024, 0
    %1053 = vmatprep.subr.bf16.mxu0 0
    %1054 = vmatpush1.bf16.msra.mxu0 %v1046
    %1055 = vmatprep.subr.bf16.mxu0 0
    %1056 = vmatpush1.bf16.msra.mxu0 %v1047
    %1057 = vmatprep.subr.bf16.mxu0 0
    %1058 = vmatpush1.bf16.msra.mxu0 0
    %1059 = vmatprep.subr.bf16.mxu0 0
    %1060 = vmatpush1.bf16.msra.mxu0 0
    %1061 = vmatprep.subr.bf16.mxu0 0
    %1062 = vmatpush1.bf16.msra.mxu0 0
    %1063 = vmatprep.subr.bf16.mxu0 0
    %1064 = vmatpush1.bf16.msra.mxu0 0
    %1065 = vmatprep.subr.bf16.mxu0 0
    %1066 = vmatpush1.bf16.msra.mxu0 0
    %1067 = vmatprep.subr.bf16.mxu0 0
    %1068 = vmatpush1.bf16.msra.mxu0 0
    %1069 = vmatprep.subr.bf16.mxu0 0
    %1070 = vmatpush1.bf16.msra.mxu0 0
    %1071 = vmatprep.subr.bf16.mxu0 0
    %1072 = vmatpush1.bf16.msra.mxu0 0
    %1073 = vmatprep.subr.bf16.mxu0 0
    %1074 = vmatpush1.bf16.msra.mxu0 0
    %1075 = vmatprep.subr.bf16.mxu0 0
    %1076 = vmatpush1.bf16.msra.mxu0 0
    %1077 = vmatprep.subr.bf16.mxu0 0
    %1078 = vmatpush1.bf16.msra.mxu0 0
    %1079 = vmatprep.subr.bf16.mxu0 0
    %1080 = vmatpush1.bf16.msra.mxu0 0
    %1081 = vmatprep.subr.bf16.mxu0 0
    %1082 = vmatpush1.bf16.msra.mxu0 0
    %1083 = vmatprep.subr.bf16.mxu0 0
    %1084 = vmatpush1.bf16.msra.mxu0 0
    %1085 = vmatprep.mubr.bf16.mxu0 0
    %1086 = vmatmul.mubr.bf16.gmra.mrb[0].mxu0 %v1051
    %v1087 = vpop.f32.mrb[0].mxu0
    %v1088 = vadd.f32 %v1036, %v1087
    %v1089 = vpop.f32.mrb[0].mxu0
    %v1090 = vpop.f32.mrb[0].mxu0
    %v1091 = vpop.f32.mrb[0].mxu0
    %1092 = vdwg.mxu0
    %v1093 = vmul.f32 %v1088, %v271
    %v1094 = vadd.f32 %v952, %v1093
    %v1095 = vpack.c.bf16 %v1094, %v1094
    %s1096 = scalar_lea.vmem %s9, 16
    %v1097 = vld [vmem:[%s1096] sm:$0xf]
    %v1098 = vld [vmem:[%s1096 + $0x4] sm:$0xf]
    %v1099 = vld [vmem:[%s1096 + $0x8] sm:$0xf]
    %v1100 = vld [vmem:[%s1096 + $0xc] sm:$0xf]
    %s1101 = scalar_lea.vmem %s10, 1
    %v1102 = vld [vmem:[%s1101] sm:$0x1]
    %v1104 = vlaneseq
    %v1105 = vshrl.u32 %v1104, 7
    %v1106 = vsub.s32 0, %v1105
    %v1107 = vrot.slane %v1102, %v1106
    %v1113 = vunpack.c.l.b16 %v1097
    %v1114 = vunpack.c.l.b16 %v1098
    %v1115 = vunpack.c.l.b16 %v1099
    %v1116 = vunpack.c.l.b16 %v1100
    %v1117 = vpack.c.b16 %v1114, %v1113
    %v1118 = vpack.c.b16 %v1116, %v1115
    %v1122 = vsel %vm349, %v1095, 0
    %1124 = vmatprep.subr.bf16.mxu0 0
    %1125 = vmatpush1.bf16.msra.mxu0 %v1117
    %1126 = vmatprep.subr.bf16.mxu0 0
    %1127 = vmatpush1.bf16.msra.mxu0 %v1118
    %1128 = vmatprep.subr.bf16.mxu0 0
    %1129 = vmatpush1.bf16.msra.mxu0 0
    %1130 = vmatprep.subr.bf16.mxu0 0
    %1131 = vmatpush1.bf16.msra.mxu0 0
    %1132 = vmatprep.subr.bf16.mxu0 0
    %1133 = vmatpush1.bf16.msra.mxu0 0
    %1134 = vmatprep.subr.bf16.mxu0 0
    %1135 = vmatpush1.bf16.msra.mxu0 0
    %1136 = vmatprep.subr.bf16.mxu0 0
    %1137 = vmatpush1.bf16.msra.mxu0 0
    %1138 = vmatprep.subr.bf16.mxu0 0
    %1139 = vmatpush1.bf16.msra.mxu0 0
    %1140 = vmatprep.subr.bf16.mxu0 0
    %1141 = vmatpush1.bf16.msra.mxu0 0
    %1142 = vmatprep.subr.bf16.mxu0 0
    %1143 = vmatpush1.bf16.msra.mxu0 0
    %1144 = vmatprep.subr.bf16.mxu0 0
    %1145 = vmatpush1.bf16.msra.mxu0 0
    %1146 = vmatprep.subr.bf16.mxu0 0
    %1147 = vmatpush1.bf16.msra.mxu0 0
    %1148 = vmatprep.subr.bf16.mxu0 0
    %1149 = vmatpush1.bf16.msra.mxu0 0
    %1150 = vmatprep.subr.bf16.mxu0 0
    %1151 = vmatpush1.bf16.msra.mxu0 0
    %1152 = vmatprep.subr.bf16.mxu0 0
    %1153 = vmatpush1.bf16.msra.mxu0 0
    %1154 = vmatprep.subr.bf16.mxu0 0
    %1155 = vmatpush1.bf16.msra.mxu0 0
    %1156 = vmatprep.mubr.bf16.mxu0 0
    %1157 = vmatmul.mubr.bf16.gmra.mrb[0].mxu0 %v1122
    %v1158 = vpop.f32.mrb[0].mxu0
    %v1159 = vadd.f32 %v1107, %v1158
    %v1160 = vpop.f32.mrb[0].mxu0
    %v1161 = vpop.f32.mrb[0].mxu0
    %v1162 = vpop.f32.mrb[0].mxu0
    %1163 = vdwg.mxu0
    %s1164 = scalar_lea.vmem %s11, 16
    %v1165 = vld [vmem:[%s1164] sm:$0xf]
    %v1166 = vld [vmem:[%s1164 + $0x4] sm:$0xf]
    %v1167 = vld [vmem:[%s1164 + $0x8] sm:$0xf]
    %v1168 = vld [vmem:[%s1164 + $0xc] sm:$0xf]
    %s1169 = scalar_lea.vmem %s12, 1
    %v1170 = vld [vmem:[%s1169] sm:$0x1]
    %v1172 = vlaneseq
    %v1173 = vshrl.u32 %v1172, 7
    %v1174 = vsub.s32 0, %v1173
    %v1175 = vrot.slane %v1170, %v1174
    %v1181 = vunpack.c.l.b16 %v1165
    %v1182 = vunpack.c.l.b16 %v1166
    %v1183 = vunpack.c.l.b16 %v1167
    %v1184 = vunpack.c.l.b16 %v1168
    %v1185 = vpack.c.b16 %v1182, %v1181
    %v1186 = vpack.c.b16 %v1184, %v1183
    %1189 = vmatprep.subr.bf16.mxu0 0
    %1190 = vmatpush1.bf16.msra.mxu0 %v1185
    %1191 = vmatprep.subr.bf16.mxu0 0
    %1192 = vmatpush1.bf16.msra.mxu0 %v1186
    %1193 = vmatprep.subr.bf16.mxu0 0
    %1194 = vmatpush1.bf16.msra.mxu0 0
    %1195 = vmatprep.subr.bf16.mxu0 0
    %1196 = vmatpush1.bf16.msra.mxu0 0
    %1197 = vmatprep.subr.bf16.mxu0 0
    %1198 = vmatpush1.bf16.msra.mxu0 0
    %1199 = vmatprep.subr.bf16.mxu0 0
    %1200 = vmatpush1.bf16.msra.mxu0 0
    %1201 = vmatprep.subr.bf16.mxu0 0
    %1202 = vmatpush1.bf16.msra.mxu0 0
    %1203 = vmatprep.subr.bf16.mxu0 0
    %1204 = vmatpush1.bf16.msra.mxu0 0
    %1205 = vmatprep.subr.bf16.mxu0 0
    %1206 = vmatpush1.bf16.msra.mxu0 0
    %1207 = vmatprep.subr.bf16.mxu0 0
    %1208 = vmatpush1.bf16.msra.mxu0 0
    %1209 = vmatprep.subr.bf16.mxu0 0
    %1210 = vmatpush1.bf16.msra.mxu0 0
    %1211 = vmatprep.subr.bf16.mxu0 0
    %1212 = vmatpush1.bf16.msra.mxu0 0
    %1213 = vmatprep.subr.bf16.mxu0 0
    %1214 = vmatpush1.bf16.msra.mxu0 0
    %1215 = vmatprep.subr.bf16.mxu0 0
    %1216 = vmatpush1.bf16.msra.mxu0 0
    %1217 = vmatprep.subr.bf16.mxu0 0
    %1218 = vmatpush1.bf16.msra.mxu0 0
    %1219 = vmatprep.subr.bf16.mxu0 0
    %1220 = vmatpush1.bf16.msra.mxu0 0
    %1221 = vmatprep.mubr.bf16.mxu0 0
    %1222 = vmatmul.mubr.bf16.gmra.mrb[0].mxu0 %v1122
    %v1223 = vpop.f32.mrb[0].mxu0
    %v1224 = vadd.f32 %v1175, %v1223
    %v1225 = vpop.f32.mrb[0].mxu0
    %v1226 = vpop.f32.mrb[0].mxu0
    %v1227 = vpop.f32.mrb[0].mxu0
    %1228 = vdwg.mxu0
    %v1229 = vadd.f32 %v1159, 2.0
    %v1230 = vsub.f32 0.0, %v1229
    %v1231 = vmul.f32 %v1230, 1.442695
    %v1232 = vpow.pop %v1231
    %v1233 = vadd.f32 %v1232, 1.0
    %v1234 = vrcp.pop %v1233
    %v1235 = vmul.f32 1.0, %v1234
    %v1236 = vadd.f32 %v1235, 0.001
    %v1237 = vmul.f32 %v1236, %v751
    %v1238 = vadd.f32 %v1237, %v1224
    %v1239 = vlog2.pop %v1236
    %v1240 = vmul.f32 %v1239, 0.6931472
    %v1241 = vadd.f32 %v754, %v1240
    %v1242 = vpack.c.bf16 %v1238, %v1238
    %s1243 = scalar_lea.vmem %s2, 8
    %v1244 = vld [vmem:[%s1243] sm:$0xf]
    %1245 = vrot.lane.b32.xlu0 %v209, 64
    %v1246 = vpop.permute.xlu0 %1245
    %v1249 = vsel %vm276, %v1242, 0
    %v1252 = vsel %vm280, %v1244, 0
    %1254 = vmatprep.subr.bf16.mxu0 0
    %1255 = vmatpush1.bf16.msra.mxu0 %v1252
    %1256 = vmatprep.subr.bf16.mxu0 0
    %1257 = vmatpush1.bf16.msra.mxu0 0
    %1258 = vmatprep.subr.bf16.mxu0 0
    %1259 = vmatpush1.bf16.msra.mxu0 0
    %1260 = vmatprep.subr.bf16.mxu0 0
    %1261 = vmatpush1.bf16.msra.mxu0 0
    %1262 = vmatprep.subr.bf16.mxu0 0
    %1263 = vmatpush1.bf16.msra.mxu0 0
    %1264 = vmatprep.subr.bf16.mxu0 0
    %1265 = vmatpush1.bf16.msra.mxu0 0
    %1266 = vmatprep.subr.bf16.mxu0 0
    %1267 = vmatpush1.bf16.msra.mxu0 0
    %1268 = vmatprep.subr.bf16.mxu0 0
    %1269 = vmatpush1.bf16.msra.mxu0 0
    %1270 = vmatprep.subr.bf16.mxu0 0
    %1271 = vmatpush1.bf16.msra.mxu0 0
    %1272 = vmatprep.subr.bf16.mxu0 0
    %1273 = vmatpush1.bf16.msra.mxu0 0
    %1274 = vmatprep.subr.bf16.mxu0 0
    %1275 = vmatpush1.bf16.msra.mxu0 0
    %1276 = vmatprep.subr.bf16.mxu0 0
    %1277 = vmatpush1.bf16.msra.mxu0 0
    %1278 = vmatprep.subr.bf16.mxu0 0
    %1279 = vmatpush1.bf16.msra.mxu0 0
    %1280 = vmatprep.subr.bf16.mxu0 0
    %1281 = vmatpush1.bf16.msra.mxu0 0
    %1282 = vmatprep.subr.bf16.mxu0 0
    %1283 = vmatpush1.bf16.msra.mxu0 0
    %1284 = vmatprep.subr.bf16.mxu0 0
    %1285 = vmatpush1.bf16.msra.mxu0 0
    %1286 = vmatprep.mubr.bf16.mxu0 0
    %1287 = vmatmul.mubr.bf16.gmra.mrb[0].mxu0 %v1249
    %v1288 = vpop.f32.mrb[0].mxu0
    %v1289 = vadd.f32 %v1246, %v1288
    %v1290 = vpop.f32.mrb[0].mxu0
    %v1291 = vpop.f32.mrb[0].mxu0
    %v1292 = vpop.f32.mrb[0].mxu0
    %1293 = vdwg.mxu0
    %v1294 = vmax.f32 %v1289, 0.0
    %v1295 = vpack.c.bf16 %v1294, %v1294
    %s1296 = scalar_lea.vmem %s5, 64
    %v1297 = vld [vmem:[%s1296] sm:$0xf]
    %v1298 = vld [vmem:[%s1296 + $0x4] sm:$0xf]
    %v1299 = vld [vmem:[%s1296 + $0x8] sm:$0xf]
    %v1300 = vld [vmem:[%s1296 + $0xc] sm:$0xf]
    %s1301 = scalar_lea.vmem [#allocation7], 4
    %v1302 = vld [vmem:[%s1301] sm:$0x1]
    %v1304 = vlaneseq
    %v1305 = vshrl.u32 %v1304, 7
    %v1306 = vsub.s32 0, %v1305
    %v1307 = vrot.slane %v1302, %v1306
    %v1313 = vunpack.c.l.b16 %v1297
    %v1314 = vunpack.c.l.b16 %v1298
    %v1315 = vunpack.c.l.b16 %v1299
    %v1316 = vunpack.c.l.b16 %v1300
    %v1317 = vpack.c.b16 %v1314, %v1313
    %v1318 = vpack.c.b16 %v1316, %v1315
    %v1322 = vsel %vm349, %v1295, 0
    %1324 = vmatprep.subr.bf16.mxu0 0
    %1325 = vmatpush1.bf16.msra.mxu0 %v1317
    %1326 = vmatprep.subr.bf16.mxu0 0
    %1327 = vmatpush1.bf16.msra.mxu0 %v1318
    %1328 = vmatprep.subr.bf16.mxu0 0
    %1329 = vmatpush1.bf16.msra.mxu0 0
    %1330 = vmatprep.subr.bf16.mxu0 0
    %1331 = vmatpush1.bf16.msra.mxu0 0
    %1332 = vmatprep.subr.bf16.mxu0 0
    %1333 = vmatpush1.bf16.msra.mxu0 0
    %1334 = vmatprep.subr.bf16.mxu0 0
    %1335 = vmatpush1.bf16.msra.mxu0 0
    %1336 = vmatprep.subr.bf16.mxu0 0
    %1337 = vmatpush1.bf16.msra.mxu0 0
    %1338 = vmatprep.subr.bf16.mxu0 0
    %1339 = vmatpush1.bf16.msra.mxu0 0
    %1340 = vmatprep.subr.bf16.mxu0 0
    %1341 = vmatpush1.bf16.msra.mxu0 0
    %1342 = vmatprep.subr.bf16.mxu0 0
    %1343 = vmatpush1.bf16.msra.mxu0 0
    %1344 = vmatprep.subr.bf16.mxu0 0
    %1345 = vmatpush1.bf16.msra.mxu0 0
    %1346 = vmatprep.subr.bf16.mxu0 0
    %1347 = vmatpush1.bf16.msra.mxu0 0
    %1348 = vmatprep.subr.bf16.mxu0 0
    %1349 = vmatpush1.bf16.msra.mxu0 0
    %1350 = vmatprep.subr.bf16.mxu0 0
    %1351 = vmatpush1.bf16.msra.mxu0 0
    %1352 = vmatprep.subr.bf16.mxu0 0
    %1353 = vmatpush1.bf16.msra.mxu0 0
    %1354 = vmatprep.subr.bf16.mxu0 0
    %1355 = vmatpush1.bf16.msra.mxu0 0
    %1356 = vmatprep.mubr.bf16.mxu0 0
    %1357 = vmatmul.mubr.bf16.gmra.mrb[0].mxu0 %v1322
    %v1358 = vpop.f32.mrb[0].mxu0
    %v1359 = vadd.f32 %v1307, %v1358
    %v1360 = vpop.f32.mrb[0].mxu0
    %v1361 = vpop.f32.mrb[0].mxu0
    %v1362 = vpop.f32.mrb[0].mxu0
    %1363 = vdwg.mxu0
    %v1364 = vmax.f32 %v1359, 0.0
    %v1365 = vpack.c.bf16 %v1364, %v1364
    %s1366 = scalar_lea.vmem [#allocation9], 64
    %v1367 = vld [vmem:[%s1366] sm:$0xf]
    %v1368 = vld [vmem:[%s1366 + $0x4] sm:$0xf]
    %v1369 = vld [vmem:[%s1366 + $0x8] sm:$0xf]
    %v1370 = vld [vmem:[%s1366 + $0xc] sm:$0xf]
    %s1371 = scalar_lea.vmem [#allocation10], 4
    %v1372 = vld [vmem:[%s1371] sm:$0x1]
    %v1374 = vlaneseq
    %v1375 = vshrl.u32 %v1374, 7
    %v1376 = vsub.s32 0, %v1375
    %v1377 = vrot.slane %v1372, %v1376
    %v1383 = vunpack.c.l.b16 %v1367
    %v1384 = vunpack.c.l.b16 %v1368
    %v1385 = vunpack.c.l.b16 %v1369
    %v1386 = vunpack.c.l.b16 %v1370
    %v1387 = vpack.c.b16 %v1384, %v1383
    %v1388 = vpack.c.b16 %v1386, %v1385
    %v1392 = vsel %vm349, %v1365, 0
    %1394 = vmatprep.subr.bf16.mxu0 0
    %1395 = vmatpush1.bf16.msra.mxu0 %v1387
    %1396 = vmatprep.subr.bf16.mxu0 0
    %1397 = vmatpush1.bf16.msra.mxu0 %v1388
    %1398 = vmatprep.subr.bf16.mxu0 0
    %1399 = vmatpush1.bf16.msra.mxu0 0
    %1400 = vmatprep.subr.bf16.mxu0 0
    %1401 = vmatpush1.bf16.msra.mxu0 0
    %1402 = vmatprep.subr.bf16.mxu0 0
    %1403 = vmatpush1.bf16.msra.mxu0 0
    %1404 = vmatprep.subr.bf16.mxu0 0
    %1405 = vmatpush1.bf16.msra.mxu0 0
    %1406 = vmatprep.subr.bf16.mxu0 0
    %1407 = vmatpush1.bf16.msra.mxu0 0
    %1408 = vmatprep.subr.bf16.mxu0 0
    %1409 = vmatpush1.bf16.msra.mxu0 0
    %1410 = vmatprep.subr.bf16.mxu0 0
    %1411 = vmatpush1.bf16.msra.mxu0 0
    %1412 = vmatprep.subr.bf16.mxu0 0
    %1413 = vmatpush1.bf16.msra.mxu0 0
    %1414 = vmatprep.subr.bf16.mxu0 0
    %1415 = vmatpush1.bf16.msra.mxu0 0
    %1416 = vmatprep.subr.bf16.mxu0 0
    %1417 = vmatpush1.bf16.msra.mxu0 0
    %1418 = vmatprep.subr.bf16.mxu0 0
    %1419 = vmatpush1.bf16.msra.mxu0 0
    %1420 = vmatprep.subr.bf16.mxu0 0
    %1421 = vmatpush1.bf16.msra.mxu0 0
    %1422 = vmatprep.subr.bf16.mxu0 0
    %1423 = vmatpush1.bf16.msra.mxu0 0
    %1424 = vmatprep.subr.bf16.mxu0 0
    %1425 = vmatpush1.bf16.msra.mxu0 0
    %1426 = vmatprep.mubr.bf16.mxu0 0
    %1427 = vmatmul.mubr.bf16.gmra.mrb[0].mxu0 %v1392
    %v1428 = vpop.f32.mrb[0].mxu0
    %v1429 = vadd.f32 %v1377, %v1428
    %v1430 = vpop.f32.mrb[0].mxu0
    %v1431 = vpop.f32.mrb[0].mxu0
    %v1432 = vpop.f32.mrb[0].mxu0
    %1433 = vdwg.mxu0
    %1435 = vrot.lane.b32.xlu0 %v271, 96
    %v1436 = vpop.permute.xlu0 %1435
    %v1438 = vmul.f32 %v1429, %v1436
    %v1439 = vadd.f32 %v1289, %v1438
    %v1440 = vmax.f32 %v1439, 0.0
    %v1441 = vpack.c.bf16 %v1440, %v1440
    %s1442 = scalar_lea.vmem %s5, 80
    %v1443 = vld [vmem:[%s1442] sm:$0xf]
    %v1444 = vld [vmem:[%s1442 + $0x4] sm:$0xf]
    %v1445 = vld [vmem:[%s1442 + $0x8] sm:$0xf]
    %v1446 = vld [vmem:[%s1442 + $0xc] sm:$0xf]
    %s1447 = scalar_lea.vmem [#allocation7], 5
    %v1448 = vld [vmem:[%s1447] sm:$0x1]
    %v1450 = vlaneseq
    %v1451 = vshrl.u32 %v1450, 7
    %v1452 = vsub.s32 0, %v1451
    %v1453 = vrot.slane %v1448, %v1452
    %v1459 = vunpack.c.l.b16 %v1443
    %v1460 = vunpack.c.l.b16 %v1444
    %v1461 = vunpack.c.l.b16 %v1445
    %v1462 = vunpack.c.l.b16 %v1446
    %v1463 = vpack.c.b16 %v1460, %v1459
    %v1464 = vpack.c.b16 %v1462, %v1461
    %v1468 = vsel %vm349, %v1441, 0
    %1470 = vmatprep.subr.bf16.mxu0 0
    %1471 = vmatpush1.bf16.msra.mxu0 %v1463
    %1472 = vmatprep.subr.bf16.mxu0 0
    %1473 = vmatpush1.bf16.msra.mxu0 %v1464
    %1474 = vmatprep.subr.bf16.mxu0 0
    %1475 = vmatpush1.bf16.msra.mxu0 0
    %1476 = vmatprep.subr.bf16.mxu0 0
    %1477 = vmatpush1.bf16.msra.mxu0 0
    %1478 = vmatprep.subr.bf16.mxu0 0
    %1479 = vmatpush1.bf16.msra.mxu0 0
    %1480 = vmatprep.subr.bf16.mxu0 0
    %1481 = vmatpush1.bf16.msra.mxu0 0
    %1482 = vmatprep.subr.bf16.mxu0 0
    %1483 = vmatpush1.bf16.msra.mxu0 0
    %1484 = vmatprep.subr.bf16.mxu0 0
    %1485 = vmatpush1.bf16.msra.mxu0 0
    %1486 = vmatprep.subr.bf16.mxu0 0
    %1487 = vmatpush1.bf16.msra.mxu0 0
    %1488 = vmatprep.subr.bf16.mxu0 0
    %1489 = vmatpush1.bf16.msra.mxu0 0
    %1490 = vmatprep.subr.bf16.mxu0 0
    %1491 = vmatpush1.bf16.msra.mxu0 0
    %1492 = vmatprep.subr.bf16.mxu0 0
    %1493 = vmatpush1.bf16.msra.mxu0 0
    %1494 = vmatprep.subr.bf16.mxu0 0
    %1495 = vmatpush1.bf16.msra.mxu0 0
    %1496 = vmatprep.subr.bf16.mxu0 0
    %1497 = vmatpush1.bf16.msra.mxu0 0
    %1498 = vmatprep.subr.bf16.mxu0 0
    %1499 = vmatpush1.bf16.msra.mxu0 0
    %1500 = vmatprep.subr.bf16.mxu0 0
    %1501 = vmatpush1.bf16.msra.mxu0 0
    %1502 = vmatprep.mubr.bf16.mxu0 0
    %1503 = vmatmul.mubr.bf16.gmra.mrb[0].mxu0 %v1468
    %v1504 = vpop.f32.mrb[0].mxu0
    %v1505 = vadd.f32 %v1453, %v1504
    %v1506 = vpop.f32.mrb[0].mxu0
    %v1507 = vpop.f32.mrb[0].mxu0
    %v1508 = vpop.f32.mrb[0].mxu0
    %1509 = vdwg.mxu0
    %v1510 = vmax.f32 %v1505, 0.0
    %v1511 = vpack.c.bf16 %v1510, %v1510
    %s1512 = scalar_lea.vmem [#allocation9], 80
    %v1513 = vld [vmem:[%s1512] sm:$0xf]
    %v1514 = vld [vmem:[%s1512 + $0x4] sm:$0xf]
    %v1515 = vld [vmem:[%s1512 + $0x8] sm:$0xf]
    %v1516 = vld [vmem:[%s1512 + $0xc] sm:$0xf]
    %s1517 = scalar_lea.vmem [#allocation10], 5
    %v1518 = vld [vmem:[%s1517] sm:$0x1]
    %v1520 = vlaneseq
    %v1521 = vshrl.u32 %v1520, 7
    %v1522 = vsub.s32 0, %v1521
    %v1523 = vrot.slane %v1518, %v1522
    %v1529 = vunpack.c.l.b16 %v1513
    %v1530 = vunpack.c.l.b16 %v1514
    %v1531 = vunpack.c.l.b16 %v1515
    %v1532 = vunpack.c.l.b16 %v1516
    %v1533 = vpack.c.b16 %v1530, %v1529
    %v1534 = vpack.c.b16 %v1532, %v1531
    %v1538 = vsel %vm349, %v1511, 0
    %1540 = vmatprep.subr.bf16.mxu0 0
    %1541 = vmatpush1.bf16.msra.mxu0 %v1533
    %1542 = vmatprep.subr.bf16.mxu0 0
    %1543 = vmatpush1.bf16.msra.mxu0 %v1534
    %1544 = vmatprep.subr.bf16.mxu0 0
    %1545 = vmatpush1.bf16.msra.mxu0 0
    %1546 = vmatprep.subr.bf16.mxu0 0
    %1547 = vmatpush1.bf16.msra.mxu0 0
    %1548 = vmatprep.subr.bf16.mxu0 0
    %1549 = vmatpush1.bf16.msra.mxu0 0
    %1550 = vmatprep.subr.bf16.mxu0 0
    %1551 = vmatpush1.bf16.msra.mxu0 0
    %1552 = vmatprep.subr.bf16.mxu0 0
    %1553 = vmatpush1.bf16.msra.mxu0 0
    %1554 = vmatprep.subr.bf16.mxu0 0
    %1555 = vmatpush1.bf16.msra.mxu0 0
    %1556 = vmatprep.subr.bf16.mxu0 0
    %1557 = vmatpush1.bf16.msra.mxu0 0
    %1558 = vmatprep.subr.bf16.mxu0 0
    %1559 = vmatpush1.bf16.msra.mxu0 0
    %1560 = vmatprep.subr.bf16.mxu0 0
    %1561 = vmatpush1.bf16.msra.mxu0 0
    %1562 = vmatprep.subr.bf16.mxu0 0
    %1563 = vmatpush1.bf16.msra.mxu0 0
    %1564 = vmatprep.subr.bf16.mxu0 0
    %1565 = vmatpush1.bf16.msra.mxu0 0
    %1566 = vmatprep.subr.bf16.mxu0 0
    %1567 = vmatpush1.bf16.msra.mxu0 0
    %1568 = vmatprep.subr.bf16.mxu0 0
    %1569 = vmatpush1.bf16.msra.mxu0 0
    %1570 = vmatprep.subr.bf16.mxu0 0
    %1571 = vmatpush1.bf16.msra.mxu0 0
    %1572 = vmatprep.mubr.bf16.mxu0 0
    %1573 = vmatmul.mubr.bf16.gmra.mrb[0].mxu0 %v1538
    %v1574 = vpop.f32.mrb[0].mxu0
    %v1575 = vadd.f32 %v1523, %v1574
    %v1576 = vpop.f32.mrb[0].mxu0
    %v1577 = vpop.f32.mrb[0].mxu0
    %v1578 = vpop.f32.mrb[0].mxu0
    %1579 = vdwg.mxu0
    %1580 = vrot.lane.b32.xlu0 %v271, 64
    %v1581 = vpop.permute.xlu0 %1580
    %v1583 = vmul.f32 %v1575, %v1581
    %v1584 = vadd.f32 %v1439, %v1583
    %v1585 = vpack.c.bf16 %v1584, %v1584
    %s1586 = scalar_lea.vmem %s9, 32
    %v1587 = vld [vmem:[%s1586] sm:$0xf]
    %v1588 = vld [vmem:[%s1586 + $0x4] sm:$0xf]
    %v1589 = vld [vmem:[%s1586 + $0x8] sm:$0xf]
    %v1590 = vld [vmem:[%s1586 + $0xc] sm:$0xf]
    %s1591 = scalar_lea.vmem %s10, 2
    %v1592 = vld [vmem:[%s1591] sm:$0x1]
    %v1594 = vlaneseq
    %v1595 = vshrl.u32 %v1594, 7
    %v1596 = vsub.s32 0, %v1595
    %v1597 = vrot.slane %v1592, %v1596
    %v1603 = vunpack.c.l.b16 %v1587
    %v1604 = vunpack.c.l.b16 %v1588
    %v1605 = vunpack.c.l.b16 %v1589
    %v1606 = vunpack.c.l.b16 %v1590
    %v1607 = vpack.c.b16 %v1604, %v1603
    %v1608 = vpack.c.b16 %v1606, %v1605
    %v1612 = vsel %vm349, %v1585, 0
    %1614 = vmatprep.subr.bf16.mxu0 0
    %1615 = vmatpush1.bf16.msra.mxu0 %v1607
    %1616 = vmatprep.subr.bf16.mxu0 0
    %1617 = vmatpush1.bf16.msra.mxu0 %v1608
    %1618 = vmatprep.subr.bf16.mxu0 0
    %1619 = vmatpush1.bf16.msra.mxu0 0
    %1620 = vmatprep.subr.bf16.mxu0 0
    %1621 = vmatpush1.bf16.msra.mxu0 0
    %1622 = vmatprep.subr.bf16.mxu0 0
    %1623 = vmatpush1.bf16.msra.mxu0 0
    %1624 = vmatprep.subr.bf16.mxu0 0
    %1625 = vmatpush1.bf16.msra.mxu0 0
    %1626 = vmatprep.subr.bf16.mxu0 0
    %1627 = vmatpush1.bf16.msra.mxu0 0
    %1628 = vmatprep.subr.bf16.mxu0 0
    %1629 = vmatpush1.bf16.msra.mxu0 0
    %1630 = vmatprep.subr.bf16.mxu0 0
    %1631 = vmatpush1.bf16.msra.mxu0 0
    %1632 = vmatprep.subr.bf16.mxu0 0
    %1633 = vmatpush1.bf16.msra.mxu0 0
    %1634 = vmatprep.subr.bf16.mxu0 0
    %1635 = vmatpush1.bf16.msra.mxu0 0
    %1636 = vmatprep.subr.bf16.mxu0 0
    %1637 = vmatpush1.bf16.msra.mxu0 0
    %1638 = vmatprep.subr.bf16.mxu0 0
    %1639 = vmatpush1.bf16.msra.mxu0 0
    %1640 = vmatprep.subr.bf16.mxu0 0
    %1641 = vmatpush1.bf16.msra.mxu0 0
    %1642 = vmatprep.subr.bf16.mxu0 0
    %1643 = vmatpush1.bf16.msra.mxu0 0
    %1644 = vmatprep.subr.bf16.mxu0 0
    %1645 = vmatpush1.bf16.msra.mxu0 0
    %1646 = vmatprep.mubr.bf16.mxu0 0
    %1647 = vmatmul.mubr.bf16.gmra.mrb[0].mxu0 %v1612
    %v1648 = vpop.f32.mrb[0].mxu0
    %v1649 = vadd.f32 %v1597, %v1648
    %v1650 = vpop.f32.mrb[0].mxu0
    %v1651 = vpop.f32.mrb[0].mxu0
    %v1652 = vpop.f32.mrb[0].mxu0
    %1653 = vdwg.mxu0
    %s1654 = scalar_lea.vmem %s11, 32
    %v1655 = vld [vmem:[%s1654] sm:$0xf]
    %v1656 = vld [vmem:[%s1654 + $0x4] sm:$0xf]
    %v1657 = vld [vmem:[%s1654 + $0x8] sm:$0xf]
    %v1658 = vld [vmem:[%s1654 + $0xc] sm:$0xf]
    %s1659 = scalar_lea.vmem %s12, 2
    %v1660 = vld [vmem:[%s1659] sm:$0x1]
    %v1662 = vlaneseq
    %v1663 = vshrl.u32 %v1662, 7
    %v1664 = vsub.s32 0, %v1663
    %v1665 = vrot.slane %v1660, %v1664
    %v1671 = vunpack.c.l.b16 %v1655
    %v1672 = vunpack.c.l.b16 %v1656
    %v1673 = vunpack.c.l.b16 %v1657
    %v1674 = vunpack.c.l.b16 %v1658
    %v1675 = vpack.c.b16 %v1672, %v1671
    %v1676 = vpack.c.b16 %v1674, %v1673
    %1679 = vmatprep.subr.bf16.mxu0 0
    %1680 = vmatpush1.bf16.msra.mxu0 %v1675
    %1681 = vmatprep.subr.bf16.mxu0 0
    %1682 = vmatpush1.bf16.msra.mxu0 %v1676
    %1683 = vmatprep.subr.bf16.mxu0 0
    %1684 = vmatpush1.bf16.msra.mxu0 0
    %1685 = vmatprep.subr.bf16.mxu0 0
    %1686 = vmatpush1.bf16.msra.mxu0 0
    %1687 = vmatprep.subr.bf16.mxu0 0
    %1688 = vmatpush1.bf16.msra.mxu0 0
    %1689 = vmatprep.subr.bf16.mxu0 0
    %1690 = vmatpush1.bf16.msra.mxu0 0
    %1691 = vmatprep.subr.bf16.mxu0 0
    %1692 = vmatpush1.bf16.msra.mxu0 0
    %1693 = vmatprep.subr.bf16.mxu0 0
    %1694 = vmatpush1.bf16.msra.mxu0 0
    %1695 = vmatprep.subr.bf16.mxu0 0
    %1696 = vmatpush1.bf16.msra.mxu0 0
    %1697 = vmatprep.subr.bf16.mxu0 0
    %1698 = vmatpush1.bf16.msra.mxu0 0
    %1699 = vmatprep.subr.bf16.mxu0 0
    %1700 = vmatpush1.bf16.msra.mxu0 0
    %1701 = vmatprep.subr.bf16.mxu0 0
    %1702 = vmatpush1.bf16.msra.mxu0 0
    %1703 = vmatprep.subr.bf16.mxu0 0
    %1704 = vmatpush1.bf16.msra.mxu0 0
    %1705 = vmatprep.subr.bf16.mxu0 0
    %1706 = vmatpush1.bf16.msra.mxu0 0
    %1707 = vmatprep.subr.bf16.mxu0 0
    %1708 = vmatpush1.bf16.msra.mxu0 0
    %1709 = vmatprep.subr.bf16.mxu0 0
    %1710 = vmatpush1.bf16.msra.mxu0 0
    %1711 = vmatprep.mubr.bf16.mxu0 0
    %1712 = vmatmul.mubr.bf16.gmra.mrb[0].mxu0 %v1612
    %v1713 = vpop.f32.mrb[0].mxu0
    %v1714 = vadd.f32 %v1665, %v1713
    %v1715 = vpop.f32.mrb[0].mxu0
    %v1716 = vpop.f32.mrb[0].mxu0
    %v1717 = vpop.f32.mrb[0].mxu0
    %1718 = vdwg.mxu0
    %v1719 = vadd.f32 %v1649, 2.0
    %v1720 = vsub.f32 0.0, %v1719
    %v1721 = vmul.f32 %v1720, 1.442695
    %v1722 = vpow.pop %v1721
    %v1723 = vadd.f32 %v1722, 1.0
    %v1724 = vrcp.pop %v1723
    %v1725 = vmul.f32 1.0, %v1724
    %v1726 = vadd.f32 %v1725, 0.001
    %v1727 = vmul.f32 %v1726, %v1238
    %v1728 = vadd.f32 %v1727, %v1714
    %v1729 = vlog2.pop %v1726
    %v1730 = vmul.f32 %v1729, 0.6931472
    %v1731 = vadd.f32 %v1241, %v1730
    %v1732 = vpack.c.bf16 %v1728, %v1728
    %s1733 = scalar_lea.vmem %s2, 12
    %v1734 = vld [vmem:[%s1733] sm:$0xf]
    %1735 = vrot.lane.b32.xlu0 %v209, 32
    %v1736 = vpop.permute.xlu0 %1735
    %v1739 = vsel %vm276, %v1732, 0
    %v1742 = vsel %vm280, %v1734, 0
    %1744 = vmatprep.subr.bf16.mxu0 0
    %1745 = vmatpush1.bf16.msra.mxu0 %v1742
    %1746 = vmatprep.subr.bf16.mxu0 0
    %1747 = vmatpush1.bf16.msra.mxu0 0
    %1748 = vmatprep.subr.bf16.mxu0 0
    %1749 = vmatpush1.bf16.msra.mxu0 0
    %1750 = vmatprep.subr.bf16.mxu0 0
    %1751 = vmatpush1.bf16.msra.mxu0 0
    %1752 = vmatprep.subr.bf16.mxu0 0
    %1753 = vmatpush1.bf16.msra.mxu0 0
    %1754 = vmatprep.subr.bf16.mxu0 0
    %1755 = vmatpush1.bf16.msra.mxu0 0
    %1756 = vmatprep.subr.bf16.mxu0 0
    %1757 = vmatpush1.bf16.msra.mxu0 0
    %1758 = vmatprep.subr.bf16.mxu0 0
    %1759 = vmatpush1.bf16.msra.mxu0 0
    %1760 = vmatprep.subr.bf16.mxu0 0
    %1761 = vmatpush1.bf16.msra.mxu0 0
    %1762 = vmatprep.subr.bf16.mxu0 0
    %1763 = vmatpush1.bf16.msra.mxu0 0
    %1764 = vmatprep.subr.bf16.mxu0 0
    %1765 = vmatpush1.bf16.msra.mxu0 0
    %1766 = vmatprep.subr.bf16.mxu0 0
    %1767 = vmatpush1.bf16.msra.mxu0 0
    %1768 = vmatprep.subr.bf16.mxu0 0
    %1769 = vmatpush1.bf16.msra.mxu0 0
    %1770 = vmatprep.subr.bf16.mxu0 0
    %1771 = vmatpush1.bf16.msra.mxu0 0
    %1772 = vmatprep.subr.bf16.mxu0 0
    %1773 = vmatpush1.bf16.msra.mxu0 0
    %1774 = vmatprep.subr.bf16.mxu0 0
    %1775 = vmatpush1.bf16.msra.mxu0 0
    %1776 = vmatprep.mubr.bf16.mxu0 0
    %1777 = vmatmul.mubr.bf16.gmra.mrb[0].mxu0 %v1739
    %v1778 = vpop.f32.mrb[0].mxu0
    %v1779 = vadd.f32 %v1736, %v1778
    %v1780 = vpop.f32.mrb[0].mxu0
    %v1781 = vpop.f32.mrb[0].mxu0
    %v1782 = vpop.f32.mrb[0].mxu0
    %1783 = vdwg.mxu0
    %v1784 = vmax.f32 %v1779, 0.0
    %v1785 = vpack.c.bf16 %v1784, %v1784
    %s1786 = scalar_lea.vmem %s5, 96
    %v1787 = vld [vmem:[%s1786] sm:$0xf]
    %v1788 = vld [vmem:[%s1786 + $0x4] sm:$0xf]
    %v1789 = vld [vmem:[%s1786 + $0x8] sm:$0xf]
    %v1790 = vld [vmem:[%s1786 + $0xc] sm:$0xf]
    %s1791 = scalar_lea.vmem [#allocation7], 6
    %v1792 = vld [vmem:[%s1791] sm:$0x1]
    %v1794 = vlaneseq
    %v1795 = vshrl.u32 %v1794, 7
    %v1796 = vsub.s32 0, %v1795
    %v1797 = vrot.slane %v1792, %v1796
    %v1803 = vunpack.c.l.b16 %v1787
    %v1804 = vunpack.c.l.b16 %v1788
    %v1805 = vunpack.c.l.b16 %v1789
    %v1806 = vunpack.c.l.b16 %v1790
    %v1807 = vpack.c.b16 %v1804, %v1803
    %v1808 = vpack.c.b16 %v1806, %v1805
    %v1812 = vsel %vm349, %v1785, 0
    %1814 = vmatprep.subr.bf16.mxu0 0
    %1815 = vmatpush1.bf16.msra.mxu0 %v1807
    %1816 = vmatprep.subr.bf16.mxu0 0
    %1817 = vmatpush1.bf16.msra.mxu0 %v1808
    %1818 = vmatprep.subr.bf16.mxu0 0
    %1819 = vmatpush1.bf16.msra.mxu0 0
    %1820 = vmatprep.subr.bf16.mxu0 0
    %1821 = vmatpush1.bf16.msra.mxu0 0
    %1822 = vmatprep.subr.bf16.mxu0 0
    %1823 = vmatpush1.bf16.msra.mxu0 0
    %1824 = vmatprep.subr.bf16.mxu0 0
    %1825 = vmatpush1.bf16.msra.mxu0 0
    %1826 = vmatprep.subr.bf16.mxu0 0
    %1827 = vmatpush1.bf16.msra.mxu0 0
    %1828 = vmatprep.subr.bf16.mxu0 0
    %1829 = vmatpush1.bf16.msra.mxu0 0
    %1830 = vmatprep.subr.bf16.mxu0 0
    %1831 = vmatpush1.bf16.msra.mxu0 0
    %1832 = vmatprep.subr.bf16.mxu0 0
    %1833 = vmatpush1.bf16.msra.mxu0 0
    %1834 = vmatprep.subr.bf16.mxu0 0
    %1835 = vmatpush1.bf16.msra.mxu0 0
    %1836 = vmatprep.subr.bf16.mxu0 0
    %1837 = vmatpush1.bf16.msra.mxu0 0
    %1838 = vmatprep.subr.bf16.mxu0 0
    %1839 = vmatpush1.bf16.msra.mxu0 0
    %1840 = vmatprep.subr.bf16.mxu0 0
    %1841 = vmatpush1.bf16.msra.mxu0 0
    %1842 = vmatprep.subr.bf16.mxu0 0
    %1843 = vmatpush1.bf16.msra.mxu0 0
    %1844 = vmatprep.subr.bf16.mxu0 0
    %1845 = vmatpush1.bf16.msra.mxu0 0
    %1846 = vmatprep.mubr.bf16.mxu0 0
    %1847 = vmatmul.mubr.bf16.gmra.mrb[0].mxu0 %v1812
    %v1848 = vpop.f32.mrb[0].mxu0
    %v1849 = vadd.f32 %v1797, %v1848
    %v1850 = vpop.f32.mrb[0].mxu0
    %v1851 = vpop.f32.mrb[0].mxu0
    %v1852 = vpop.f32.mrb[0].mxu0
    %1853 = vdwg.mxu0
    %v1854 = vmax.f32 %v1849, 0.0
    %v1855 = vpack.c.bf16 %v1854, %v1854
    %s1856 = scalar_lea.vmem [#allocation9], 96
    %v1857 = vld [vmem:[%s1856] sm:$0xf]
    %v1858 = vld [vmem:[%s1856 + $0x4] sm:$0xf]
    %v1859 = vld [vmem:[%s1856 + $0x8] sm:$0xf]
    %v1860 = vld [vmem:[%s1856 + $0xc] sm:$0xf]
    %s1861 = scalar_lea.vmem [#allocation10], 6
    %v1862 = vld [vmem:[%s1861] sm:$0x1]
    %v1864 = vlaneseq
    %v1865 = vshrl.u32 %v1864, 7
    %v1866 = vsub.s32 0, %v1865
    %v1867 = vrot.slane %v1862, %v1866
    %v1873 = vunpack.c.l.b16 %v1857
    %v1874 = vunpack.c.l.b16 %v1858
    %v1875 = vunpack.c.l.b16 %v1859
    %v1876 = vunpack.c.l.b16 %v1860
    %v1877 = vpack.c.b16 %v1874, %v1873
    %v1878 = vpack.c.b16 %v1876, %v1875
    %v1882 = vsel %vm349, %v1855, 0
    %1884 = vmatprep.subr.bf16.mxu0 0
    %1885 = vmatpush1.bf16.msra.mxu0 %v1877
    %1886 = vmatprep.subr.bf16.mxu0 0
    %1887 = vmatpush1.bf16.msra.mxu0 %v1878
    %1888 = vmatprep.subr.bf16.mxu0 0
    %1889 = vmatpush1.bf16.msra.mxu0 0
    %1890 = vmatprep.subr.bf16.mxu0 0
    %1891 = vmatpush1.bf16.msra.mxu0 0
    %1892 = vmatprep.subr.bf16.mxu0 0
    %1893 = vmatpush1.bf16.msra.mxu0 0
    %1894 = vmatprep.subr.bf16.mxu0 0
    %1895 = vmatpush1.bf16.msra.mxu0 0
    %1896 = vmatprep.subr.bf16.mxu0 0
    %1897 = vmatpush1.bf16.msra.mxu0 0
    %1898 = vmatprep.subr.bf16.mxu0 0
    %1899 = vmatpush1.bf16.msra.mxu0 0
    %1900 = vmatprep.subr.bf16.mxu0 0
    %1901 = vmatpush1.bf16.msra.mxu0 0
    %1902 = vmatprep.subr.bf16.mxu0 0
    %1903 = vmatpush1.bf16.msra.mxu0 0
    %1904 = vmatprep.subr.bf16.mxu0 0
    %1905 = vmatpush1.bf16.msra.mxu0 0
    %1906 = vmatprep.subr.bf16.mxu0 0
    %1907 = vmatpush1.bf16.msra.mxu0 0
    %1908 = vmatprep.subr.bf16.mxu0 0
    %1909 = vmatpush1.bf16.msra.mxu0 0
    %1910 = vmatprep.subr.bf16.mxu0 0
    %1911 = vmatpush1.bf16.msra.mxu0 0
    %1912 = vmatprep.subr.bf16.mxu0 0
    %1913 = vmatpush1.bf16.msra.mxu0 0
    %1914 = vmatprep.subr.bf16.mxu0 0
    %1915 = vmatpush1.bf16.msra.mxu0 0
    %1916 = vmatprep.mubr.bf16.mxu0 0
    %1917 = vmatmul.mubr.bf16.gmra.mrb[0].mxu0 %v1882
    %v1918 = vpop.f32.mrb[0].mxu0
    %v1919 = vadd.f32 %v1867, %v1918
    %v1920 = vpop.f32.mrb[0].mxu0
    %v1921 = vpop.f32.mrb[0].mxu0
    %v1922 = vpop.f32.mrb[0].mxu0
    %1923 = vdwg.mxu0
    %1924 = vrot.lane.b32.xlu0 %v271, 32
    %v1925 = vpop.permute.xlu0 %1924
    %v1927 = vmul.f32 %v1919, %v1925
    %v1928 = vadd.f32 %v1779, %v1927
    %v1929 = vmax.f32 %v1928, 0.0
    %v1930 = vpack.c.bf16 %v1929, %v1929
    %s1931 = scalar_lea.vmem %s5, 112
    %v1932 = vld [vmem:[%s1931] sm:$0xf]
    %v1933 = vld [vmem:[%s1931 + $0x4] sm:$0xf]
    %v1934 = vld [vmem:[%s1931 + $0x8] sm:$0xf]
    %v1935 = vld [vmem:[%s1931 + $0xc] sm:$0xf]
    %s1936 = scalar_lea.vmem [#allocation7], 7
    %v1937 = vld [vmem:[%s1936] sm:$0x1]
    %v1939 = vlaneseq
    %v1940 = vshrl.u32 %v1939, 7
    %v1941 = vsub.s32 0, %v1940
    %v1942 = vrot.slane %v1937, %v1941
    %v1948 = vunpack.c.l.b16 %v1932
    %v1949 = vunpack.c.l.b16 %v1933
    %v1950 = vunpack.c.l.b16 %v1934
    %v1951 = vunpack.c.l.b16 %v1935
    %v1952 = vpack.c.b16 %v1949, %v1948
    %v1953 = vpack.c.b16 %v1951, %v1950
    %v1957 = vsel %vm349, %v1930, 0
    %1959 = vmatprep.subr.bf16.mxu0 0
    %1960 = vmatpush1.bf16.msra.mxu0 %v1952
    %1961 = vmatprep.subr.bf16.mxu0 0
    %1962 = vmatpush1.bf16.msra.mxu0 %v1953
    %1963 = vmatprep.subr.bf16.mxu0 0
    %1964 = vmatpush1.bf16.msra.mxu0 0
    %1965 = vmatprep.subr.bf16.mxu0 0
    %1966 = vmatpush1.bf16.msra.mxu0 0
    %1967 = vmatprep.subr.bf16.mxu0 0
    %1968 = vmatpush1.bf16.msra.mxu0 0
    %1969 = vmatprep.subr.bf16.mxu0 0
    %1970 = vmatpush1.bf16.msra.mxu0 0
    %1971 = vmatprep.subr.bf16.mxu0 0
    %1972 = vmatpush1.bf16.msra.mxu0 0
    %1973 = vmatprep.subr.bf16.mxu0 0
    %1974 = vmatpush1.bf16.msra.mxu0 0
    %1975 = vmatprep.subr.bf16.mxu0 0
    %1976 = vmatpush1.bf16.msra.mxu0 0
    %1977 = vmatprep.subr.bf16.mxu0 0
    %1978 = vmatpush1.bf16.msra.mxu0 0
    %1979 = vmatprep.subr.bf16.mxu0 0
    %1980 = vmatpush1.bf16.msra.mxu0 0
    %1981 = vmatprep.subr.bf16.mxu0 0
    %1982 = vmatpush1.bf16.msra.mxu0 0
    %1983 = vmatprep.subr.bf16.mxu0 0
    %1984 = vmatpush1.bf16.msra.mxu0 0
    %1985 = vmatprep.subr.bf16.mxu0 0
    %1986 = vmatpush1.bf16.msra.mxu0 0
    %1987 = vmatprep.subr.bf16.mxu0 0
    %1988 = vmatpush1.bf16.msra.mxu0 0
    %1989 = vmatprep.subr.bf16.mxu0 0
    %1990 = vmatpush1.bf16.msra.mxu0 0
    %1991 = vmatprep.mubr.bf16.mxu0 0
    %1992 = vmatmul.mubr.bf16.gmra.mrb[0].mxu0 %v1957
    %v1993 = vpop.f32.mrb[0].mxu0
    %v1994 = vadd.f32 %v1942, %v1993
    %v1995 = vpop.f32.mrb[0].mxu0
    %v1996 = vpop.f32.mrb[0].mxu0
    %v1997 = vpop.f32.mrb[0].mxu0
    %1998 = vdwg.mxu0
    %v1999 = vmax.f32 %v1994, 0.0
    %v2000 = vpack.c.bf16 %v1999, %v1999
    %s2001 = scalar_lea.vmem [#allocation9], 112
    %v2002 = vld [vmem:[%s2001] sm:$0xf]
    %v2003 = vld [vmem:[%s2001 + $0x4] sm:$0xf]
    %v2004 = vld [vmem:[%s2001 + $0x8] sm:$0xf]
    %v2005 = vld [vmem:[%s2001 + $0xc] sm:$0xf]
    %s2006 = scalar_lea.vmem [#allocation10], 7
    %v2007 = vld [vmem:[%s2006] sm:$0x1]
    %v2009 = vlaneseq
    %v2010 = vshrl.u32 %v2009, 7
    %v2011 = vsub.s32 0, %v2010
    %v2012 = vrot.slane %v2007, %v2011
    %v2018 = vunpack.c.l.b16 %v2002
    %v2019 = vunpack.c.l.b16 %v2003
    %v2020 = vunpack.c.l.b16 %v2004
    %v2021 = vunpack.c.l.b16 %v2005
    %v2022 = vpack.c.b16 %v2019, %v2018
    %v2023 = vpack.c.b16 %v2021, %v2020
    %v2027 = vsel %vm349, %v2000, 0
    %2029 = vmatprep.subr.bf16.mxu0 0
    %2030 = vmatpush1.bf16.msra.mxu0 %v2022
    %2031 = vmatprep.subr.bf16.mxu0 0
    %2032 = vmatpush1.bf16.msra.mxu0 %v2023
    %2033 = vmatprep.subr.bf16.mxu0 0
    %2034 = vmatpush1.bf16.msra.mxu0 0
    %2035 = vmatprep.subr.bf16.mxu0 0
    %2036 = vmatpush1.bf16.msra.mxu0 0
    %2037 = vmatprep.subr.bf16.mxu0 0
    %2038 = vmatpush1.bf16.msra.mxu0 0
    %2039 = vmatprep.subr.bf16.mxu0 0
    %2040 = vmatpush1.bf16.msra.mxu0 0
    %2041 = vmatprep.subr.bf16.mxu0 0
    %2042 = vmatpush1.bf16.msra.mxu0 0
    %2043 = vmatprep.subr.bf16.mxu0 0
    %2044 = vmatpush1.bf16.msra.mxu0 0
    %2045 = vmatprep.subr.bf16.mxu0 0
    %2046 = vmatpush1.bf16.msra.mxu0 0
    %2047 = vmatprep.subr.bf16.mxu0 0
    %2048 = vmatpush1.bf16.msra.mxu0 0
    %2049 = vmatprep.subr.bf16.mxu0 0
    %2050 = vmatpush1.bf16.msra.mxu0 0
    %2051 = vmatprep.subr.bf16.mxu0 0
    %2052 = vmatpush1.bf16.msra.mxu0 0
    %2053 = vmatprep.subr.bf16.mxu0 0
    %2054 = vmatpush1.bf16.msra.mxu0 0
    %2055 = vmatprep.subr.bf16.mxu0 0
    %2056 = vmatpush1.bf16.msra.mxu0 0
    %2057 = vmatprep.subr.bf16.mxu0 0
    %2058 = vmatpush1.bf16.msra.mxu0 0
    %2059 = vmatprep.subr.bf16.mxu0 0
    %2060 = vmatpush1.bf16.msra.mxu0 0
    %2061 = vmatprep.mubr.bf16.mxu0 0
    %2062 = vmatmul.mubr.bf16.gmra.mrb[0].mxu0 %v2027
    %v2063 = vpop.f32.mrb[0].mxu0
    %v2064 = vadd.f32 %v2012, %v2063
    %v2065 = vpop.f32.mrb[0].mxu0
    %v2066 = vpop.f32.mrb[0].mxu0
    %v2067 = vpop.f32.mrb[0].mxu0
    %2068 = vdwg.mxu0
    %v2069 = vmul.f32 %v2064, %v273
    %v2070 = vadd.f32 %v1928, %v2069
    %v2071 = vpack.c.bf16 %v2070, %v2070
    %s2072 = scalar_lea.vmem %s9, 48
    %v2073 = vld [vmem:[%s2072] sm:$0xf]
    %v2074 = vld [vmem:[%s2072 + $0x4] sm:$0xf]
    %v2075 = vld [vmem:[%s2072 + $0x8] sm:$0xf]
    %v2076 = vld [vmem:[%s2072 + $0xc] sm:$0xf]
    %s2077 = scalar_lea.vmem %s10, 3
    %v2078 = vld [vmem:[%s2077] sm:$0x1]
    %v2080 = vlaneseq
    %v2081 = vshrl.u32 %v2080, 7
    %v2082 = vsub.s32 0, %v2081
    %v2083 = vrot.slane %v2078, %v2082
    %v2089 = vunpack.c.l.b16 %v2073
    %v2090 = vunpack.c.l.b16 %v2074
    %v2091 = vunpack.c.l.b16 %v2075
    %v2092 = vunpack.c.l.b16 %v2076
    %v2093 = vpack.c.b16 %v2090, %v2089
    %v2094 = vpack.c.b16 %v2092, %v2091
    %v2098 = vsel %vm349, %v2071, 0
    %2100 = vmatprep.subr.bf16.mxu0 0
    %2101 = vmatpush1.bf16.msra.mxu0 %v2093
    %2102 = vmatprep.subr.bf16.mxu0 0
    %2103 = vmatpush1.bf16.msra.mxu0 %v2094
    %2104 = vmatprep.subr.bf16.mxu0 0
    %2105 = vmatpush1.bf16.msra.mxu0 0
    %2106 = vmatprep.subr.bf16.mxu0 0
    %2107 = vmatpush1.bf16.msra.mxu0 0
    %2108 = vmatprep.subr.bf16.mxu0 0
    %2109 = vmatpush1.bf16.msra.mxu0 0
    %2110 = vmatprep.subr.bf16.mxu0 0
    %2111 = vmatpush1.bf16.msra.mxu0 0
    %2112 = vmatprep.subr.bf16.mxu0 0
    %2113 = vmatpush1.bf16.msra.mxu0 0
    %2114 = vmatprep.subr.bf16.mxu0 0
    %2115 = vmatpush1.bf16.msra.mxu0 0
    %2116 = vmatprep.subr.bf16.mxu0 0
    %2117 = vmatpush1.bf16.msra.mxu0 0
    %2118 = vmatprep.subr.bf16.mxu0 0
    %2119 = vmatpush1.bf16.msra.mxu0 0
    %2120 = vmatprep.subr.bf16.mxu0 0
    %2121 = vmatpush1.bf16.msra.mxu0 0
    %2122 = vmatprep.subr.bf16.mxu0 0
    %2123 = vmatpush1.bf16.msra.mxu0 0
    %2124 = vmatprep.subr.bf16.mxu0 0
    %2125 = vmatpush1.bf16.msra.mxu0 0
    %2126 = vmatprep.subr.bf16.mxu0 0
    %2127 = vmatpush1.bf16.msra.mxu0 0
    %2128 = vmatprep.subr.bf16.mxu0 0
    %2129 = vmatpush1.bf16.msra.mxu0 0
    %2130 = vmatprep.subr.bf16.mxu0 0
    %2131 = vmatpush1.bf16.msra.mxu0 0
    %2132 = vmatprep.mubr.bf16.mxu0 0
    %2133 = vmatmul.mubr.bf16.gmra.mrb[0].mxu0 %v2098
    %v2134 = vpop.f32.mrb[0].mxu0
    %v2135 = vadd.f32 %v2083, %v2134
    %v2136 = vpop.f32.mrb[0].mxu0
    %v2137 = vpop.f32.mrb[0].mxu0
    %v2138 = vpop.f32.mrb[0].mxu0
    %2139 = vdwg.mxu0
    %s2140 = scalar_lea.vmem %s11, 48
    %v2141 = vld [vmem:[%s2140] sm:$0xf]
    %v2142 = vld [vmem:[%s2140 + $0x4] sm:$0xf]
    %v2143 = vld [vmem:[%s2140 + $0x8] sm:$0xf]
    %v2144 = vld [vmem:[%s2140 + $0xc] sm:$0xf]
    %s2145 = scalar_lea.vmem %s12, 3
    %v2146 = vld [vmem:[%s2145] sm:$0x1]
    %v2148 = vlaneseq
    %v2149 = vshrl.u32 %v2148, 7
    %v2150 = vsub.s32 0, %v2149
    %v2151 = vrot.slane %v2146, %v2150
    %v2157 = vunpack.c.l.b16 %v2141
    %v2158 = vunpack.c.l.b16 %v2142
    %v2159 = vunpack.c.l.b16 %v2143
    %v2160 = vunpack.c.l.b16 %v2144
    %v2161 = vpack.c.b16 %v2158, %v2157
    %v2162 = vpack.c.b16 %v2160, %v2159
    %2165 = vmatprep.subr.bf16.mxu0 0
    %2166 = vmatpush1.bf16.msra.mxu0 %v2161
    %2167 = vmatprep.subr.bf16.mxu0 0
    %2168 = vmatpush1.bf16.msra.mxu0 %v2162
    %2169 = vmatprep.subr.bf16.mxu0 0
    %2170 = vmatpush1.bf16.msra.mxu0 0
    %2171 = vmatprep.subr.bf16.mxu0 0
    %2172 = vmatpush1.bf16.msra.mxu0 0
    %2173 = vmatprep.subr.bf16.mxu0 0
    %2174 = vmatpush1.bf16.msra.mxu0 0
    %2175 = vmatprep.subr.bf16.mxu0 0
    %2176 = vmatpush1.bf16.msra.mxu0 0
    %2177 = vmatprep.subr.bf16.mxu0 0
    %2178 = vmatpush1.bf16.msra.mxu0 0
    %2179 = vmatprep.subr.bf16.mxu0 0
    %2180 = vmatpush1.bf16.msra.mxu0 0
    %2181 = vmatprep.subr.bf16.mxu0 0
    %2182 = vmatpush1.bf16.msra.mxu0 0
    %2183 = vmatprep.subr.bf16.mxu0 0
    %2184 = vmatpush1.bf16.msra.mxu0 0
    %2185 = vmatprep.subr.bf16.mxu0 0
    %2186 = vmatpush1.bf16.msra.mxu0 0
    %2187 = vmatprep.subr.bf16.mxu0 0
    %2188 = vmatpush1.bf16.msra.mxu0 0
    %2189 = vmatprep.subr.bf16.mxu0 0
    %2190 = vmatpush1.bf16.msra.mxu0 0
    %2191 = vmatprep.subr.bf16.mxu0 0
    %2192 = vmatpush1.bf16.msra.mxu0 0
    %2193 = vmatprep.subr.bf16.mxu0 0
    %2194 = vmatpush1.bf16.msra.mxu0 0
    %2195 = vmatprep.subr.bf16.mxu0 0
    %2196 = vmatpush1.bf16.msra.mxu0 0
    %2197 = vmatprep.mubr.bf16.mxu0 0
    %2198 = vmatmul.mubr.bf16.gmra.mrb[0].mxu0 %v2098
    %v2199 = vpop.f32.mrb[0].mxu0
    %v2200 = vadd.f32 %v2151, %v2199
    %v2201 = vpop.f32.mrb[0].mxu0
    %v2202 = vpop.f32.mrb[0].mxu0
    %v2203 = vpop.f32.mrb[0].mxu0
    %2204 = vdwg.mxu0
    %v2205 = vadd.f32 %v2135, 2.0
    %v2206 = vsub.f32 0.0, %v2205
    %v2207 = vmul.f32 %v2206, 1.442695
    %v2208 = vpow.pop %v2207
    %v2209 = vadd.f32 %v2208, 1.0
    %v2210 = vrcp.pop %v2209
    %v2211 = vmul.f32 1.0, %v2210
    %v2212 = vadd.f32 %v2211, 0.001
    %v2213 = vmul.f32 %v2212, %v1728
    %v2214 = vadd.f32 %v2213, %v2200
    %v2215 = vlog2.pop %v2212
    %v2216 = vmul.f32 %v2215, 0.6931472
    %v2217 = vadd.f32 %v1731, %v2216
    %v2218 = vpack.c.bf16 %v2214, %v2214
    %s2219 = scalar_lea.vmem %s2, 16
    %v2220 = vld [vmem:[%s2219] sm:$0xf]
    %v2222 = vsel %vm276, %v2218, 0
    %v2225 = vsel %vm280, %v2220, 0
    %2227 = vmatprep.subr.bf16.mxu0 0
    %2228 = vmatpush1.bf16.msra.mxu0 %v2225
    %2229 = vmatprep.subr.bf16.mxu0 0
    %2230 = vmatpush1.bf16.msra.mxu0 0
    %2231 = vmatprep.subr.bf16.mxu0 0
    %2232 = vmatpush1.bf16.msra.mxu0 0
    %2233 = vmatprep.subr.bf16.mxu0 0
    %2234 = vmatpush1.bf16.msra.mxu0 0
    %2235 = vmatprep.subr.bf16.mxu0 0
    %2236 = vmatpush1.bf16.msra.mxu0 0
    %2237 = vmatprep.subr.bf16.mxu0 0
    %2238 = vmatpush1.bf16.msra.mxu0 0
    %2239 = vmatprep.subr.bf16.mxu0 0
    %2240 = vmatpush1.bf16.msra.mxu0 0
    %2241 = vmatprep.subr.bf16.mxu0 0
    %2242 = vmatpush1.bf16.msra.mxu0 0
    %2243 = vmatprep.subr.bf16.mxu0 0
    %2244 = vmatpush1.bf16.msra.mxu0 0
    %2245 = vmatprep.subr.bf16.mxu0 0
    %2246 = vmatpush1.bf16.msra.mxu0 0
    %2247 = vmatprep.subr.bf16.mxu0 0
    %2248 = vmatpush1.bf16.msra.mxu0 0
    %2249 = vmatprep.subr.bf16.mxu0 0
    %2250 = vmatpush1.bf16.msra.mxu0 0
    %2251 = vmatprep.subr.bf16.mxu0 0
    %2252 = vmatpush1.bf16.msra.mxu0 0
    %2253 = vmatprep.subr.bf16.mxu0 0
    %2254 = vmatpush1.bf16.msra.mxu0 0
    %2255 = vmatprep.subr.bf16.mxu0 0
    %2256 = vmatpush1.bf16.msra.mxu0 0
    %2257 = vmatprep.subr.bf16.mxu0 0
    %2258 = vmatpush1.bf16.msra.mxu0 0
    %2259 = vmatprep.mubr.bf16.mxu0 0
    %2260 = vmatmul.mubr.bf16.gmra.mrb[0].mxu0 %v2222
    %v2261 = vpop.f32.mrb[0].mxu0
    %v2262 = vadd.f32 %v211, %v2261
    %v2263 = vpop.f32.mrb[0].mxu0
    %v2264 = vpop.f32.mrb[0].mxu0
    %v2265 = vpop.f32.mrb[0].mxu0
    %2266 = vdwg.mxu0
    %v2267 = vmax.f32 %v2262, 0.0
    %v2268 = vpack.c.bf16 %v2267, %v2267
    %s2269 = scalar_lea.vmem %s5, 128
    %v2270 = vld [vmem:[%s2269] sm:$0xf]
    %v2271 = vld [vmem:[%s2269 + $0x4] sm:$0xf]
    %v2272 = vld [vmem:[%s2269 + $0x8] sm:$0xf]
    %v2273 = vld [vmem:[%s2269 + $0xc] sm:$0xf]
    %s2274 = scalar_lea.vmem [#allocation7], 8
    %v2275 = vld [vmem:[%s2274] sm:$0x1]
    %v2277 = vlaneseq
    %v2278 = vshrl.u32 %v2277, 7
    %v2279 = vsub.s32 0, %v2278
    %v2280 = vrot.slane %v2275, %v2279
    %v2286 = vunpack.c.l.b16 %v2270
    %v2287 = vunpack.c.l.b16 %v2271
    %v2288 = vunpack.c.l.b16 %v2272
    %v2289 = vunpack.c.l.b16 %v2273
    %v2290 = vpack.c.b16 %v2287, %v2286
    %v2291 = vpack.c.b16 %v2289, %v2288
    %v2295 = vsel %vm349, %v2268, 0
    %2297 = vmatprep.subr.bf16.mxu0 0
    %2298 = vmatpush1.bf16.msra.mxu0 %v2290
    %2299 = vmatprep.subr.bf16.mxu0 0
    %2300 = vmatpush1.bf16.msra.mxu0 %v2291
    %2301 = vmatprep.subr.bf16.mxu0 0
    %2302 = vmatpush1.bf16.msra.mxu0 0
    %2303 = vmatprep.subr.bf16.mxu0 0
    %2304 = vmatpush1.bf16.msra.mxu0 0
    %2305 = vmatprep.subr.bf16.mxu0 0
    %2306 = vmatpush1.bf16.msra.mxu0 0
    %2307 = vmatprep.subr.bf16.mxu0 0
    %2308 = vmatpush1.bf16.msra.mxu0 0
    %2309 = vmatprep.subr.bf16.mxu0 0
    %2310 = vmatpush1.bf16.msra.mxu0 0
    %2311 = vmatprep.subr.bf16.mxu0 0
    %2312 = vmatpush1.bf16.msra.mxu0 0
    %2313 = vmatprep.subr.bf16.mxu0 0
    %2314 = vmatpush1.bf16.msra.mxu0 0
    %2315 = vmatprep.subr.bf16.mxu0 0
    %2316 = vmatpush1.bf16.msra.mxu0 0
    %2317 = vmatprep.subr.bf16.mxu0 0
    %2318 = vmatpush1.bf16.msra.mxu0 0
    %2319 = vmatprep.subr.bf16.mxu0 0
    %2320 = vmatpush1.bf16.msra.mxu0 0
    %2321 = vmatprep.subr.bf16.mxu0 0
    %2322 = vmatpush1.bf16.msra.mxu0 0
    %2323 = vmatprep.subr.bf16.mxu0 0
    %2324 = vmatpush1.bf16.msra.mxu0 0
    %2325 = vmatprep.subr.bf16.mxu0 0
    %2326 = vmatpush1.bf16.msra.mxu0 0
    %2327 = vmatprep.subr.bf16.mxu0 0
    %2328 = vmatpush1.bf16.msra.mxu0 0
    %2329 = vmatprep.mubr.bf16.mxu0 0
    %2330 = vmatmul.mubr.bf16.gmra.mrb[0].mxu0 %v2295
    %v2331 = vpop.f32.mrb[0].mxu0
    %v2332 = vadd.f32 %v2280, %v2331
    %v2333 = vpop.f32.mrb[0].mxu0
    %v2334 = vpop.f32.mrb[0].mxu0
    %v2335 = vpop.f32.mrb[0].mxu0
    %2336 = vdwg.mxu0
    %v2337 = vmax.f32 %v2332, 0.0
    %v2338 = vpack.c.bf16 %v2337, %v2337
    %s2339 = scalar_lea.vmem [#allocation9], 128
    %v2340 = vld [vmem:[%s2339] sm:$0xf]
    %v2341 = vld [vmem:[%s2339 + $0x4] sm:$0xf]
    %v2342 = vld [vmem:[%s2339 + $0x8] sm:$0xf]
    %v2343 = vld [vmem:[%s2339 + $0xc] sm:$0xf]
    %s2344 = scalar_lea.vmem [#allocation10], 8
    %v2345 = vld [vmem:[%s2344] sm:$0x1]
    %v2347 = vlaneseq
    %v2348 = vshrl.u32 %v2347, 7
    %v2349 = vsub.s32 0, %v2348
    %v2350 = vrot.slane %v2345, %v2349
    %v2356 = vunpack.c.l.b16 %v2340
    %v2357 = vunpack.c.l.b16 %v2341
    %v2358 = vunpack.c.l.b16 %v2342
    %v2359 = vunpack.c.l.b16 %v2343
    %v2360 = vpack.c.b16 %v2357, %v2356
    %v2361 = vpack.c.b16 %v2359, %v2358
    %v2365 = vsel %vm349, %v2338, 0
    %2367 = vmatprep.subr.bf16.mxu0 0
    %2368 = vmatpush1.bf16.msra.mxu0 %v2360
    %2369 = vmatprep.subr.bf16.mxu0 0
    %2370 = vmatpush1.bf16.msra.mxu0 %v2361
    %2371 = vmatprep.subr.bf16.mxu0 0
    %2372 = vmatpush1.bf16.msra.mxu0 0
    %2373 = vmatprep.subr.bf16.mxu0 0
    %2374 = vmatpush1.bf16.msra.mxu0 0
    %2375 = vmatprep.subr.bf16.mxu0 0
    %2376 = vmatpush1.bf16.msra.mxu0 0
    %2377 = vmatprep.subr.bf16.mxu0 0
    %2378 = vmatpush1.bf16.msra.mxu0 0
    %2379 = vmatprep.subr.bf16.mxu0 0
    %2380 = vmatpush1.bf16.msra.mxu0 0
    %2381 = vmatprep.subr.bf16.mxu0 0
    %2382 = vmatpush1.bf16.msra.mxu0 0
    %2383 = vmatprep.subr.bf16.mxu0 0
    %2384 = vmatpush1.bf16.msra.mxu0 0
    %2385 = vmatprep.subr.bf16.mxu0 0
    %2386 = vmatpush1.bf16.msra.mxu0 0
    %2387 = vmatprep.subr.bf16.mxu0 0
    %2388 = vmatpush1.bf16.msra.mxu0 0
    %2389 = vmatprep.subr.bf16.mxu0 0
    %2390 = vmatpush1.bf16.msra.mxu0 0
    %2391 = vmatprep.subr.bf16.mxu0 0
    %2392 = vmatpush1.bf16.msra.mxu0 0
    %2393 = vmatprep.subr.bf16.mxu0 0
    %2394 = vmatpush1.bf16.msra.mxu0 0
    %2395 = vmatprep.subr.bf16.mxu0 0
    %2396 = vmatpush1.bf16.msra.mxu0 0
    %2397 = vmatprep.subr.bf16.mxu0 0
    %2398 = vmatpush1.bf16.msra.mxu0 0
    %2399 = vmatprep.mubr.bf16.mxu0 0
    %2400 = vmatmul.mubr.bf16.gmra.mrb[0].mxu0 %v2365
    %v2401 = vpop.f32.mrb[0].mxu0
    %v2402 = vadd.f32 %v2350, %v2401
    %v2403 = vpop.f32.mrb[0].mxu0
    %v2404 = vpop.f32.mrb[0].mxu0
    %v2405 = vpop.f32.mrb[0].mxu0
    %2406 = vdwg.mxu0
    %2408 = vrot.lane.b32.xlu0 %v273, 96
    %v2409 = vpop.permute.xlu0 %2408
    %v2411 = vmul.f32 %v2402, %v2409
    %v2412 = vadd.f32 %v2262, %v2411
    %v2413 = vmax.f32 %v2412, 0.0
    %v2414 = vpack.c.bf16 %v2413, %v2413
    %s2415 = scalar_lea.vmem %s5, 144
    %v2416 = vld [vmem:[%s2415] sm:$0xf]
    %v2417 = vld [vmem:[%s2415 + $0x4] sm:$0xf]
    %v2418 = vld [vmem:[%s2415 + $0x8] sm:$0xf]
    %v2419 = vld [vmem:[%s2415 + $0xc] sm:$0xf]
    %s2420 = scalar_lea.vmem [#allocation7], 9
    %v2421 = vld [vmem:[%s2420] sm:$0x1]
    %v2423 = vlaneseq
    %v2424 = vshrl.u32 %v2423, 7
    %v2425 = vsub.s32 0, %v2424
    %v2426 = vrot.slane %v2421, %v2425
    %v2432 = vunpack.c.l.b16 %v2416
    %v2433 = vunpack.c.l.b16 %v2417
    %v2434 = vunpack.c.l.b16 %v2418
    %v2435 = vunpack.c.l.b16 %v2419
    %v2436 = vpack.c.b16 %v2433, %v2432
    %v2437 = vpack.c.b16 %v2435, %v2434
    %v2441 = vsel %vm349, %v2414, 0
    %2443 = vmatprep.subr.bf16.mxu0 0
    %2444 = vmatpush1.bf16.msra.mxu0 %v2436
    %2445 = vmatprep.subr.bf16.mxu0 0
    %2446 = vmatpush1.bf16.msra.mxu0 %v2437
    %2447 = vmatprep.subr.bf16.mxu0 0
    %2448 = vmatpush1.bf16.msra.mxu0 0
    %2449 = vmatprep.subr.bf16.mxu0 0
    %2450 = vmatpush1.bf16.msra.mxu0 0
    %2451 = vmatprep.subr.bf16.mxu0 0
    %2452 = vmatpush1.bf16.msra.mxu0 0
    %2453 = vmatprep.subr.bf16.mxu0 0
    %2454 = vmatpush1.bf16.msra.mxu0 0
    %2455 = vmatprep.subr.bf16.mxu0 0
    %2456 = vmatpush1.bf16.msra.mxu0 0
    %2457 = vmatprep.subr.bf16.mxu0 0
    %2458 = vmatpush1.bf16.msra.mxu0 0
    %2459 = vmatprep.subr.bf16.mxu0 0
    %2460 = vmatpush1.bf16.msra.mxu0 0
    %2461 = vmatprep.subr.bf16.mxu0 0
    %2462 = vmatpush1.bf16.msra.mxu0 0
    %2463 = vmatprep.subr.bf16.mxu0 0
    %2464 = vmatpush1.bf16.msra.mxu0 0
    %2465 = vmatprep.subr.bf16.mxu0 0
    %2466 = vmatpush1.bf16.msra.mxu0 0
    %2467 = vmatprep.subr.bf16.mxu0 0
    %2468 = vmatpush1.bf16.msra.mxu0 0
    %2469 = vmatprep.subr.bf16.mxu0 0
    %2470 = vmatpush1.bf16.msra.mxu0 0
    %2471 = vmatprep.subr.bf16.mxu0 0
    %2472 = vmatpush1.bf16.msra.mxu0 0
    %2473 = vmatprep.subr.bf16.mxu0 0
    %2474 = vmatpush1.bf16.msra.mxu0 0
    %2475 = vmatprep.mubr.bf16.mxu0 0
    %2476 = vmatmul.mubr.bf16.gmra.mrb[0].mxu0 %v2441
    %v2477 = vpop.f32.mrb[0].mxu0
    %v2478 = vadd.f32 %v2426, %v2477
    %v2479 = vpop.f32.mrb[0].mxu0
    %v2480 = vpop.f32.mrb[0].mxu0
    %v2481 = vpop.f32.mrb[0].mxu0
    %2482 = vdwg.mxu0
    %v2483 = vmax.f32 %v2478, 0.0
    %v2484 = vpack.c.bf16 %v2483, %v2483
    %s2485 = scalar_lea.vmem [#allocation9], 144
    %v2486 = vld [vmem:[%s2485] sm:$0xf]
    %v2487 = vld [vmem:[%s2485 + $0x4] sm:$0xf]
    %v2488 = vld [vmem:[%s2485 + $0x8] sm:$0xf]
    %v2489 = vld [vmem:[%s2485 + $0xc] sm:$0xf]
    %s2490 = scalar_lea.vmem [#allocation10], 9
    %v2491 = vld [vmem:[%s2490] sm:$0x1]
    %v2493 = vlaneseq
    %v2494 = vshrl.u32 %v2493, 7
    %v2495 = vsub.s32 0, %v2494
    %v2496 = vrot.slane %v2491, %v2495
    %v2502 = vunpack.c.l.b16 %v2486
    %v2503 = vunpack.c.l.b16 %v2487
    %v2504 = vunpack.c.l.b16 %v2488
    %v2505 = vunpack.c.l.b16 %v2489
    %v2506 = vpack.c.b16 %v2503, %v2502
    %v2507 = vpack.c.b16 %v2505, %v2504
    %v2511 = vsel %vm349, %v2484, 0
    %2513 = vmatprep.subr.bf16.mxu0 0
    %2514 = vmatpush1.bf16.msra.mxu0 %v2506
    %2515 = vmatprep.subr.bf16.mxu0 0
    %2516 = vmatpush1.bf16.msra.mxu0 %v2507
    %2517 = vmatprep.subr.bf16.mxu0 0
    %2518 = vmatpush1.bf16.msra.mxu0 0
    %2519 = vmatprep.subr.bf16.mxu0 0
    %2520 = vmatpush1.bf16.msra.mxu0 0
    %2521 = vmatprep.subr.bf16.mxu0 0
    %2522 = vmatpush1.bf16.msra.mxu0 0
    %2523 = vmatprep.subr.bf16.mxu0 0
    %2524 = vmatpush1.bf16.msra.mxu0 0
    %2525 = vmatprep.subr.bf16.mxu0 0
    %2526 = vmatpush1.bf16.msra.mxu0 0
    %2527 = vmatprep.subr.bf16.mxu0 0
    %2528 = vmatpush1.bf16.msra.mxu0 0
    %2529 = vmatprep.subr.bf16.mxu0 0
    %2530 = vmatpush1.bf16.msra.mxu0 0
    %2531 = vmatprep.subr.bf16.mxu0 0
    %2532 = vmatpush1.bf16.msra.mxu0 0
    %2533 = vmatprep.subr.bf16.mxu0 0
    %2534 = vmatpush1.bf16.msra.mxu0 0
    %2535 = vmatprep.subr.bf16.mxu0 0
    %2536 = vmatpush1.bf16.msra.mxu0 0
    %2537 = vmatprep.subr.bf16.mxu0 0
    %2538 = vmatpush1.bf16.msra.mxu0 0
    %2539 = vmatprep.subr.bf16.mxu0 0
    %2540 = vmatpush1.bf16.msra.mxu0 0
    %2541 = vmatprep.subr.bf16.mxu0 0
    %2542 = vmatpush1.bf16.msra.mxu0 0
    %2543 = vmatprep.subr.bf16.mxu0 0
    %2544 = vmatpush1.bf16.msra.mxu0 0
    %2545 = vmatprep.mubr.bf16.mxu0 0
    %2546 = vmatmul.mubr.bf16.gmra.mrb[0].mxu0 %v2511
    %v2547 = vpop.f32.mrb[0].mxu0
    %v2548 = vadd.f32 %v2496, %v2547
    %v2549 = vpop.f32.mrb[0].mxu0
    %v2550 = vpop.f32.mrb[0].mxu0
    %v2551 = vpop.f32.mrb[0].mxu0
    %2552 = vdwg.mxu0
    %2553 = vrot.lane.b32.xlu0 %v273, 64
    %v2554 = vpop.permute.xlu0 %2553
    %v2556 = vmul.f32 %v2548, %v2554
    %v2557 = vadd.f32 %v2412, %v2556
    %v2558 = vpack.c.bf16 %v2557, %v2557
    %s2559 = scalar_lea.vmem %s9, 64
    %v2560 = vld [vmem:[%s2559] sm:$0xf]
    %v2561 = vld [vmem:[%s2559 + $0x4] sm:$0xf]
    %v2562 = vld [vmem:[%s2559 + $0x8] sm:$0xf]
    %v2563 = vld [vmem:[%s2559 + $0xc] sm:$0xf]
    %s2564 = scalar_lea.vmem %s10, 4
    %v2565 = vld [vmem:[%s2564] sm:$0x1]
    %v2567 = vlaneseq
    %v2568 = vshrl.u32 %v2567, 7
    %v2569 = vsub.s32 0, %v2568
    %v2570 = vrot.slane %v2565, %v2569
    %v2576 = vunpack.c.l.b16 %v2560
    %v2577 = vunpack.c.l.b16 %v2561
    %v2578 = vunpack.c.l.b16 %v2562
    %v2579 = vunpack.c.l.b16 %v2563
    %v2580 = vpack.c.b16 %v2577, %v2576
    %v2581 = vpack.c.b16 %v2579, %v2578
    %v2585 = vsel %vm349, %v2558, 0
    %2587 = vmatprep.subr.bf16.mxu0 0
    %2588 = vmatpush1.bf16.msra.mxu0 %v2580
    %2589 = vmatprep.subr.bf16.mxu0 0
    %2590 = vmatpush1.bf16.msra.mxu0 %v2581
    %2591 = vmatprep.subr.bf16.mxu0 0
    %2592 = vmatpush1.bf16.msra.mxu0 0
    %2593 = vmatprep.subr.bf16.mxu0 0
    %2594 = vmatpush1.bf16.msra.mxu0 0
    %2595 = vmatprep.subr.bf16.mxu0 0
    %2596 = vmatpush1.bf16.msra.mxu0 0
    %2597 = vmatprep.subr.bf16.mxu0 0
    %2598 = vmatpush1.bf16.msra.mxu0 0
    %2599 = vmatprep.subr.bf16.mxu0 0
    %2600 = vmatpush1.bf16.msra.mxu0 0
    %2601 = vmatprep.subr.bf16.mxu0 0
    %2602 = vmatpush1.bf16.msra.mxu0 0
    %2603 = vmatprep.subr.bf16.mxu0 0
    %2604 = vmatpush1.bf16.msra.mxu0 0
    %2605 = vmatprep.subr.bf16.mxu0 0
    %2606 = vmatpush1.bf16.msra.mxu0 0
    %2607 = vmatprep.subr.bf16.mxu0 0
    %2608 = vmatpush1.bf16.msra.mxu0 0
    %2609 = vmatprep.subr.bf16.mxu0 0
    %2610 = vmatpush1.bf16.msra.mxu0 0
    %2611 = vmatprep.subr.bf16.mxu0 0
    %2612 = vmatpush1.bf16.msra.mxu0 0
    %2613 = vmatprep.subr.bf16.mxu0 0
    %2614 = vmatpush1.bf16.msra.mxu0 0
    %2615 = vmatprep.subr.bf16.mxu0 0
    %2616 = vmatpush1.bf16.msra.mxu0 0
    %2617 = vmatprep.subr.bf16.mxu0 0
    %2618 = vmatpush1.bf16.msra.mxu0 0
    %2619 = vmatprep.mubr.bf16.mxu0 0
    %2620 = vmatmul.mubr.bf16.gmra.mrb[0].mxu0 %v2585
    %v2621 = vpop.f32.mrb[0].mxu0
    %v2622 = vadd.f32 %v2570, %v2621
    %v2623 = vpop.f32.mrb[0].mxu0
    %v2624 = vpop.f32.mrb[0].mxu0
    %v2625 = vpop.f32.mrb[0].mxu0
    %2626 = vdwg.mxu0
    %s2627 = scalar_lea.vmem %s11, 64
    %v2628 = vld [vmem:[%s2627] sm:$0xf]
    %v2629 = vld [vmem:[%s2627 + $0x4] sm:$0xf]
    %v2630 = vld [vmem:[%s2627 + $0x8] sm:$0xf]
    %v2631 = vld [vmem:[%s2627 + $0xc] sm:$0xf]
    %s2632 = scalar_lea.vmem %s12, 4
    %v2633 = vld [vmem:[%s2632] sm:$0x1]
    %v2635 = vlaneseq
    %v2636 = vshrl.u32 %v2635, 7
    %v2637 = vsub.s32 0, %v2636
    %v2638 = vrot.slane %v2633, %v2637
    %v2644 = vunpack.c.l.b16 %v2628
    %v2645 = vunpack.c.l.b16 %v2629
    %v2646 = vunpack.c.l.b16 %v2630
    %v2647 = vunpack.c.l.b16 %v2631
    %v2648 = vpack.c.b16 %v2645, %v2644
    %v2649 = vpack.c.b16 %v2647, %v2646
    %2652 = vmatprep.subr.bf16.mxu0 0
    %2653 = vmatpush1.bf16.msra.mxu0 %v2648
    %2654 = vmatprep.subr.bf16.mxu0 0
    %2655 = vmatpush1.bf16.msra.mxu0 %v2649
    %2656 = vmatprep.subr.bf16.mxu0 0
    %2657 = vmatpush1.bf16.msra.mxu0 0
    %2658 = vmatprep.subr.bf16.mxu0 0
    %2659 = vmatpush1.bf16.msra.mxu0 0
    %2660 = vmatprep.subr.bf16.mxu0 0
    %2661 = vmatpush1.bf16.msra.mxu0 0
    %2662 = vmatprep.subr.bf16.mxu0 0
    %2663 = vmatpush1.bf16.msra.mxu0 0
    %2664 = vmatprep.subr.bf16.mxu0 0
    %2665 = vmatpush1.bf16.msra.mxu0 0
    %2666 = vmatprep.subr.bf16.mxu0 0
    %2667 = vmatpush1.bf16.msra.mxu0 0
    %2668 = vmatprep.subr.bf16.mxu0 0
    %2669 = vmatpush1.bf16.msra.mxu0 0
    %2670 = vmatprep.subr.bf16.mxu0 0
    %2671 = vmatpush1.bf16.msra.mxu0 0
    %2672 = vmatprep.subr.bf16.mxu0 0
    %2673 = vmatpush1.bf16.msra.mxu0 0
    %2674 = vmatprep.subr.bf16.mxu0 0
    %2675 = vmatpush1.bf16.msra.mxu0 0
    %2676 = vmatprep.subr.bf16.mxu0 0
    %2677 = vmatpush1.bf16.msra.mxu0 0
    %2678 = vmatprep.subr.bf16.mxu0 0
    %2679 = vmatpush1.bf16.msra.mxu0 0
    %2680 = vmatprep.subr.bf16.mxu0 0
    %2681 = vmatpush1.bf16.msra.mxu0 0
    %2682 = vmatprep.subr.bf16.mxu0 0
    %2683 = vmatpush1.bf16.msra.mxu0 0
    %2684 = vmatprep.mubr.bf16.mxu0 0
    %2685 = vmatmul.mubr.bf16.gmra.mrb[0].mxu0 %v2585
    %v2686 = vpop.f32.mrb[0].mxu0
    %v2687 = vadd.f32 %v2638, %v2686
    %v2688 = vpop.f32.mrb[0].mxu0
    %v2689 = vpop.f32.mrb[0].mxu0
    %v2690 = vpop.f32.mrb[0].mxu0
    %2691 = vdwg.mxu0
    %v2692 = vadd.f32 %v2622, 2.0
    %v2693 = vsub.f32 0.0, %v2692
    %v2694 = vmul.f32 %v2693, 1.442695
    %v2695 = vpow.pop %v2694
    %v2696 = vadd.f32 %v2695, 1.0
    %v2697 = vrcp.pop %v2696
    %v2698 = vmul.f32 1.0, %v2697
    %v2699 = vadd.f32 %v2698, 0.001
    %v2700 = vmul.f32 %v2699, %v2214
    %v2701 = vadd.f32 %v2700, %v2687
    %v2702 = vlog2.pop %v2699
    %v2703 = vmul.f32 %v2702, 0.6931472
    %v2704 = vadd.f32 %v2217, %v2703
    %v2705 = vmul.f32 %v2701, 0.5
    %v2706 = vmul.f32 %v2705, %v2701
    %v2707 = vsub.f32 %v2704, %v2706
    %v2708 = vsel %vm276, %v2707, 0.0
    %2709 = vadd.xlane.f32.xlu0 %v2708
    %v2710 = vpop.xlane.xlu0 %2709
    %v2711 = vsub.f32 %v2710, 7.351508
    %vm2712 = vcmask 7168
    %2713 = vst.msk [vmem:[%s13] sm:$0xff] %vm2712, %v2711
    // Predicated region
    $region78: #{tpu_custom_call.1} parent=1 // pred_check
      _
    $region79: #{tpu_custom_call.1} parent=1 // pred_check_branch
      %2715 = sbr.rel (0) target = $region81
    $region80: #{tpu_custom_call.1} parent=1 // pred_region
      _
    $region81: #{tpu_custom_call.1} parent=1 // pred_fallthru
      _
    // Predicated region
    $region82: #{tpu_custom_call.1} parent=1 // pred_check
      _
    $region83: #{tpu_custom_call.1} parent=1 // pred_check_branch
      %2717 = sbr.rel (0) target = $region85
    $region84: #{tpu_custom_call.1} parent=1 // pred_region
      _
    $region85: #{tpu_custom_call.1} parent=1 // pred_fallthru
      _
    %2718 = vsyncpa [#allocation3], 1
    %2719 = vsyncpa [#allocation5], 1
    %2720 = vsyncpa [#allocation8], 1
    %2721 = vsyncpa [#allocation11], 1

</llo_original>
